<compile_context>
chip_gen: v7x
topology: tpu7x:2x2x1
jax: 0.10.0
libtpu: 0.0.40
codegen_flags: <defaults>
</compile_context>

<pallas_src>
import jax
import jax.numpy as jnp
from jax.experimental import pallas as pl
from jax.experimental.pallas import tpu as pltpu


def _gemv_kernel(w_ref, x_ref, b_ref, o_ref):
    # w_ref: (Ft, K) streamed weight tile (bf16), x_ref: (K, N) activations,
    # b_ref: (Ft, 1) f32 bias slice, o_ref: (Ft, N) f32 logits slice.
    # Eval-mode Dropout is the identity, so the flattened activations feed the
    # MXU directly.  Canonical (M,K)x(K,N) form keeps the 2.5 MB weight in its
    # natural orientation (no transpose anywhere); f32 accumulation on the MXU.
    # TODO(synk): training-mode dropout (mask * 1/(1-p)) would need
    # pltpu.prng_seed/prng_random_bits; inference semantics used here.
    acc = jnp.dot(w_ref[...], x_ref[...], preferred_element_type=jnp.float32)
    o_ref[...] = (acc + b_ref[...]).astype(o_ref.dtype)


def flatten_dropout_linear(x_nchw, weight, bias):
    """x_nchw: (N, C, H, W); weight: (F, K=C*H*W); bias: (F,).

    Computes flatten(1) -> Dropout(eval == identity) -> x @ W^T + b.
    Pass `weight` already cast to bf16 (once, at parameter-load time) to halve
    the HBM-bound weight stream; accumulation stays f32 either way.
    """
    n, c, h, w = x_nchw.shape
    k = c * h * w
    f = weight.shape[0]

    x2d = x_nchw.reshape(n, k)                 # torch.flatten(x, 1)
    xt = x2d.T.astype(weight.dtype)            # (K, N): tiny (~5 KB), matches MXU dtype
    b2d = bias.reshape(f, 1).astype(jnp.float32)

    # Split F into 2 tiles (multiple of 128 rows -> 512 for F=1000).  Pallas
    # masks the partial tail (488 valid of 512 rows); no host-side padding and
    # no extra weight copy.  Do not tile finer: this is HBM-bound and extra
    # grid steps only add ~0.35 us each.
    f_tile = max(128, 128 * pl.cdiv(pl.cdiv(f, 2), 128))
    grid = (pl.cdiv(f, f_tile),)

    w_bytes = jnp.dtype(weight.dtype).itemsize
    x_bytes = jnp.dtype(xt.dtype).itemsize
    cost = pl.CostEstimate(
        flops=2 * n * k * f,
        transcendentals=0,
        bytes_accessed=f * k * w_bytes + k * n * x_bytes + f * 4 + f * n * 4,
    )

    out_fn = pl.pallas_call(
        _gemv_kernel,
        out_shape=jax.ShapeDtypeStruct((f, n), jnp.float32),
        grid_spec=pltpu.PrefetchScalarGridSpec(
            num_scalar_prefetch=0,
            grid=grid,
            in_specs=[
                pl.BlockSpec((f_tile, k), lambda j: (j, 0)),  # weight row-tile (streams)
                pl.BlockSpec((k, n), lambda j: (0, 0)),       # activations (resident)
                pl.BlockSpec((f_tile, 1), lambda j: (j, 0)),  # bias slice
            ],
            out_specs=pl.BlockSpec((f_tile, n), lambda j: (j, 0)),
        ),
        compiler_params=pltpu.CompilerParams(
            # 2 independent F tiles -> v7x megacore sharding; ~free on v5e/v6e.
            dimension_semantics=("parallel",),
        ),
        cost_estimate=cost,
    )
    out_fn_result = out_fn(weight, xt, b2d)    # (F, N)
    return out_fn_result.T                     # (N, F): 4 KB transpose, negligible


if __name__ == "__main__":
    key = jax.random.PRNGKey(0)
    kx, kw, kb = jax.random.split(key, 3)

    # Shapes implied by the module: x355 = (1, 1280, 1, 1), Linear(1280, 1000).
    N, C, H, W = 1, 1280, 1, 1
    K = C * H * W
    F = 1000

    x = jax.random.normal(kx, (N, C, H, W), dtype=jnp.float32)
    # Deterministic parameter init (mimics nn.Linear uniform(-1/sqrt(K), 1/sqrt(K)))
    bound = 1.0 / jnp.sqrt(jnp.float32(K))
    weight = jax.random.uniform(kw, (F, K), dtype=jnp.float32,
                                minval=-bound, maxval=bound)
    bias = jax.random.uniform(kb, (F,), dtype=jnp.float32,
                              minval=-bound, maxval=bound)

    # Cast the weight ONCE at parameter-load time: halves the HBM-bound stream.
    weight_bf16 = weight.astype(jnp.bfloat16)

    y = flatten_dropout_linear(x, weight_bf16, bias)
    y = jax.block_until_ready(y)
    assert y.shape == (N, F)

    # Tight check vs the bf16-quantized reference (validates the kernel itself).
    x_q = x.reshape(N, K).astype(jnp.bfloat16).astype(jnp.float32)
    w_q = weight_bf16.astype(jnp.float32)
    y_ref_q = jnp.dot(x_q, w_q.T, precision=jax.lax.Precision.HIGHEST) + bias
    assert jnp.allclose(y, y_ref_q, atol=1e-4, rtol=1e-3)

    # Loose check vs full-f32 module semantics (bounded by bf16 quantization).
    y_ref = x.reshape(N, K) @ weight.T + bias
    assert jnp.allclose(y, y_ref, atol=5e-2, rtol=5e-2)

    print("KERNEL_OK")
</pallas_src>

<mosaic_0001>
module attributes {stable_mosaic.version = 11 : i64} {
  func.func @_gemv_kernel(%arg0: i32, %arg1: memref<512x1280xbf16, #tpu.memory_space<vmem>>, %arg2: memref<1280x1xbf16, #tpu.memory_space<vmem>>, %arg3: memref<512x1xf32, #tpu.memory_space<vmem>>, %arg4: memref<512x1xf32, #tpu.memory_space<vmem>>) attributes {dimension_semantics = [#tpu.dimension_semantics<parallel>], iteration_bounds = array<i64: 2>, scalar_prefetch = 0 : i64, scratch_operands = 0 : i64, tpu.core_type = #tpu.core_type<tc>, window_params = [{transform_indices = @transform_0, window_bounds = array<i64: 512, 1280>}, {pipeline_mode = #tpu.pipeline_mode<synchronous>, transform_indices = @transform_1, window_bounds = array<i64: 1280, 1>}, {transform_indices = @transform_2, window_bounds = array<i64: 512, 1>}, {transform_indices = @transform_3, window_bounds = array<i64: 512, 1>}]} {
    %c0 = arith.constant 0 : index
    %c0_0 = arith.constant 0 : index
    %0 = vector.load %arg1[%c0, %c0_0] : memref<512x1280xbf16, #tpu.memory_space<vmem>>, vector<512x1280xbf16>
    %c0_1 = arith.constant 0 : index
    %c0_2 = arith.constant 0 : index
    %1 = vector.load %arg2[%c0_1, %c0_2] : memref<1280x1xbf16, #tpu.memory_space<vmem>>, vector<1280x1xbf16>
    %cst = arith.constant dense<0.000000e+00> : vector<512x1xf32>
    %2 = tpu.matmul %0, %1, %cst {dimension_numbers = #tpu.dot_dimension_numbers<[1], [0], [0], [1], [0, 0, 1, 1], [], []>} : vector<512x1280xbf16>, vector<1280x1xbf16>, vector<512x1xf32> -> vector<512x1xf32>
    %c0_3 = arith.constant 0 : index
    %c0_4 = arith.constant 0 : index
    %3 = vector.load %arg3[%c0_3, %c0_4] : memref<512x1xf32, #tpu.memory_space<vmem>>, vector<512x1xf32>
    %4 = arith.addf %2, %3 : vector<512x1xf32>
    %c0_5 = arith.constant 0 : index
    %c0_6 = arith.constant 0 : index
    %5 = vector.load %arg4[%c0_5, %c0_6] : memref<512x1xf32, #tpu.memory_space<vmem>>, vector<512x1xf32>
    tpu.vector_store %arg4[%c0_5, %c0_6], %4 {strides = array<i32>} : memref<512x1xf32, #tpu.memory_space<vmem>>, vector<512x1xf32>,
    return
  }
  func.func @transform_0(%arg0: i32) -> (i32, i32) {
    %c0_i32 = arith.constant 0 : i32
    %c0_i32_0 = arith.constant 0 : i32
    return %arg0, %c0_i32 : i32, i32
  }
  func.func @transform_1(%arg0: i32) -> (i32, i32) {
    %c0_i32 = arith.constant 0 : i32
    %c0_i32_0 = arith.constant 0 : i32
    %c0_i32_1 = arith.constant 0 : i32
    return %c0_i32, %c0_i32_0 : i32, i32
  }
  func.func @transform_2(%arg0: i32) -> (i32, i32) {
    %c0_i32 = arith.constant 0 : i32
    %c0_i32_0 = arith.constant 0 : i32
    return %arg0, %c0_i32 : i32, i32
  }
  func.func @transform_3(%arg0: i32) -> (i32, i32) {
    %c0_i32 = arith.constant 0 : i32
    %c0_i32_0 = arith.constant 0 : i32
    return %arg0, %c0_i32 : i32, i32
  }
}

</mosaic_0001>

<llo_original>
// kernel: tpu_custom_call.1
$region0: #{tpu_custom_call.1}
  #allocation0 [shape = 'u32[]', space=smem, size = 0x4, offset = 0x4, fixed_abs, tag = 'smem constant byte address 0x4 - core index']
  #allocation1 [shape = 'u32[144,128]{1,0:T(1,128)}', space=vmem, size = 0x12000, scoped, tag = 'internal scratch']
  %s0 = inlined_call_operand.hbm [shape: bf16[1000,1280], index: 0, kind: input, shape index: {}]
  %s1 = inlined_call_operand.vmem [shape: bf16[1280,1], index: 1, kind: input, shape index: {}]
  %s2 = inlined_call_operand.vmem [shape: f32[1000,1], index: 2, kind: input, shape index: {}]
  %s3 = inlined_call_operand.vmem [shape: f32[1000,1], index: 3, kind: output, shape index: {}]
  %s4 = sld [smem:[#allocation0]]
  $region97: #{tpu_custom_call.1} parent=0
    _
  %s6 = ssub.s32 1, %s4
  %s7 = scalar_select 0, %s6, %s4
  $region1: #{tpu_custom_call.1} parent=0
    #allocation2 [shape = 'u8[2621440]{0}', space=vmem, size = 0x280000, scoped, tag = 'input window, operand 0']
    #allocation3 [shape = 's32[2]{0}', space=sflag, size = 0x8, scoped, tag = 'scoped memory for tpu_custom_call.1']
    #allocation4 [shape = 'u8[524288]{0}', space=vmem, size = 0x80000, scoped, tag = 'output window, operand 0']
    %8 = vsyncpa [#allocation3], 0
    %s9 = scalar_lea.sflag [#allocation3], 1
    %10 = vsyncpa %s9, 0
    loop: start=0, step=1, limit=4
    $region2: #{tpu_custom_call.1} parent=1 // loop_pre_header
      _
    $region3: #{tpu_custom_call.1} parent=1 // loop_header
      %s12 = sphi 0, %s16
      %p13 = scmp.ge.s32.totalorder %s12, 4
      %s22 = sphi 0, %s24
      %s25 = sphi 0, %s22
      %s26 = sphi 0, %s25
      %s42 = sphi 0, %s26
      %s46 = sphi 0, %s46
      %s48 = sphi 0, %s46
      %s49 = sphi 0, %s48
      %s63 = sphi 0, %s49
      %s69 = sphi 0, %s71
      %s72 = sphi 0, %s69
      %s73 = sphi 0, %s72
      %s89 = sphi 0, %s73
      %s95 = sphi 0, %s97
      %s98 = sphi 0, %s95
      %s99 = sphi 0, %s98
      %s115 = sphi 0, %s99
    $region4: #{tpu_custom_call.1} parent=1 // loop_header_branch
      %15 = sbr.rel (%p13) target = $region8
    $region5: #{tpu_custom_call.1} parent=1 // loop_body
      %s17 = ssub.s32 %s12, 1
      %s18 = ssub.s32 %s12, 2
      %s19 = sadd.s32 %s12, 1
      %s20 = ssub.s32 %s12, %s19
      %p21 = scmp.eq.s32.totalorder %s20, 0
      %s23 = sadd.s32 %s22, 1
      %s24 = scalar_select %p21, %s22, %s23
      %p27 = pneg %p21
      %p28 = scmp.eq.s32.totalorder %s12, 1
      %p29 = por %p27, %p28
      %p30 = scmp.ne.s32.totalorder %s22, %s25
      %p31 = scmp.eq.s32.totalorder %s12, 0
      %p32 = por %p30, %p31
      %p33 = scmp.ne.s32.totalorder %s22, %s25
      %p34 = scmp.eq.s32.totalorder %s17, 1
      %p35 = por %p33, %p34
      %p36 = scmp.ne.s32.totalorder %s25, %s26
      %p37 = scmp.eq.s32.totalorder %s17, 0
      %p38 = por %p36, %p37
      %p39 = scmp.ne.s32.totalorder %s25, %s26
      %p40 = scmp.eq.s32.totalorder %s18, 1
      %p41 = por %p39, %p40
      %p43 = scmp.ne.s32.totalorder %s26, %s42
      %p44 = scmp.eq.s32.totalorder %s18, 0
      %p45 = por %p43, %p44
      %s47 = sadd.s32 %s46, 1
      %p50 = scmp.eq.s32.totalorder %s12, 1
      %p51 = scmp.ne.s32.totalorder %s46, %s48
      %p52 = scmp.eq.s32.totalorder %s12, 0
      %p53 = por %p51, %p52
      %p54 = scmp.ne.s32.totalorder %s46, %s48
      %p55 = scmp.eq.s32.totalorder %s17, 1
      %p56 = por %p54, %p55
      %p57 = scmp.ne.s32.totalorder %s48, %s49
      %p58 = scmp.eq.s32.totalorder %s17, 0
      %p59 = por %p57, %p58
      %p60 = scmp.ne.s32.totalorder %s48, %s49
      %p61 = scmp.eq.s32.totalorder %s18, 1
      %p62 = por %p60, %p61
      %p64 = scmp.ne.s32.totalorder %s49, %s63
      %p65 = scmp.eq.s32.totalorder %s18, 0
      %p66 = por %p64, %p65
      %s67 = ssub.s32 %s12, %s19
      %p68 = scmp.eq.s32.totalorder %s67, 0
      %s70 = sadd.s32 %s69, 1
      %s71 = scalar_select %p68, %s69, %s70
      %p74 = pneg %p68
      %p75 = scmp.eq.s32.totalorder %s12, 1
      %p76 = por %p74, %p75
      %p77 = scmp.ne.s32.totalorder %s69, %s72
      %p78 = scmp.eq.s32.totalorder %s12, 0
      %p79 = por %p77, %p78
      %p80 = scmp.ne.s32.totalorder %s69, %s72
      %p81 = scmp.eq.s32.totalorder %s17, 1
      %p82 = por %p80, %p81
      %p83 = scmp.ne.s32.totalorder %s72, %s73
      %p84 = scmp.eq.s32.totalorder %s17, 0
      %p85 = por %p83, %p84
      %p86 = scmp.ne.s32.totalorder %s72, %s73
      %p87 = scmp.eq.s32.totalorder %s18, 1
      %p88 = por %p86, %p87
      %p90 = scmp.ne.s32.totalorder %s73, %s89
      %p91 = scmp.eq.s32.totalorder %s18, 0
      %p92 = por %p90, %p91
      %s93 = ssub.s32 %s12, %s19
      %p94 = scmp.eq.s32.totalorder %s93, 0
      %s96 = sadd.s32 %s95, 1
      %s97 = scalar_select %p94, %s95, %s96
      %p100 = pneg %p94
      %p101 = scmp.eq.s32.totalorder %s12, 1
      %p102 = por %p100, %p101
      %p103 = scmp.ne.s32.totalorder %s95, %s98
      %p104 = scmp.eq.s32.totalorder %s12, 0
      %p105 = por %p103, %p104
      %p106 = scmp.ne.s32.totalorder %s95, %s98
      %p107 = scmp.eq.s32.totalorder %s17, 1
      %p108 = por %p106, %p107
      %p109 = scmp.ne.s32.totalorder %s98, %s99
      %p110 = scmp.eq.s32.totalorder %s17, 0
      %p111 = por %p109, %p110
      %p112 = scmp.ne.s32.totalorder %s98, %s99
      %p113 = scmp.eq.s32.totalorder %s18, 1
      %p114 = por %p112, %p113
      %p116 = scmp.ne.s32.totalorder %s99, %s115
      %p117 = scmp.eq.s32.totalorder %s18, 0
      %p118 = por %p116, %p117
      %p119 = scmp.le.s32.totalorder 1, %s12
      %p120 = scmp.lt.s32.totalorder %s12, 3
      %p121 = pnand %p119, %p120
      %p122 = pneg %p121
      // Predicated region
      $region9: #{tpu_custom_call.1} parent=5 // pred_check
        _
      $region10: #{tpu_custom_call.1} parent=5 // pred_check_branch
        %124 = sbr.rel (%p121) target = $region12
      $region11: #{tpu_custom_call.1} parent=5 // pred_region
        %s125 = ssub.s32 %s12, 1
        // Predicated region
        $region13: #{tpu_custom_call.1} parent=11 // pred_check
          %p126 = pneg %p59
        $region14: #{tpu_custom_call.1} parent=11 // pred_check_branch
          %128 = sbr.rel (%p126) target = $region16
        $region15: #{tpu_custom_call.1} parent=11 // pred_region
          _
        $region16: #{tpu_custom_call.1} parent=11 // pred_fallthru
          _
      $region12: #{tpu_custom_call.1} parent=5 // pred_fallthru
        _
      %p129 = scmp.lt.s32.totalorder %s12, 2
      // Predicated region
      $region17: #{tpu_custom_call.1} parent=5 // pred_check
        %p130 = pneg %p129
      $region18: #{tpu_custom_call.1} parent=5 // pred_check_branch
        %132 = sbr.rel (%p130) target = $region20
      $region19: #{tpu_custom_call.1} parent=5 // pred_region
        // Predicated region
        $region21: #{tpu_custom_call.1} parent=19 // pred_check
          %p133 = pneg %p32
        $region22: #{tpu_custom_call.1} parent=19 // pred_check_branch
          %135 = sbr.rel (%p133) target = $region24
        $region23: #{tpu_custom_call.1} parent=19 // pred_region
          %s136 = sand.u32 %s22, 1
          %s137 = scalar_lea.sflag [#allocation3], %s136
          %s138 = sand.u32 %s22, 1
          %s139 = smul.addr %s138, 2560
          %s140 = scalar_lea.vmem [#allocation2], %s139
          %s141 = smul.u32 64, %s12
          %s142 = ssub.s32 125, %s141
          %p143 = scmp.lt.s32.totalorder %s142, 64
          %s144 = scalar_select %p143, %s142, 64
          %s145 = smul.u32 64, %s144
          %s146 = smul.u32 %s145, 10
          %s148 = ssub.s32 40960, %s146
          %149 = vsyncadd %s137, %s148
          %p150 = scmp.ne.s32.totalorder 0, %s146
          %s151 = smul.addr %s141, 10
          %s152 = smul.addr %s151, 64
          %s153 = scalar_lea.hbm %s0, %s152
          %s154 = smul.u32 40, %s144
          %s155 = sshll.u32 %s140, 4
          %s156 = int_to_ptr.vmem [resolvable:$true] %s155
          %s157 = sshll.u32 %s154, 4
          %161 = dma.hbm_to_vmem [thread:$0]  (%p150), %s153, %s157, %s156, %s137, 640, 640, 40
        $region24: #{tpu_custom_call.1} parent=19 // pred_fallthru
          _
        // Predicated region
        $region25: #{tpu_custom_call.1} parent=19 // pred_check
          %p162 = pneg %p79
        $region26: #{tpu_custom_call.1} parent=19 // pred_check_branch
          %164 = sbr.rel (%p162) target = $region28
        $region27: #{tpu_custom_call.1} parent=19 // pred_region
          %s165 = smul.u32 64, %s12
          %s166 = ssub.s32 125, %s165
          %p167 = scmp.lt.s32.totalorder %s166, 64
          %s168 = scalar_select %p167, %s166, 64
          %s169 = smul.u32 128, %s168
          %p170 = scmp.lt.s32.totalorder %s165, 124
          %s171 = scalar_select %p170, %s165, 124
          %s172 = smul.addr %s171, 8
          %s173 = scalar_lea.vmem %s2, %s172
          %s174 = smul.u32 64, %s12
          %s175 = ssub.s32 125, %s174
          %p176 = scmp.lt.s32.totalorder %s175, 64
          %s177 = scalar_select %p176, %s175, 64
          %s178 = smul.u32 128, %s177
        $region28: #{tpu_custom_call.1} parent=19 // pred_fallthru
          _
      $region20: #{tpu_custom_call.1} parent=5 // pred_fallthru
        _
      %p179 = scmp.le.s32.totalorder 1, %s12
      %p180 = scmp.lt.s32.totalorder %s12, 3
      %p181 = pnand %p179, %p180
      %p182 = pneg %p181
      // Predicated region
      $region29: #{tpu_custom_call.1} parent=5 // pred_check
        _
      $region30: #{tpu_custom_call.1} parent=5 // pred_check_branch
        %184 = sbr.rel (%p181) target = $region32
      $region31: #{tpu_custom_call.1} parent=5 // pred_region
        %s185 = ssub.s32 %s12, 1
        %s186 = sand.u32 %s25, 1
        %s187 = scalar_lea.sflag [#allocation3], %s186
        %s188 = sand.u32 %s25, 1
        %s189 = smul.addr %s188, 2560
        %s190 = scalar_lea.vmem [#allocation2], %s189
        // Predicated region
        $region33: #{tpu_custom_call.1} parent=31 // pred_check
          %p191 = pneg %p38
        $region34: #{tpu_custom_call.1} parent=31 // pred_check_branch
          %193 = sbr.rel (%p191) target = $region36
        $region35: #{tpu_custom_call.1} parent=31 // pred_region
          %194 = dma.done %s187, 40960
        $region36: #{tpu_custom_call.1} parent=31 // pred_fallthru
          _
        %s195 = sand.u32 %s25, 1
        %s196 = scalar_lea.sflag [#allocation3], %s195
        %s197 = sand.u32 %s25, 1
        %s198 = smul.addr %s197, 2560
        %s199 = scalar_lea.vmem [#allocation2], %s198
        %p200 = pneg %p38
        %p201 = pneg %p35
        %p202 = pneg %p59
        %p203 = pneg %p56
        %s204 = smul.u32 64, %s17
        %s205 = ssub.s32 125, %s204
        %p206 = scmp.lt.s32.totalorder %s205, 64
        %s207 = scalar_select %p206, %s205, 64
        %s208 = smul.u32 128, %s207
        %p209 = scmp.lt.s32.totalorder %s204, 124
        %s210 = scalar_select %p209, %s204, 124
        %s211 = smul.addr %s210, 8
        %s212 = scalar_lea.vmem %s2, %s211
        %p213 = pneg %p85
        %p214 = pneg %p82
        %p215 = pneg %p111
        %p216 = pneg %p108
        %s217 = sand.u32 %s98, 1
        %s218 = sand.u32 %s98, 1
        %s219 = smul.addr %s218, 512
        %s220 = scalar_lea.vmem [#allocation4], %s219
        %s221 = smul.u32 64, %s17
        %s222 = ssub.s32 125, %s221
        %p223 = scmp.lt.s32.totalorder %s222, 64
        %s224 = scalar_select %p223, %s222, 64
        %s225 = smul.u32 64, %s224
        %s226 = smul.u32 %s225, 10
        %s227 = smul.u32 64, %s17
        %s228 = ssub.s32 125, %s227
        %p229 = scmp.lt.s32.totalorder %s228, 64
        %s230 = scalar_select %p229, %s228, 64
        %s231 = smul.u32 128, %s230
        %p232 = scmp.lt.s32.totalorder %s227, 124
        %s233 = scalar_select %p232, %s227, 124
        %s234 = smul.addr %s233, 8
        %s235 = scalar_lea.vmem %s2, %s234
        %s236 = smul.u32 64, %s17
        %s237 = ssub.s32 125, %s236
        %p238 = scmp.lt.s32.totalorder %s237, 64
        %s239 = scalar_select %p238, %s237, 64
        %s240 = smul.u32 128, %s239
        %s241 = smul.u32 64, %s17
        %s242 = ssub.s32 125, %s241
        %p243 = scmp.lt.s32.totalorder %s242, 64
        %s244 = scalar_select %p243, %s242, 64
        %s245 = smul.u32 128, %s244
        %v247 = vld [vmem:[%s190] sm:$0xff]
        %v248 = vld [vmem:[%s190 + $0x8] sm:$0xff]
        %v249 = vld [vmem:[%s190 + $0x10] sm:$0xff]
        %v250 = vld [vmem:[%s190 + $0x18] sm:$0xff]
        %v251 = vld [vmem:[%s190 + $0x20] sm:$0xff]
        %v252 = vld [vmem:[%s190 + $0x28] sm:$0xff]
        %v253 = vld [vmem:[%s190 + $0x30] sm:$0xff]
        %v254 = vld [vmem:[%s190 + $0x38] sm:$0xff]
        %v255 = vld [vmem:[%s190 + $0x40] sm:$0xff]
        %v256 = vld [vmem:[%s190 + $0x48] sm:$0xff]
        %v257 = vld [vmem:[%s190 + $0x50] sm:$0xff]
        %v258 = vld [vmem:[%s190 + $0x58] sm:$0xff]
        %v259 = vld [vmem:[%s190 + $0x60] sm:$0xff]
        %v260 = vld [vmem:[%s190 + $0x68] sm:$0xff]
        %v261 = vld [vmem:[%s190 + $0x70] sm:$0xff]
        %v262 = vld [vmem:[%s190 + $0x78] sm:$0xff]
        %v263 = vld [vmem:[%s190 + $0x80] sm:$0xff]
        %v264 = vld [vmem:[%s190 + $0x88] sm:$0xff]
        %v265 = vld [vmem:[%s190 + $0x90] sm:$0xff]
        %v266 = vld [vmem:[%s190 + $0x98] sm:$0xff]
        %v267 = vld [vmem:[%s190 + $0xa0] sm:$0xff]
        %v268 = vld [vmem:[%s190 + $0xa8] sm:$0xff]
        %v269 = vld [vmem:[%s190 + $0xb0] sm:$0xff]
        %v270 = vld [vmem:[%s190 + $0xb8] sm:$0xff]
        %v271 = vld [vmem:[%s190 + $0xc0] sm:$0xff]
        %v272 = vld [vmem:[%s190 + $0xc8] sm:$0xff]
        %v273 = vld [vmem:[%s190 + $0xd0] sm:$0xff]
        %v274 = vld [vmem:[%s190 + $0xd8] sm:$0xff]
        %v275 = vld [vmem:[%s190 + $0xe0] sm:$0xff]
        %v276 = vld [vmem:[%s190 + $0xe8] sm:$0xff]
        %v277 = vld [vmem:[%s190 + $0xf0] sm:$0xff]
        %v278 = vld [vmem:[%s190 + $0xf8] sm:$0xff]
        %v279 = vld [vmem:[%s190 + $0x100] sm:$0xff]
        %v280 = vld [vmem:[%s190 + $0x108] sm:$0xff]
        %v281 = vld [vmem:[%s190 + $0x110] sm:$0xff]
        %v282 = vld [vmem:[%s190 + $0x118] sm:$0xff]
        %v283 = vld [vmem:[%s190 + $0x120] sm:$0xff]
        %v284 = vld [vmem:[%s190 + $0x128] sm:$0xff]
        %v285 = vld [vmem:[%s190 + $0x130] sm:$0xff]
        %v286 = vld [vmem:[%s190 + $0x138] sm:$0xff]
        %v287 = vld [vmem:[%s190 + $0x140] sm:$0xff]
        %v288 = vld [vmem:[%s190 + $0x148] sm:$0xff]
        %v289 = vld [vmem:[%s190 + $0x150] sm:$0xff]
        %v290 = vld [vmem:[%s190 + $0x158] sm:$0xff]
        %v291 = vld [vmem:[%s190 + $0x160] sm:$0xff]
        %v292 = vld [vmem:[%s190 + $0x168] sm:$0xff]
        %v293 = vld [vmem:[%s190 + $0x170] sm:$0xff]
        %v294 = vld [vmem:[%s190 + $0x178] sm:$0xff]
        %v295 = vld [vmem:[%s190 + $0x180] sm:$0xff]
        %v296 = vld [vmem:[%s190 + $0x188] sm:$0xff]
        %v297 = vld [vmem:[%s190 + $0x190] sm:$0xff]
        %v298 = vld [vmem:[%s190 + $0x198] sm:$0xff]
        %v299 = vld [vmem:[%s190 + $0x1a0] sm:$0xff]
        %v300 = vld [vmem:[%s190 + $0x1a8] sm:$0xff]
        %v301 = vld [vmem:[%s190 + $0x1b0] sm:$0xff]
        %v302 = vld [vmem:[%s190 + $0x1b8] sm:$0xff]
        %v303 = vld [vmem:[%s190 + $0x1c0] sm:$0xff]
        %v304 = vld [vmem:[%s190 + $0x1c8] sm:$0xff]
        %v305 = vld [vmem:[%s190 + $0x1d0] sm:$0xff]
        %v306 = vld [vmem:[%s190 + $0x1d8] sm:$0xff]
        %v307 = vld [vmem:[%s190 + $0x1e0] sm:$0xff]
        %v308 = vld [vmem:[%s190 + $0x1e8] sm:$0xff]
        %v309 = vld [vmem:[%s190 + $0x1f0] sm:$0xff]
        %v310 = vld [vmem:[%s190 + $0x1f8] sm:$0xff]
        %v311 = vld [vmem:[%s190 + $0x200] sm:$0xff]
        %v312 = vld [vmem:[%s190 + $0x208] sm:$0xff]
        %v313 = vld [vmem:[%s190 + $0x210] sm:$0xff]
        %v314 = vld [vmem:[%s190 + $0x218] sm:$0xff]
        %v315 = vld [vmem:[%s190 + $0x220] sm:$0xff]
        %v316 = vld [vmem:[%s190 + $0x228] sm:$0xff]
        %v317 = vld [vmem:[%s190 + $0x230] sm:$0xff]
        %v318 = vld [vmem:[%s190 + $0x238] sm:$0xff]
        %v319 = vld [vmem:[%s190 + $0x240] sm:$0xff]
        %v320 = vld [vmem:[%s190 + $0x248] sm:$0xff]
        %v321 = vld [vmem:[%s190 + $0x250] sm:$0xff]
        %v322 = vld [vmem:[%s190 + $0x258] sm:$0xff]
        %v323 = vld [vmem:[%s190 + $0x260] sm:$0xff]
        %v324 = vld [vmem:[%s190 + $0x268] sm:$0xff]
        %v325 = vld [vmem:[%s190 + $0x270] sm:$0xff]
        %v326 = vld [vmem:[%s190 + $0x278] sm:$0xff]
        %v327 = vld [vmem:[%s190 + $0x280] sm:$0xff]
        %v328 = vld [vmem:[%s190 + $0x288] sm:$0xff]
        %v329 = vld [vmem:[%s190 + $0x290] sm:$0xff]
        %v330 = vld [vmem:[%s190 + $0x298] sm:$0xff]
        %v331 = vld [vmem:[%s190 + $0x2a0] sm:$0xff]
        %v332 = vld [vmem:[%s190 + $0x2a8] sm:$0xff]
        %v333 = vld [vmem:[%s190 + $0x2b0] sm:$0xff]
        %v334 = vld [vmem:[%s190 + $0x2b8] sm:$0xff]
        %v335 = vld [vmem:[%s190 + $0x2c0] sm:$0xff]
        %v336 = vld [vmem:[%s190 + $0x2c8] sm:$0xff]
        %v337 = vld [vmem:[%s190 + $0x2d0] sm:$0xff]
        %v338 = vld [vmem:[%s190 + $0x2d8] sm:$0xff]
        %v339 = vld [vmem:[%s190 + $0x2e0] sm:$0xff]
        %v340 = vld [vmem:[%s190 + $0x2e8] sm:$0xff]
        %v341 = vld [vmem:[%s190 + $0x2f0] sm:$0xff]
        %v342 = vld [vmem:[%s190 + $0x2f8] sm:$0xff]
        %v343 = vld [vmem:[%s190 + $0x300] sm:$0xff]
        %v344 = vld [vmem:[%s190 + $0x308] sm:$0xff]
        %v345 = vld [vmem:[%s190 + $0x310] sm:$0xff]
        %v346 = vld [vmem:[%s190 + $0x318] sm:$0xff]
        %v347 = vld [vmem:[%s190 + $0x320] sm:$0xff]
        %v348 = vld [vmem:[%s190 + $0x328] sm:$0xff]
        %v349 = vld [vmem:[%s190 + $0x330] sm:$0xff]
        %v350 = vld [vmem:[%s190 + $0x338] sm:$0xff]
        %v351 = vld [vmem:[%s190 + $0x340] sm:$0xff]
        %v352 = vld [vmem:[%s190 + $0x348] sm:$0xff]
        %v353 = vld [vmem:[%s190 + $0x350] sm:$0xff]
        %v354 = vld [vmem:[%s190 + $0x358] sm:$0xff]
        %v355 = vld [vmem:[%s190 + $0x360] sm:$0xff]
        %v356 = vld [vmem:[%s190 + $0x368] sm:$0xff]
        %v357 = vld [vmem:[%s190 + $0x370] sm:$0xff]
        %v358 = vld [vmem:[%s190 + $0x378] sm:$0xff]
        %v359 = vld [vmem:[%s190 + $0x380] sm:$0xff]
        %v360 = vld [vmem:[%s190 + $0x388] sm:$0xff]
        %v361 = vld [vmem:[%s190 + $0x390] sm:$0xff]
        %v362 = vld [vmem:[%s190 + $0x398] sm:$0xff]
        %v363 = vld [vmem:[%s190 + $0x3a0] sm:$0xff]
        %v364 = vld [vmem:[%s190 + $0x3a8] sm:$0xff]
        %v365 = vld [vmem:[%s190 + $0x3b0] sm:$0xff]
        %v366 = vld [vmem:[%s190 + $0x3b8] sm:$0xff]
        %v367 = vld [vmem:[%s190 + $0x3c0] sm:$0xff]
        %v368 = vld [vmem:[%s190 + $0x3c8] sm:$0xff]
        %v369 = vld [vmem:[%s190 + $0x3d0] sm:$0xff]
        %v370 = vld [vmem:[%s190 + $0x3d8] sm:$0xff]
        %v371 = vld [vmem:[%s190 + $0x3e0] sm:$0xff]
        %v372 = vld [vmem:[%s190 + $0x3e8] sm:$0xff]
        %v373 = vld [vmem:[%s190 + $0x3f0] sm:$0xff]
        %v374 = vld [vmem:[%s190 + $0x3f8] sm:$0xff]
        %v375 = vld [vmem:[%s190 + $0x400] sm:$0xff]
        %v376 = vld [vmem:[%s190 + $0x408] sm:$0xff]
        %v377 = vld [vmem:[%s190 + $0x410] sm:$0xff]
        %v378 = vld [vmem:[%s190 + $0x418] sm:$0xff]
        %v379 = vld [vmem:[%s190 + $0x420] sm:$0xff]
        %v380 = vld [vmem:[%s190 + $0x428] sm:$0xff]
        %v381 = vld [vmem:[%s190 + $0x430] sm:$0xff]
        %v382 = vld [vmem:[%s190 + $0x438] sm:$0xff]
        %v383 = vld [vmem:[%s190 + $0x440] sm:$0xff]
        %v384 = vld [vmem:[%s190 + $0x448] sm:$0xff]
        %v385 = vld [vmem:[%s190 + $0x450] sm:$0xff]
        %v386 = vld [vmem:[%s190 + $0x458] sm:$0xff]
        %v387 = vld [vmem:[%s190 + $0x460] sm:$0xff]
        %v388 = vld [vmem:[%s190 + $0x468] sm:$0xff]
        %v389 = vld [vmem:[%s190 + $0x470] sm:$0xff]
        %v390 = vld [vmem:[%s190 + $0x478] sm:$0xff]
        %v391 = vld [vmem:[%s190 + $0x480] sm:$0xff]
        %v392 = vld [vmem:[%s190 + $0x488] sm:$0xff]
        %v393 = vld [vmem:[%s190 + $0x490] sm:$0xff]
        %v394 = vld [vmem:[%s190 + $0x498] sm:$0xff]
        %v395 = vld [vmem:[%s190 + $0x4a0] sm:$0xff]
        %v396 = vld [vmem:[%s190 + $0x4a8] sm:$0xff]
        %v397 = vld [vmem:[%s190 + $0x4b0] sm:$0xff]
        %v398 = vld [vmem:[%s190 + $0x4b8] sm:$0xff]
        %v399 = vld [vmem:[%s190 + $0x4c0] sm:$0xff]
        %v400 = vld [vmem:[%s190 + $0x4c8] sm:$0xff]
        %v401 = vld [vmem:[%s190 + $0x4d0] sm:$0xff]
        %v402 = vld [vmem:[%s190 + $0x4d8] sm:$0xff]
        %v403 = vld [vmem:[%s190 + $0x4e0] sm:$0xff]
        %v404 = vld [vmem:[%s190 + $0x4e8] sm:$0xff]
        %v405 = vld [vmem:[%s190 + $0x4f0] sm:$0xff]
        %v406 = vld [vmem:[%s190 + $0x4f8] sm:$0xff]
        %v407 = vld [vmem:[%s190 + $0x500] sm:$0xff]
        %v408 = vld [vmem:[%s190 + $0x508] sm:$0xff]
        %v409 = vld [vmem:[%s190 + $0x510] sm:$0xff]
        %v410 = vld [vmem:[%s190 + $0x518] sm:$0xff]
        %v411 = vld [vmem:[%s190 + $0x520] sm:$0xff]
        %v412 = vld [vmem:[%s190 + $0x528] sm:$0xff]
        %v413 = vld [vmem:[%s190 + $0x530] sm:$0xff]
        %v414 = vld [vmem:[%s190 + $0x538] sm:$0xff]
        %v415 = vld [vmem:[%s190 + $0x540] sm:$0xff]
        %v416 = vld [vmem:[%s190 + $0x548] sm:$0xff]
        %v417 = vld [vmem:[%s190 + $0x550] sm:$0xff]
        %v418 = vld [vmem:[%s190 + $0x558] sm:$0xff]
        %v419 = vld [vmem:[%s190 + $0x560] sm:$0xff]
        %v420 = vld [vmem:[%s190 + $0x568] sm:$0xff]
        %v421 = vld [vmem:[%s190 + $0x570] sm:$0xff]
        %v422 = vld [vmem:[%s190 + $0x578] sm:$0xff]
        %v423 = vld [vmem:[%s190 + $0x580] sm:$0xff]
        %v424 = vld [vmem:[%s190 + $0x588] sm:$0xff]
        %v425 = vld [vmem:[%s190 + $0x590] sm:$0xff]
        %v426 = vld [vmem:[%s190 + $0x598] sm:$0xff]
        %v427 = vld [vmem:[%s190 + $0x5a0] sm:$0xff]
        %v428 = vld [vmem:[%s190 + $0x5a8] sm:$0xff]
        %v429 = vld [vmem:[%s190 + $0x5b0] sm:$0xff]
        %v430 = vld [vmem:[%s190 + $0x5b8] sm:$0xff]
        %v431 = vld [vmem:[%s190 + $0x5c0] sm:$0xff]
        %v432 = vld [vmem:[%s190 + $0x5c8] sm:$0xff]
        %v433 = vld [vmem:[%s190 + $0x5d0] sm:$0xff]
        %v434 = vld [vmem:[%s190 + $0x5d8] sm:$0xff]
        %v435 = vld [vmem:[%s190 + $0x5e0] sm:$0xff]
        %v436 = vld [vmem:[%s190 + $0x5e8] sm:$0xff]
        %v437 = vld [vmem:[%s190 + $0x5f0] sm:$0xff]
        %v438 = vld [vmem:[%s190 + $0x5f8] sm:$0xff]
        %v439 = vld [vmem:[%s190 + $0x600] sm:$0xff]
        %v440 = vld [vmem:[%s190 + $0x608] sm:$0xff]
        %v441 = vld [vmem:[%s190 + $0x610] sm:$0xff]
        %v442 = vld [vmem:[%s190 + $0x618] sm:$0xff]
        %v443 = vld [vmem:[%s190 + $0x620] sm:$0xff]
        %v444 = vld [vmem:[%s190 + $0x628] sm:$0xff]
        %v445 = vld [vmem:[%s190 + $0x630] sm:$0xff]
        %v446 = vld [vmem:[%s190 + $0x638] sm:$0xff]
        %v447 = vld [vmem:[%s190 + $0x640] sm:$0xff]
        %v448 = vld [vmem:[%s190 + $0x648] sm:$0xff]
        %v449 = vld [vmem:[%s190 + $0x650] sm:$0xff]
        %v450 = vld [vmem:[%s190 + $0x658] sm:$0xff]
        %v451 = vld [vmem:[%s190 + $0x660] sm:$0xff]
        %v452 = vld [vmem:[%s190 + $0x668] sm:$0xff]
        %v453 = vld [vmem:[%s190 + $0x670] sm:$0xff]
        %v454 = vld [vmem:[%s190 + $0x678] sm:$0xff]
        %v455 = vld [vmem:[%s190 + $0x680] sm:$0xff]
        %v456 = vld [vmem:[%s190 + $0x688] sm:$0xff]
        %v457 = vld [vmem:[%s190 + $0x690] sm:$0xff]
        %v458 = vld [vmem:[%s190 + $0x698] sm:$0xff]
        %v459 = vld [vmem:[%s190 + $0x6a0] sm:$0xff]
        %v460 = vld [vmem:[%s190 + $0x6a8] sm:$0xff]
        %v461 = vld [vmem:[%s190 + $0x6b0] sm:$0xff]
        %v462 = vld [vmem:[%s190 + $0x6b8] sm:$0xff]
        %v463 = vld [vmem:[%s190 + $0x6c0] sm:$0xff]
        %v464 = vld [vmem:[%s190 + $0x6c8] sm:$0xff]
        %v465 = vld [vmem:[%s190 + $0x6d0] sm:$0xff]
        %v466 = vld [vmem:[%s190 + $0x6d8] sm:$0xff]
        %v467 = vld [vmem:[%s190 + $0x6e0] sm:$0xff]
        %v468 = vld [vmem:[%s190 + $0x6e8] sm:$0xff]
        %v469 = vld [vmem:[%s190 + $0x6f0] sm:$0xff]
        %v470 = vld [vmem:[%s190 + $0x6f8] sm:$0xff]
        %v471 = vld [vmem:[%s190 + $0x700] sm:$0xff]
        %v472 = vld [vmem:[%s190 + $0x708] sm:$0xff]
        %v473 = vld [vmem:[%s190 + $0x710] sm:$0xff]
        %v474 = vld [vmem:[%s190 + $0x718] sm:$0xff]
        %v475 = vld [vmem:[%s190 + $0x720] sm:$0xff]
        %v476 = vld [vmem:[%s190 + $0x728] sm:$0xff]
        %v477 = vld [vmem:[%s190 + $0x730] sm:$0xff]
        %v478 = vld [vmem:[%s190 + $0x738] sm:$0xff]
        %v479 = vld [vmem:[%s190 + $0x740] sm:$0xff]
        %v480 = vld [vmem:[%s190 + $0x748] sm:$0xff]
        %v481 = vld [vmem:[%s190 + $0x750] sm:$0xff]
        %v482 = vld [vmem:[%s190 + $0x758] sm:$0xff]
        %v483 = vld [vmem:[%s190 + $0x760] sm:$0xff]
        %v484 = vld [vmem:[%s190 + $0x768] sm:$0xff]
        %v485 = vld [vmem:[%s190 + $0x770] sm:$0xff]
        %v486 = vld [vmem:[%s190 + $0x778] sm:$0xff]
        %v487 = vld [vmem:[%s190 + $0x780] sm:$0xff]
        %v488 = vld [vmem:[%s190 + $0x788] sm:$0xff]
        %v489 = vld [vmem:[%s190 + $0x790] sm:$0xff]
        %v490 = vld [vmem:[%s190 + $0x798] sm:$0xff]
        %v491 = vld [vmem:[%s190 + $0x7a0] sm:$0xff]
        %v492 = vld [vmem:[%s190 + $0x7a8] sm:$0xff]
        %v493 = vld [vmem:[%s190 + $0x7b0] sm:$0xff]
        %v494 = vld [vmem:[%s190 + $0x7b8] sm:$0xff]
        %v495 = vld [vmem:[%s190 + $0x7c0] sm:$0xff]
        %v496 = vld [vmem:[%s190 + $0x7c8] sm:$0xff]
        %v497 = vld [vmem:[%s190 + $0x7d0] sm:$0xff]
        %v498 = vld [vmem:[%s190 + $0x7d8] sm:$0xff]
        %v499 = vld [vmem:[%s190 + $0x7e0] sm:$0xff]
        %v500 = vld [vmem:[%s190 + $0x7e8] sm:$0xff]
        %v501 = vld [vmem:[%s190 + $0x7f0] sm:$0xff]
        %v502 = vld [vmem:[%s190 + $0x7f8] sm:$0xff]
        %v503 = vld [vmem:[%s190 + $0x800] sm:$0xff]
        %v504 = vld [vmem:[%s190 + $0x808] sm:$0xff]
        %v505 = vld [vmem:[%s190 + $0x810] sm:$0xff]
        %v506 = vld [vmem:[%s190 + $0x818] sm:$0xff]
        %v507 = vld [vmem:[%s190 + $0x820] sm:$0xff]
        %v508 = vld [vmem:[%s190 + $0x828] sm:$0xff]
        %v509 = vld [vmem:[%s190 + $0x830] sm:$0xff]
        %v510 = vld [vmem:[%s190 + $0x838] sm:$0xff]
        %v511 = vld [vmem:[%s190 + $0x840] sm:$0xff]
        %v512 = vld [vmem:[%s190 + $0x848] sm:$0xff]
        %v513 = vld [vmem:[%s190 + $0x850] sm:$0xff]
        %v514 = vld [vmem:[%s190 + $0x858] sm:$0xff]
        %v515 = vld [vmem:[%s190 + $0x860] sm:$0xff]
        %v516 = vld [vmem:[%s190 + $0x868] sm:$0xff]
        %v517 = vld [vmem:[%s190 + $0x870] sm:$0xff]
        %v518 = vld [vmem:[%s190 + $0x878] sm:$0xff]
        %v519 = vld [vmem:[%s190 + $0x880] sm:$0xff]
        %v520 = vld [vmem:[%s190 + $0x888] sm:$0xff]
        %v521 = vld [vmem:[%s190 + $0x890] sm:$0xff]
        %v522 = vld [vmem:[%s190 + $0x898] sm:$0xff]
        %v523 = vld [vmem:[%s190 + $0x8a0] sm:$0xff]
        %v524 = vld [vmem:[%s190 + $0x8a8] sm:$0xff]
        %v525 = vld [vmem:[%s190 + $0x8b0] sm:$0xff]
        %v526 = vld [vmem:[%s190 + $0x8b8] sm:$0xff]
        %v527 = vld [vmem:[%s190 + $0x8c0] sm:$0xff]
        %v528 = vld [vmem:[%s190 + $0x8c8] sm:$0xff]
        %v529 = vld [vmem:[%s190 + $0x8d0] sm:$0xff]
        %v530 = vld [vmem:[%s190 + $0x8d8] sm:$0xff]
        %v531 = vld [vmem:[%s190 + $0x8e0] sm:$0xff]
        %v532 = vld [vmem:[%s190 + $0x8e8] sm:$0xff]
        %v533 = vld [vmem:[%s190 + $0x8f0] sm:$0xff]
        %v534 = vld [vmem:[%s190 + $0x8f8] sm:$0xff]
        %v535 = vld [vmem:[%s190 + $0x900] sm:$0xff]
        %v536 = vld [vmem:[%s190 + $0x908] sm:$0xff]
        %v537 = vld [vmem:[%s190 + $0x910] sm:$0xff]
        %v538 = vld [vmem:[%s190 + $0x918] sm:$0xff]
        %v539 = vld [vmem:[%s190 + $0x920] sm:$0xff]
        %v540 = vld [vmem:[%s190 + $0x928] sm:$0xff]
        %v541 = vld [vmem:[%s190 + $0x930] sm:$0xff]
        %v542 = vld [vmem:[%s190 + $0x938] sm:$0xff]
        %v543 = vld [vmem:[%s190 + $0x940] sm:$0xff]
        %v544 = vld [vmem:[%s190 + $0x948] sm:$0xff]
        %v545 = vld [vmem:[%s190 + $0x950] sm:$0xff]
        %v546 = vld [vmem:[%s190 + $0x958] sm:$0xff]
        %v547 = vld [vmem:[%s190 + $0x960] sm:$0xff]
        %v548 = vld [vmem:[%s190 + $0x968] sm:$0xff]
        %v549 = vld [vmem:[%s190 + $0x970] sm:$0xff]
        %v550 = vld [vmem:[%s190 + $0x978] sm:$0xff]
        %v551 = vld [vmem:[%s190 + $0x980] sm:$0xff]
        %v552 = vld [vmem:[%s190 + $0x988] sm:$0xff]
        %v553 = vld [vmem:[%s190 + $0x990] sm:$0xff]
        %v554 = vld [vmem:[%s190 + $0x998] sm:$0xff]
        %v555 = vld [vmem:[%s190 + $0x9a0] sm:$0xff]
        %v556 = vld [vmem:[%s190 + $0x9a8] sm:$0xff]
        %v557 = vld [vmem:[%s190 + $0x9b0] sm:$0xff]
        %v558 = vld [vmem:[%s190 + $0x9b8] sm:$0xff]
        %v559 = vld [vmem:[%s190 + $0x9c0] sm:$0xff]
        %v560 = vld [vmem:[%s190 + $0x9c8] sm:$0xff]
        %v561 = vld [vmem:[%s190 + $0x9d0] sm:$0xff]
        %v562 = vld [vmem:[%s190 + $0x9d8] sm:$0xff]
        %v563 = vld [vmem:[%s190 + $0x9e0] sm:$0xff]
        %v564 = vld [vmem:[%s190 + $0x9e8] sm:$0xff]
        %v565 = vld [vmem:[%s190 + $0x9f0] sm:$0xff]
        %v566 = vld [vmem:[%s190 + $0x9f8] sm:$0xff]
        %v567 = vld [vmem:[%s1] sm:$0xf]
        %v568 = vld [vmem:[%s1 + $0x4] sm:$0xf]
        %v569 = vld [vmem:[%s1 + $0x8] sm:$0xf]
        %v570 = vld [vmem:[%s1 + $0xc] sm:$0xf]
        %v571 = vld [vmem:[%s1 + $0x10] sm:$0xf]
        %v572 = vld [vmem:[%s1 + $0x14] sm:$0xf]
        %v573 = vld [vmem:[%s1 + $0x18] sm:$0xf]
        %v574 = vld [vmem:[%s1 + $0x1c] sm:$0xf]
        %v575 = vld [vmem:[%s1 + $0x20] sm:$0xf]
        %v576 = vld [vmem:[%s1 + $0x24] sm:$0xf]
        %v577 = vld [vmem:[%s1 + $0x28] sm:$0xf]
        %v578 = vld [vmem:[%s1 + $0x2c] sm:$0xf]
        %v579 = vld [vmem:[%s1 + $0x30] sm:$0xf]
        %v580 = vld [vmem:[%s1 + $0x34] sm:$0xf]
        %v581 = vld [vmem:[%s1 + $0x38] sm:$0xf]
        %v582 = vld [vmem:[%s1 + $0x3c] sm:$0xf]
        %v583 = vld [vmem:[%s1 + $0x40] sm:$0xf]
        %v584 = vld [vmem:[%s1 + $0x44] sm:$0xf]
        %v585 = vld [vmem:[%s1 + $0x48] sm:$0xf]
        %v586 = vld [vmem:[%s1 + $0x4c] sm:$0xf]
        %v587 = vld [vmem:[%s1 + $0x50] sm:$0xf]
        %v588 = vld [vmem:[%s1 + $0x54] sm:$0xf]
        %v589 = vld [vmem:[%s1 + $0x58] sm:$0xf]
        %v590 = vld [vmem:[%s1 + $0x5c] sm:$0xf]
        %v591 = vld [vmem:[%s1 + $0x60] sm:$0xf]
        %v592 = vld [vmem:[%s1 + $0x64] sm:$0xf]
        %v593 = vld [vmem:[%s1 + $0x68] sm:$0xf]
        %v594 = vld [vmem:[%s1 + $0x6c] sm:$0xf]
        %v595 = vld [vmem:[%s1 + $0x70] sm:$0xf]
        %v596 = vld [vmem:[%s1 + $0x74] sm:$0xf]
        %v597 = vld [vmem:[%s1 + $0x78] sm:$0xf]
        %v598 = vld [vmem:[%s1 + $0x7c] sm:$0xf]
        %v599 = vld [vmem:[%s1 + $0x80] sm:$0xf]
        %v600 = vld [vmem:[%s1 + $0x84] sm:$0xf]
        %v601 = vld [vmem:[%s1 + $0x88] sm:$0xf]
        %v602 = vld [vmem:[%s1 + $0x8c] sm:$0xf]
        %v603 = vld [vmem:[%s1 + $0x90] sm:$0xf]
        %v604 = vld [vmem:[%s1 + $0x94] sm:$0xf]
        %v605 = vld [vmem:[%s1 + $0x98] sm:$0xf]
        %v606 = vld [vmem:[%s1 + $0x9c] sm:$0xf]
        %v607 = vld [vmem:[%s1 + $0xa0] sm:$0xf]
        %v608 = vld [vmem:[%s1 + $0xa4] sm:$0xf]
        %v609 = vld [vmem:[%s1 + $0xa8] sm:$0xf]
        %v610 = vld [vmem:[%s1 + $0xac] sm:$0xf]
        %v611 = vld [vmem:[%s1 + $0xb0] sm:$0xf]
        %v612 = vld [vmem:[%s1 + $0xb4] sm:$0xf]
        %v613 = vld [vmem:[%s1 + $0xb8] sm:$0xf]
        %v614 = vld [vmem:[%s1 + $0xbc] sm:$0xf]
        %v615 = vld [vmem:[%s1 + $0xc0] sm:$0xf]
        %v616 = vld [vmem:[%s1 + $0xc4] sm:$0xf]
        %v617 = vld [vmem:[%s1 + $0xc8] sm:$0xf]
        %v618 = vld [vmem:[%s1 + $0xcc] sm:$0xf]
        %v619 = vld [vmem:[%s1 + $0xd0] sm:$0xf]
        %v620 = vld [vmem:[%s1 + $0xd4] sm:$0xf]
        %v621 = vld [vmem:[%s1 + $0xd8] sm:$0xf]
        %v622 = vld [vmem:[%s1 + $0xdc] sm:$0xf]
        %v623 = vld [vmem:[%s1 + $0xe0] sm:$0xf]
        %v624 = vld [vmem:[%s1 + $0xe4] sm:$0xf]
        %v625 = vld [vmem:[%s1 + $0xe8] sm:$0xf]
        %v626 = vld [vmem:[%s1 + $0xec] sm:$0xf]
        %v627 = vld [vmem:[%s1 + $0xf0] sm:$0xf]
        %v628 = vld [vmem:[%s1 + $0xf4] sm:$0xf]
        %v629 = vld [vmem:[%s1 + $0xf8] sm:$0xf]
        %v630 = vld [vmem:[%s1 + $0xfc] sm:$0xf]
        %v631 = vld [vmem:[%s1 + $0x100] sm:$0xf]
        %v632 = vld [vmem:[%s1 + $0x104] sm:$0xf]
        %v633 = vld [vmem:[%s1 + $0x108] sm:$0xf]
        %v634 = vld [vmem:[%s1 + $0x10c] sm:$0xf]
        %v635 = vld [vmem:[%s1 + $0x110] sm:$0xf]
        %v636 = vld [vmem:[%s1 + $0x114] sm:$0xf]
        %v637 = vld [vmem:[%s1 + $0x118] sm:$0xf]
        %v638 = vld [vmem:[%s1 + $0x11c] sm:$0xf]
        %v639 = vld [vmem:[%s1 + $0x120] sm:$0xf]
        %v640 = vld [vmem:[%s1 + $0x124] sm:$0xf]
        %v641 = vld [vmem:[%s1 + $0x128] sm:$0xf]
        %v642 = vld [vmem:[%s1 + $0x12c] sm:$0xf]
        %v643 = vld [vmem:[%s1 + $0x130] sm:$0xf]
        %v644 = vld [vmem:[%s1 + $0x134] sm:$0xf]
        %v645 = vld [vmem:[%s1 + $0x138] sm:$0xf]
        %v646 = vld [vmem:[%s1 + $0x13c] sm:$0xf]
        %v647 = vld [vmem:[%s1 + $0x140] sm:$0xf]
        %v648 = vld [vmem:[%s1 + $0x144] sm:$0xf]
        %v649 = vld [vmem:[%s1 + $0x148] sm:$0xf]
        %v650 = vld [vmem:[%s1 + $0x14c] sm:$0xf]
        %v651 = vld [vmem:[%s1 + $0x150] sm:$0xf]
        %v652 = vld [vmem:[%s1 + $0x154] sm:$0xf]
        %v653 = vld [vmem:[%s1 + $0x158] sm:$0xf]
        %v654 = vld [vmem:[%s1 + $0x15c] sm:$0xf]
        %v655 = vld [vmem:[%s1 + $0x160] sm:$0xf]
        %v656 = vld [vmem:[%s1 + $0x164] sm:$0xf]
        %v657 = vld [vmem:[%s1 + $0x168] sm:$0xf]
        %v658 = vld [vmem:[%s1 + $0x16c] sm:$0xf]
        %v659 = vld [vmem:[%s1 + $0x170] sm:$0xf]
        %v660 = vld [vmem:[%s1 + $0x174] sm:$0xf]
        %v661 = vld [vmem:[%s1 + $0x178] sm:$0xf]
        %v662 = vld [vmem:[%s1 + $0x17c] sm:$0xf]
        %v663 = vld [vmem:[%s1 + $0x180] sm:$0xf]
        %v664 = vld [vmem:[%s1 + $0x184] sm:$0xf]
        %v665 = vld [vmem:[%s1 + $0x188] sm:$0xf]
        %v666 = vld [vmem:[%s1 + $0x18c] sm:$0xf]
        %v667 = vld [vmem:[%s1 + $0x190] sm:$0xf]
        %v668 = vld [vmem:[%s1 + $0x194] sm:$0xf]
        %v669 = vld [vmem:[%s1 + $0x198] sm:$0xf]
        %v670 = vld [vmem:[%s1 + $0x19c] sm:$0xf]
        %v671 = vld [vmem:[%s1 + $0x1a0] sm:$0xf]
        %v672 = vld [vmem:[%s1 + $0x1a4] sm:$0xf]
        %v673 = vld [vmem:[%s1 + $0x1a8] sm:$0xf]
        %v674 = vld [vmem:[%s1 + $0x1ac] sm:$0xf]
        %v675 = vld [vmem:[%s1 + $0x1b0] sm:$0xf]
        %v676 = vld [vmem:[%s1 + $0x1b4] sm:$0xf]
        %v677 = vld [vmem:[%s1 + $0x1b8] sm:$0xf]
        %v678 = vld [vmem:[%s1 + $0x1bc] sm:$0xf]
        %v679 = vld [vmem:[%s1 + $0x1c0] sm:$0xf]
        %v680 = vld [vmem:[%s1 + $0x1c4] sm:$0xf]
        %v681 = vld [vmem:[%s1 + $0x1c8] sm:$0xf]
        %v682 = vld [vmem:[%s1 + $0x1cc] sm:$0xf]
        %v683 = vld [vmem:[%s1 + $0x1d0] sm:$0xf]
        %v684 = vld [vmem:[%s1 + $0x1d4] sm:$0xf]
        %v685 = vld [vmem:[%s1 + $0x1d8] sm:$0xf]
        %v686 = vld [vmem:[%s1 + $0x1dc] sm:$0xf]
        %v687 = vld [vmem:[%s1 + $0x1e0] sm:$0xf]
        %v688 = vld [vmem:[%s1 + $0x1e4] sm:$0xf]
        %v689 = vld [vmem:[%s1 + $0x1e8] sm:$0xf]
        %v690 = vld [vmem:[%s1 + $0x1ec] sm:$0xf]
        %v691 = vld [vmem:[%s1 + $0x1f0] sm:$0xf]
        %v692 = vld [vmem:[%s1 + $0x1f4] sm:$0xf]
        %v693 = vld [vmem:[%s1 + $0x1f8] sm:$0xf]
        %v694 = vld [vmem:[%s1 + $0x1fc] sm:$0xf]
        %v695 = vld [vmem:[%s1 + $0x200] sm:$0xf]
        %v696 = vld [vmem:[%s1 + $0x204] sm:$0xf]
        %v697 = vld [vmem:[%s1 + $0x208] sm:$0xf]
        %v698 = vld [vmem:[%s1 + $0x20c] sm:$0xf]
        %v699 = vld [vmem:[%s1 + $0x210] sm:$0xf]
        %v700 = vld [vmem:[%s1 + $0x214] sm:$0xf]
        %v701 = vld [vmem:[%s1 + $0x218] sm:$0xf]
        %v702 = vld [vmem:[%s1 + $0x21c] sm:$0xf]
        %v703 = vld [vmem:[%s1 + $0x220] sm:$0xf]
        %v704 = vld [vmem:[%s1 + $0x224] sm:$0xf]
        %v705 = vld [vmem:[%s1 + $0x228] sm:$0xf]
        %v706 = vld [vmem:[%s1 + $0x22c] sm:$0xf]
        %v707 = vld [vmem:[%s1 + $0x230] sm:$0xf]
        %v708 = vld [vmem:[%s1 + $0x234] sm:$0xf]
        %v709 = vld [vmem:[%s1 + $0x238] sm:$0xf]
        %v710 = vld [vmem:[%s1 + $0x23c] sm:$0xf]
        %v711 = vld [vmem:[%s1 + $0x240] sm:$0xf]
        %v712 = vld [vmem:[%s1 + $0x244] sm:$0xf]
        %v713 = vld [vmem:[%s1 + $0x248] sm:$0xf]
        %v714 = vld [vmem:[%s1 + $0x24c] sm:$0xf]
        %v715 = vld [vmem:[%s1 + $0x250] sm:$0xf]
        %v716 = vld [vmem:[%s1 + $0x254] sm:$0xf]
        %v717 = vld [vmem:[%s1 + $0x258] sm:$0xf]
        %v718 = vld [vmem:[%s1 + $0x25c] sm:$0xf]
        %v719 = vld [vmem:[%s1 + $0x260] sm:$0xf]
        %v720 = vld [vmem:[%s1 + $0x264] sm:$0xf]
        %v721 = vld [vmem:[%s1 + $0x268] sm:$0xf]
        %v722 = vld [vmem:[%s1 + $0x26c] sm:$0xf]
        %v723 = vld [vmem:[%s1 + $0x270] sm:$0xf]
        %v724 = vld [vmem:[%s1 + $0x274] sm:$0xf]
        %v725 = vld [vmem:[%s1 + $0x278] sm:$0xf]
        %v726 = vld [vmem:[%s1 + $0x27c] sm:$0xf]
        %v727 = vld [vmem:[%s235] sm:$0xff]
        %v728 = vld [vmem:[%s235 + $0x8] sm:$0xff]
        %v729 = vld [vmem:[%s235 + $0x10] sm:$0xff]
        %v730 = vld [vmem:[%s235 + $0x18] sm:$0xff]
        %v731 = vld [vmem:[%s235 + $0x20] sm:$0xff]
        %v732 = vld [vmem:[%s235 + $0x28] sm:$0xff]
        %v733 = vld [vmem:[%s235 + $0x30] sm:$0xff]
        %v734 = vld [vmem:[%s235 + $0x38] sm:$0xff]
        %v735 = vld [vmem:[%s235 + $0x40] sm:$0xff]
        %v736 = vld [vmem:[%s235 + $0x48] sm:$0xff]
        %v737 = vld [vmem:[%s235 + $0x50] sm:$0xff]
        %v738 = vld [vmem:[%s235 + $0x58] sm:$0xff]
        %v739 = vld [vmem:[%s235 + $0x60] sm:$0xff]
        %v740 = vld [vmem:[%s235 + $0x68] sm:$0xff]
        %v741 = vld [vmem:[%s235 + $0x70] sm:$0xff]
        %v742 = vld [vmem:[%s235 + $0x78] sm:$0xff]
        %v743 = vld [vmem:[%s235 + $0x80] sm:$0xff]
        %v744 = vld [vmem:[%s235 + $0x88] sm:$0xff]
        %v745 = vld [vmem:[%s235 + $0x90] sm:$0xff]
        %v746 = vld [vmem:[%s235 + $0x98] sm:$0xff]
        %v747 = vld [vmem:[%s235 + $0xa0] sm:$0xff]
        %v748 = vld [vmem:[%s235 + $0xa8] sm:$0xff]
        %v749 = vld [vmem:[%s235 + $0xb0] sm:$0xff]
        %v750 = vld [vmem:[%s235 + $0xb8] sm:$0xff]
        %v751 = vld [vmem:[%s235 + $0xc0] sm:$0xff]
        %v752 = vld [vmem:[%s235 + $0xc8] sm:$0xff]
        %v753 = vld [vmem:[%s235 + $0xd0] sm:$0xff]
        %v754 = vld [vmem:[%s235 + $0xd8] sm:$0xff]
        %v755 = vld [vmem:[%s235 + $0xe0] sm:$0xff]
        %v756 = vld [vmem:[%s235 + $0xe8] sm:$0xff]
        %v757 = vld [vmem:[%s235 + $0xf0] sm:$0xff]
        %v758 = vld [vmem:[%s235 + $0xf8] sm:$0xff]
        %v759 = vld [vmem:[%s235 + $0x100] sm:$0xff]
        %v760 = vld [vmem:[%s235 + $0x108] sm:$0xff]
        %v761 = vld [vmem:[%s235 + $0x110] sm:$0xff]
        %v762 = vld [vmem:[%s235 + $0x118] sm:$0xff]
        %v763 = vld [vmem:[%s235 + $0x120] sm:$0xff]
        %v764 = vld [vmem:[%s235 + $0x128] sm:$0xff]
        %v765 = vld [vmem:[%s235 + $0x130] sm:$0xff]
        %v766 = vld [vmem:[%s235 + $0x138] sm:$0xff]
        %v767 = vld [vmem:[%s235 + $0x140] sm:$0xff]
        %v768 = vld [vmem:[%s235 + $0x148] sm:$0xff]
        %v769 = vld [vmem:[%s235 + $0x150] sm:$0xff]
        %v770 = vld [vmem:[%s235 + $0x158] sm:$0xff]
        %v771 = vld [vmem:[%s235 + $0x160] sm:$0xff]
        %v772 = vld [vmem:[%s235 + $0x168] sm:$0xff]
        %v773 = vld [vmem:[%s235 + $0x170] sm:$0xff]
        %v774 = vld [vmem:[%s235 + $0x178] sm:$0xff]
        %v775 = vld [vmem:[%s235 + $0x180] sm:$0xff]
        %v776 = vld [vmem:[%s235 + $0x188] sm:$0xff]
        %v777 = vld [vmem:[%s235 + $0x190] sm:$0xff]
        %v778 = vld [vmem:[%s235 + $0x198] sm:$0xff]
        %v779 = vld [vmem:[%s235 + $0x1a0] sm:$0xff]
        %v780 = vld [vmem:[%s235 + $0x1a8] sm:$0xff]
        %v781 = vld [vmem:[%s235 + $0x1b0] sm:$0xff]
        %v782 = vld [vmem:[%s235 + $0x1b8] sm:$0xff]
        %v783 = vld [vmem:[%s235 + $0x1c0] sm:$0xff]
        %v784 = vld [vmem:[%s235 + $0x1c8] sm:$0xff]
        %v785 = vld [vmem:[%s235 + $0x1d0] sm:$0xff]
        %v786 = vld [vmem:[%s235 + $0x1d8] sm:$0xff]
        %v787 = vld [vmem:[%s235 + $0x1e0] sm:$0xff]
        %v788 = vld [vmem:[%s235 + $0x1e8] sm:$0xff]
        %v789 = vld [vmem:[%s235 + $0x1f0] sm:$0xff]
        %v790 = vld [vmem:[%s235 + $0x1f8] sm:$0xff]
        %v1111 = vunpack.c.l.b16 %v247
        %v1112 = vunpack.c.h.b16 %v247
        %v1113 = vunpack.c.l.b16 %v248
        %v1114 = vunpack.c.h.b16 %v248
        %v1115 = vunpack.c.l.b16 %v249
        %v1116 = vunpack.c.h.b16 %v249
        %v1117 = vunpack.c.l.b16 %v250
        %v1118 = vunpack.c.h.b16 %v250
        %v1119 = vunpack.c.l.b16 %v251
        %v1120 = vunpack.c.h.b16 %v251
        %v1121 = vunpack.c.l.b16 %v252
        %v1122 = vunpack.c.h.b16 %v252
        %v1123 = vunpack.c.l.b16 %v253
        %v1124 = vunpack.c.h.b16 %v253
        %v1125 = vunpack.c.l.b16 %v254
        %v1126 = vunpack.c.h.b16 %v254
        %v1127 = vunpack.c.l.b16 %v255
        %v1128 = vunpack.c.h.b16 %v255
        %v1129 = vunpack.c.l.b16 %v256
        %v1130 = vunpack.c.h.b16 %v256
        %v1131 = vunpack.c.l.b16 %v257
        %v1132 = vunpack.c.h.b16 %v257
        %v1133 = vunpack.c.l.b16 %v258
        %v1134 = vunpack.c.h.b16 %v258
        %v1135 = vunpack.c.l.b16 %v259
        %v1136 = vunpack.c.h.b16 %v259
        %v1137 = vunpack.c.l.b16 %v260
        %v1138 = vunpack.c.h.b16 %v260
        %v1139 = vunpack.c.l.b16 %v261
        %v1140 = vunpack.c.h.b16 %v261
        %v1141 = vunpack.c.l.b16 %v262
        %v1142 = vunpack.c.h.b16 %v262
        %v1143 = vunpack.c.l.b16 %v263
        %v1144 = vunpack.c.h.b16 %v263
        %v1145 = vunpack.c.l.b16 %v264
        %v1146 = vunpack.c.h.b16 %v264
        %v1147 = vunpack.c.l.b16 %v265
        %v1148 = vunpack.c.h.b16 %v265
        %v1149 = vunpack.c.l.b16 %v266
        %v1150 = vunpack.c.h.b16 %v266
        %v1151 = vunpack.c.l.b16 %v267
        %v1152 = vunpack.c.h.b16 %v267
        %v1153 = vunpack.c.l.b16 %v268
        %v1154 = vunpack.c.h.b16 %v268
        %v1155 = vunpack.c.l.b16 %v269
        %v1156 = vunpack.c.h.b16 %v269
        %v1157 = vunpack.c.l.b16 %v270
        %v1158 = vunpack.c.h.b16 %v270
        %v1159 = vunpack.c.l.b16 %v271
        %v1160 = vunpack.c.h.b16 %v271
        %v1161 = vunpack.c.l.b16 %v272
        %v1162 = vunpack.c.h.b16 %v272
        %v1163 = vunpack.c.l.b16 %v273
        %v1164 = vunpack.c.h.b16 %v273
        %v1165 = vunpack.c.l.b16 %v274
        %v1166 = vunpack.c.h.b16 %v274
        %v1167 = vunpack.c.l.b16 %v275
        %v1168 = vunpack.c.h.b16 %v275
        %v1169 = vunpack.c.l.b16 %v276
        %v1170 = vunpack.c.h.b16 %v276
        %v1171 = vunpack.c.l.b16 %v277
        %v1172 = vunpack.c.h.b16 %v277
        %v1173 = vunpack.c.l.b16 %v278
        %v1174 = vunpack.c.h.b16 %v278
        %v1175 = vunpack.c.l.b16 %v279
        %v1176 = vunpack.c.h.b16 %v279
        %v1177 = vunpack.c.l.b16 %v280
        %v1178 = vunpack.c.h.b16 %v280
        %v1179 = vunpack.c.l.b16 %v281
        %v1180 = vunpack.c.h.b16 %v281
        %v1181 = vunpack.c.l.b16 %v282
        %v1182 = vunpack.c.h.b16 %v282
        %v1183 = vunpack.c.l.b16 %v283
        %v1184 = vunpack.c.h.b16 %v283
        %v1185 = vunpack.c.l.b16 %v284
        %v1186 = vunpack.c.h.b16 %v284
        %v1187 = vunpack.c.l.b16 %v285
        %v1188 = vunpack.c.h.b16 %v285
        %v1189 = vunpack.c.l.b16 %v286
        %v1190 = vunpack.c.h.b16 %v286
        %v1191 = vunpack.c.l.b16 %v287
        %v1192 = vunpack.c.h.b16 %v287
        %v1193 = vunpack.c.l.b16 %v288
        %v1194 = vunpack.c.h.b16 %v288
        %v1195 = vunpack.c.l.b16 %v289
        %v1196 = vunpack.c.h.b16 %v289
        %v1197 = vunpack.c.l.b16 %v290
        %v1198 = vunpack.c.h.b16 %v290
        %v1199 = vunpack.c.l.b16 %v291
        %v1200 = vunpack.c.h.b16 %v291
        %v1201 = vunpack.c.l.b16 %v292
        %v1202 = vunpack.c.h.b16 %v292
        %v1203 = vunpack.c.l.b16 %v293
        %v1204 = vunpack.c.h.b16 %v293
        %v1205 = vunpack.c.l.b16 %v294
        %v1206 = vunpack.c.h.b16 %v294
        %v1207 = vunpack.c.l.b16 %v295
        %v1208 = vunpack.c.h.b16 %v295
        %v1209 = vunpack.c.l.b16 %v296
        %v1210 = vunpack.c.h.b16 %v296
        %v1211 = vunpack.c.l.b16 %v297
        %v1212 = vunpack.c.h.b16 %v297
        %v1213 = vunpack.c.l.b16 %v298
        %v1214 = vunpack.c.h.b16 %v298
        %v1215 = vunpack.c.l.b16 %v299
        %v1216 = vunpack.c.h.b16 %v299
        %v1217 = vunpack.c.l.b16 %v300
        %v1218 = vunpack.c.h.b16 %v300
        %v1219 = vunpack.c.l.b16 %v301
        %v1220 = vunpack.c.h.b16 %v301
        %v1221 = vunpack.c.l.b16 %v302
        %v1222 = vunpack.c.h.b16 %v302
        %v1223 = vunpack.c.l.b16 %v303
        %v1224 = vunpack.c.h.b16 %v303
        %v1225 = vunpack.c.l.b16 %v304
        %v1226 = vunpack.c.h.b16 %v304
        %v1227 = vunpack.c.l.b16 %v305
        %v1228 = vunpack.c.h.b16 %v305
        %v1229 = vunpack.c.l.b16 %v306
        %v1230 = vunpack.c.h.b16 %v306
        %v1231 = vunpack.c.l.b16 %v307
        %v1232 = vunpack.c.h.b16 %v307
        %v1233 = vunpack.c.l.b16 %v308
        %v1234 = vunpack.c.h.b16 %v308
        %v1235 = vunpack.c.l.b16 %v309
        %v1236 = vunpack.c.h.b16 %v309
        %v1237 = vunpack.c.l.b16 %v310
        %v1238 = vunpack.c.h.b16 %v310
        %v1239 = vunpack.c.l.b16 %v311
        %v1240 = vunpack.c.h.b16 %v311
        %v1241 = vunpack.c.l.b16 %v312
        %v1242 = vunpack.c.h.b16 %v312
        %v1243 = vunpack.c.l.b16 %v313
        %v1244 = vunpack.c.h.b16 %v313
        %v1245 = vunpack.c.l.b16 %v314
        %v1246 = vunpack.c.h.b16 %v314
        %v1247 = vunpack.c.l.b16 %v315
        %v1248 = vunpack.c.h.b16 %v315
        %v1249 = vunpack.c.l.b16 %v316
        %v1250 = vunpack.c.h.b16 %v316
        %v1251 = vunpack.c.l.b16 %v317
        %v1252 = vunpack.c.h.b16 %v317
        %v1253 = vunpack.c.l.b16 %v318
        %v1254 = vunpack.c.h.b16 %v318
        %v1255 = vunpack.c.l.b16 %v319
        %v1256 = vunpack.c.h.b16 %v319
        %v1257 = vunpack.c.l.b16 %v320
        %v1258 = vunpack.c.h.b16 %v320
        %v1259 = vunpack.c.l.b16 %v321
        %v1260 = vunpack.c.h.b16 %v321
        %v1261 = vunpack.c.l.b16 %v322
        %v1262 = vunpack.c.h.b16 %v322
        %v1263 = vunpack.c.l.b16 %v323
        %v1264 = vunpack.c.h.b16 %v323
        %v1265 = vunpack.c.l.b16 %v324
        %v1266 = vunpack.c.h.b16 %v324
        %v1267 = vunpack.c.l.b16 %v325
        %v1268 = vunpack.c.h.b16 %v325
        %v1269 = vunpack.c.l.b16 %v326
        %v1270 = vunpack.c.h.b16 %v326
        %v1271 = vunpack.c.l.b16 %v327
        %v1272 = vunpack.c.h.b16 %v327
        %v1273 = vunpack.c.l.b16 %v328
        %v1274 = vunpack.c.h.b16 %v328
        %v1275 = vunpack.c.l.b16 %v329
        %v1276 = vunpack.c.h.b16 %v329
        %v1277 = vunpack.c.l.b16 %v330
        %v1278 = vunpack.c.h.b16 %v330
        %v1279 = vunpack.c.l.b16 %v331
        %v1280 = vunpack.c.h.b16 %v331
        %v1281 = vunpack.c.l.b16 %v332
        %v1282 = vunpack.c.h.b16 %v332
        %v1283 = vunpack.c.l.b16 %v333
        %v1284 = vunpack.c.h.b16 %v333
        %v1285 = vunpack.c.l.b16 %v334
        %v1286 = vunpack.c.h.b16 %v334
        %v1287 = vunpack.c.l.b16 %v335
        %v1288 = vunpack.c.h.b16 %v335
        %v1289 = vunpack.c.l.b16 %v336
        %v1290 = vunpack.c.h.b16 %v336
        %v1291 = vunpack.c.l.b16 %v337
        %v1292 = vunpack.c.h.b16 %v337
        %v1293 = vunpack.c.l.b16 %v338
        %v1294 = vunpack.c.h.b16 %v338
        %v1295 = vunpack.c.l.b16 %v339
        %v1296 = vunpack.c.h.b16 %v339
        %v1297 = vunpack.c.l.b16 %v340
        %v1298 = vunpack.c.h.b16 %v340
        %v1299 = vunpack.c.l.b16 %v341
        %v1300 = vunpack.c.h.b16 %v341
        %v1301 = vunpack.c.l.b16 %v342
        %v1302 = vunpack.c.h.b16 %v342
        %v1303 = vunpack.c.l.b16 %v343
        %v1304 = vunpack.c.h.b16 %v343
        %v1305 = vunpack.c.l.b16 %v344
        %v1306 = vunpack.c.h.b16 %v344
        %v1307 = vunpack.c.l.b16 %v345
        %v1308 = vunpack.c.h.b16 %v345
        %v1309 = vunpack.c.l.b16 %v346
        %v1310 = vunpack.c.h.b16 %v346
        %v1311 = vunpack.c.l.b16 %v347
        %v1312 = vunpack.c.h.b16 %v347
        %v1313 = vunpack.c.l.b16 %v348
        %v1314 = vunpack.c.h.b16 %v348
        %v1315 = vunpack.c.l.b16 %v349
        %v1316 = vunpack.c.h.b16 %v349
        %v1317 = vunpack.c.l.b16 %v350
        %v1318 = vunpack.c.h.b16 %v350
        %v1319 = vunpack.c.l.b16 %v351
        %v1320 = vunpack.c.h.b16 %v351
        %v1321 = vunpack.c.l.b16 %v352
        %v1322 = vunpack.c.h.b16 %v352
        %v1323 = vunpack.c.l.b16 %v353
        %v1324 = vunpack.c.h.b16 %v353
        %v1325 = vunpack.c.l.b16 %v354
        %v1326 = vunpack.c.h.b16 %v354
        %v1327 = vunpack.c.l.b16 %v355
        %v1328 = vunpack.c.h.b16 %v355
        %v1329 = vunpack.c.l.b16 %v356
        %v1330 = vunpack.c.h.b16 %v356
        %v1331 = vunpack.c.l.b16 %v357
        %v1332 = vunpack.c.h.b16 %v357
        %v1333 = vunpack.c.l.b16 %v358
        %v1334 = vunpack.c.h.b16 %v358
        %v1335 = vunpack.c.l.b16 %v359
        %v1336 = vunpack.c.h.b16 %v359
        %v1337 = vunpack.c.l.b16 %v360
        %v1338 = vunpack.c.h.b16 %v360
        %v1339 = vunpack.c.l.b16 %v361
        %v1340 = vunpack.c.h.b16 %v361
        %v1341 = vunpack.c.l.b16 %v362
        %v1342 = vunpack.c.h.b16 %v362
        %v1343 = vunpack.c.l.b16 %v363
        %v1344 = vunpack.c.h.b16 %v363
        %v1345 = vunpack.c.l.b16 %v364
        %v1346 = vunpack.c.h.b16 %v364
        %v1347 = vunpack.c.l.b16 %v365
        %v1348 = vunpack.c.h.b16 %v365
        %v1349 = vunpack.c.l.b16 %v366
        %v1350 = vunpack.c.h.b16 %v366
        %v1351 = vunpack.c.l.b16 %v367
        %v1352 = vunpack.c.h.b16 %v367
        %v1353 = vunpack.c.l.b16 %v368
        %v1354 = vunpack.c.h.b16 %v368
        %v1355 = vunpack.c.l.b16 %v369
        %v1356 = vunpack.c.h.b16 %v369
        %v1357 = vunpack.c.l.b16 %v370
        %v1358 = vunpack.c.h.b16 %v370
        %v1359 = vunpack.c.l.b16 %v371
        %v1360 = vunpack.c.h.b16 %v371
        %v1361 = vunpack.c.l.b16 %v372
        %v1362 = vunpack.c.h.b16 %v372
        %v1363 = vunpack.c.l.b16 %v373
        %v1364 = vunpack.c.h.b16 %v373
        %v1365 = vunpack.c.l.b16 %v374
        %v1366 = vunpack.c.h.b16 %v374
        %v1367 = vunpack.c.l.b16 %v375
        %v1368 = vunpack.c.h.b16 %v375
        %v1369 = vunpack.c.l.b16 %v376
        %v1370 = vunpack.c.h.b16 %v376
        %v1371 = vunpack.c.l.b16 %v377
        %v1372 = vunpack.c.h.b16 %v377
        %v1373 = vunpack.c.l.b16 %v378
        %v1374 = vunpack.c.h.b16 %v378
        %v1375 = vunpack.c.l.b16 %v379
        %v1376 = vunpack.c.h.b16 %v379
        %v1377 = vunpack.c.l.b16 %v380
        %v1378 = vunpack.c.h.b16 %v380
        %v1379 = vunpack.c.l.b16 %v381
        %v1380 = vunpack.c.h.b16 %v381
        %v1381 = vunpack.c.l.b16 %v382
        %v1382 = vunpack.c.h.b16 %v382
        %v1383 = vunpack.c.l.b16 %v383
        %v1384 = vunpack.c.h.b16 %v383
        %v1385 = vunpack.c.l.b16 %v384
        %v1386 = vunpack.c.h.b16 %v384
        %v1387 = vunpack.c.l.b16 %v385
        %v1388 = vunpack.c.h.b16 %v385
        %v1389 = vunpack.c.l.b16 %v386
        %v1390 = vunpack.c.h.b16 %v386
        %v1391 = vunpack.c.l.b16 %v387
        %v1392 = vunpack.c.h.b16 %v387
        %v1393 = vunpack.c.l.b16 %v388
        %v1394 = vunpack.c.h.b16 %v388
        %v1395 = vunpack.c.l.b16 %v389
        %v1396 = vunpack.c.h.b16 %v389
        %v1397 = vunpack.c.l.b16 %v390
        %v1398 = vunpack.c.h.b16 %v390
        %v1399 = vunpack.c.l.b16 %v391
        %v1400 = vunpack.c.h.b16 %v391
        %v1401 = vunpack.c.l.b16 %v392
        %v1402 = vunpack.c.h.b16 %v392
        %v1403 = vunpack.c.l.b16 %v393
        %v1404 = vunpack.c.h.b16 %v393
        %v1405 = vunpack.c.l.b16 %v394
        %v1406 = vunpack.c.h.b16 %v394
        %v1407 = vunpack.c.l.b16 %v395
        %v1408 = vunpack.c.h.b16 %v395
        %v1409 = vunpack.c.l.b16 %v396
        %v1410 = vunpack.c.h.b16 %v396
        %v1411 = vunpack.c.l.b16 %v397
        %v1412 = vunpack.c.h.b16 %v397
        %v1413 = vunpack.c.l.b16 %v398
        %v1414 = vunpack.c.h.b16 %v398
        %v1415 = vunpack.c.l.b16 %v399
        %v1416 = vunpack.c.h.b16 %v399
        %v1417 = vunpack.c.l.b16 %v400
        %v1418 = vunpack.c.h.b16 %v400
        %v1419 = vunpack.c.l.b16 %v401
        %v1420 = vunpack.c.h.b16 %v401
        %v1421 = vunpack.c.l.b16 %v402
        %v1422 = vunpack.c.h.b16 %v402
        %v1423 = vunpack.c.l.b16 %v403
        %v1424 = vunpack.c.h.b16 %v403
        %v1425 = vunpack.c.l.b16 %v404
        %v1426 = vunpack.c.h.b16 %v404
        %v1427 = vunpack.c.l.b16 %v405
        %v1428 = vunpack.c.h.b16 %v405
        %v1429 = vunpack.c.l.b16 %v406
        %v1430 = vunpack.c.h.b16 %v406
        %v1431 = vunpack.c.l.b16 %v407
        %v1432 = vunpack.c.h.b16 %v407
        %v1433 = vunpack.c.l.b16 %v408
        %v1434 = vunpack.c.h.b16 %v408
        %v1435 = vunpack.c.l.b16 %v409
        %v1436 = vunpack.c.h.b16 %v409
        %v1437 = vunpack.c.l.b16 %v410
        %v1438 = vunpack.c.h.b16 %v410
        %v1439 = vunpack.c.l.b16 %v411
        %v1440 = vunpack.c.h.b16 %v411
        %v1441 = vunpack.c.l.b16 %v412
        %v1442 = vunpack.c.h.b16 %v412
        %v1443 = vunpack.c.l.b16 %v413
        %v1444 = vunpack.c.h.b16 %v413
        %v1445 = vunpack.c.l.b16 %v414
        %v1446 = vunpack.c.h.b16 %v414
        %v1447 = vunpack.c.l.b16 %v415
        %v1448 = vunpack.c.h.b16 %v415
        %v1449 = vunpack.c.l.b16 %v416
        %v1450 = vunpack.c.h.b16 %v416
        %v1451 = vunpack.c.l.b16 %v417
        %v1452 = vunpack.c.h.b16 %v417
        %v1453 = vunpack.c.l.b16 %v418
        %v1454 = vunpack.c.h.b16 %v418
        %v1455 = vunpack.c.l.b16 %v419
        %v1456 = vunpack.c.h.b16 %v419
        %v1457 = vunpack.c.l.b16 %v420
        %v1458 = vunpack.c.h.b16 %v420
        %v1459 = vunpack.c.l.b16 %v421
        %v1460 = vunpack.c.h.b16 %v421
        %v1461 = vunpack.c.l.b16 %v422
        %v1462 = vunpack.c.h.b16 %v422
        %v1463 = vunpack.c.l.b16 %v423
        %v1464 = vunpack.c.h.b16 %v423
        %v1465 = vunpack.c.l.b16 %v424
        %v1466 = vunpack.c.h.b16 %v424
        %v1467 = vunpack.c.l.b16 %v425
        %v1468 = vunpack.c.h.b16 %v425
        %v1469 = vunpack.c.l.b16 %v426
        %v1470 = vunpack.c.h.b16 %v426
        %v1471 = vunpack.c.l.b16 %v427
        %v1472 = vunpack.c.h.b16 %v427
        %v1473 = vunpack.c.l.b16 %v428
        %v1474 = vunpack.c.h.b16 %v428
        %v1475 = vunpack.c.l.b16 %v429
        %v1476 = vunpack.c.h.b16 %v429
        %v1477 = vunpack.c.l.b16 %v430
        %v1478 = vunpack.c.h.b16 %v430
        %v1479 = vunpack.c.l.b16 %v431
        %v1480 = vunpack.c.h.b16 %v431
        %v1481 = vunpack.c.l.b16 %v432
        %v1482 = vunpack.c.h.b16 %v432
        %v1483 = vunpack.c.l.b16 %v433
        %v1484 = vunpack.c.h.b16 %v433
        %v1485 = vunpack.c.l.b16 %v434
        %v1486 = vunpack.c.h.b16 %v434
        %v1487 = vunpack.c.l.b16 %v435
        %v1488 = vunpack.c.h.b16 %v435
        %v1489 = vunpack.c.l.b16 %v436
        %v1490 = vunpack.c.h.b16 %v436
        %v1491 = vunpack.c.l.b16 %v437
        %v1492 = vunpack.c.h.b16 %v437
        %v1493 = vunpack.c.l.b16 %v438
        %v1494 = vunpack.c.h.b16 %v438
        %v1495 = vunpack.c.l.b16 %v439
        %v1496 = vunpack.c.h.b16 %v439
        %v1497 = vunpack.c.l.b16 %v440
        %v1498 = vunpack.c.h.b16 %v440
        %v1499 = vunpack.c.l.b16 %v441
        %v1500 = vunpack.c.h.b16 %v441
        %v1501 = vunpack.c.l.b16 %v442
        %v1502 = vunpack.c.h.b16 %v442
        %v1503 = vunpack.c.l.b16 %v443
        %v1504 = vunpack.c.h.b16 %v443
        %v1505 = vunpack.c.l.b16 %v444
        %v1506 = vunpack.c.h.b16 %v444
        %v1507 = vunpack.c.l.b16 %v445
        %v1508 = vunpack.c.h.b16 %v445
        %v1509 = vunpack.c.l.b16 %v446
        %v1510 = vunpack.c.h.b16 %v446
        %v1511 = vunpack.c.l.b16 %v447
        %v1512 = vunpack.c.h.b16 %v447
        %v1513 = vunpack.c.l.b16 %v448
        %v1514 = vunpack.c.h.b16 %v448
        %v1515 = vunpack.c.l.b16 %v449
        %v1516 = vunpack.c.h.b16 %v449
        %v1517 = vunpack.c.l.b16 %v450
        %v1518 = vunpack.c.h.b16 %v450
        %v1519 = vunpack.c.l.b16 %v451
        %v1520 = vunpack.c.h.b16 %v451
        %v1521 = vunpack.c.l.b16 %v452
        %v1522 = vunpack.c.h.b16 %v452
        %v1523 = vunpack.c.l.b16 %v453
        %v1524 = vunpack.c.h.b16 %v453
        %v1525 = vunpack.c.l.b16 %v454
        %v1526 = vunpack.c.h.b16 %v454
        %v1527 = vunpack.c.l.b16 %v455
        %v1528 = vunpack.c.h.b16 %v455
        %v1529 = vunpack.c.l.b16 %v456
        %v1530 = vunpack.c.h.b16 %v456
        %v1531 = vunpack.c.l.b16 %v457
        %v1532 = vunpack.c.h.b16 %v457
        %v1533 = vunpack.c.l.b16 %v458
        %v1534 = vunpack.c.h.b16 %v458
        %v1535 = vunpack.c.l.b16 %v459
        %v1536 = vunpack.c.h.b16 %v459
        %v1537 = vunpack.c.l.b16 %v460
        %v1538 = vunpack.c.h.b16 %v460
        %v1539 = vunpack.c.l.b16 %v461
        %v1540 = vunpack.c.h.b16 %v461
        %v1541 = vunpack.c.l.b16 %v462
        %v1542 = vunpack.c.h.b16 %v462
        %v1543 = vunpack.c.l.b16 %v463
        %v1544 = vunpack.c.h.b16 %v463
        %v1545 = vunpack.c.l.b16 %v464
        %v1546 = vunpack.c.h.b16 %v464
        %v1547 = vunpack.c.l.b16 %v465
        %v1548 = vunpack.c.h.b16 %v465
        %v1549 = vunpack.c.l.b16 %v466
        %v1550 = vunpack.c.h.b16 %v466
        %v1551 = vunpack.c.l.b16 %v467
        %v1552 = vunpack.c.h.b16 %v467
        %v1553 = vunpack.c.l.b16 %v468
        %v1554 = vunpack.c.h.b16 %v468
        %v1555 = vunpack.c.l.b16 %v469
        %v1556 = vunpack.c.h.b16 %v469
        %v1557 = vunpack.c.l.b16 %v470
        %v1558 = vunpack.c.h.b16 %v470
        %v1559 = vunpack.c.l.b16 %v471
        %v1560 = vunpack.c.h.b16 %v471
        %v1561 = vunpack.c.l.b16 %v472
        %v1562 = vunpack.c.h.b16 %v472
        %v1563 = vunpack.c.l.b16 %v473
        %v1564 = vunpack.c.h.b16 %v473
        %v1565 = vunpack.c.l.b16 %v474
        %v1566 = vunpack.c.h.b16 %v474
        %v1567 = vunpack.c.l.b16 %v475
        %v1568 = vunpack.c.h.b16 %v475
        %v1569 = vunpack.c.l.b16 %v476
        %v1570 = vunpack.c.h.b16 %v476
        %v1571 = vunpack.c.l.b16 %v477
        %v1572 = vunpack.c.h.b16 %v477
        %v1573 = vunpack.c.l.b16 %v478
        %v1574 = vunpack.c.h.b16 %v478
        %v1575 = vunpack.c.l.b16 %v479
        %v1576 = vunpack.c.h.b16 %v479
        %v1577 = vunpack.c.l.b16 %v480
        %v1578 = vunpack.c.h.b16 %v480
        %v1579 = vunpack.c.l.b16 %v481
        %v1580 = vunpack.c.h.b16 %v481
        %v1581 = vunpack.c.l.b16 %v482
        %v1582 = vunpack.c.h.b16 %v482
        %v1583 = vunpack.c.l.b16 %v483
        %v1584 = vunpack.c.h.b16 %v483
        %v1585 = vunpack.c.l.b16 %v484
        %v1586 = vunpack.c.h.b16 %v484
        %v1587 = vunpack.c.l.b16 %v485
        %v1588 = vunpack.c.h.b16 %v485
        %v1589 = vunpack.c.l.b16 %v486
        %v1590 = vunpack.c.h.b16 %v486
        %v1591 = vunpack.c.l.b16 %v487
        %v1592 = vunpack.c.h.b16 %v487
        %v1593 = vunpack.c.l.b16 %v488
        %v1594 = vunpack.c.h.b16 %v488
        %v1595 = vunpack.c.l.b16 %v489
        %v1596 = vunpack.c.h.b16 %v489
        %v1597 = vunpack.c.l.b16 %v490
        %v1598 = vunpack.c.h.b16 %v490
        %v1599 = vunpack.c.l.b16 %v491
        %v1600 = vunpack.c.h.b16 %v491
        %v1601 = vunpack.c.l.b16 %v492
        %v1602 = vunpack.c.h.b16 %v492
        %v1603 = vunpack.c.l.b16 %v493
        %v1604 = vunpack.c.h.b16 %v493
        %v1605 = vunpack.c.l.b16 %v494
        %v1606 = vunpack.c.h.b16 %v494
        %v1607 = vunpack.c.l.b16 %v495
        %v1608 = vunpack.c.h.b16 %v495
        %v1609 = vunpack.c.l.b16 %v496
        %v1610 = vunpack.c.h.b16 %v496
        %v1611 = vunpack.c.l.b16 %v497
        %v1612 = vunpack.c.h.b16 %v497
        %v1613 = vunpack.c.l.b16 %v498
        %v1614 = vunpack.c.h.b16 %v498
        %v1615 = vunpack.c.l.b16 %v499
        %v1616 = vunpack.c.h.b16 %v499
        %v1617 = vunpack.c.l.b16 %v500
        %v1618 = vunpack.c.h.b16 %v500
        %v1619 = vunpack.c.l.b16 %v501
        %v1620 = vunpack.c.h.b16 %v501
        %v1621 = vunpack.c.l.b16 %v502
        %v1622 = vunpack.c.h.b16 %v502
        %v1623 = vunpack.c.l.b16 %v503
        %v1624 = vunpack.c.h.b16 %v503
        %v1625 = vunpack.c.l.b16 %v504
        %v1626 = vunpack.c.h.b16 %v504
        %v1627 = vunpack.c.l.b16 %v505
        %v1628 = vunpack.c.h.b16 %v505
        %v1629 = vunpack.c.l.b16 %v506
        %v1630 = vunpack.c.h.b16 %v506
        %v1631 = vunpack.c.l.b16 %v507
        %v1632 = vunpack.c.h.b16 %v507
        %v1633 = vunpack.c.l.b16 %v508
        %v1634 = vunpack.c.h.b16 %v508
        %v1635 = vunpack.c.l.b16 %v509
        %v1636 = vunpack.c.h.b16 %v509
        %v1637 = vunpack.c.l.b16 %v510
        %v1638 = vunpack.c.h.b16 %v510
        %v1639 = vunpack.c.l.b16 %v511
        %v1640 = vunpack.c.h.b16 %v511
        %v1641 = vunpack.c.l.b16 %v512
        %v1642 = vunpack.c.h.b16 %v512
        %v1643 = vunpack.c.l.b16 %v513
        %v1644 = vunpack.c.h.b16 %v513
        %v1645 = vunpack.c.l.b16 %v514
        %v1646 = vunpack.c.h.b16 %v514
        %v1647 = vunpack.c.l.b16 %v515
        %v1648 = vunpack.c.h.b16 %v515
        %v1649 = vunpack.c.l.b16 %v516
        %v1650 = vunpack.c.h.b16 %v516
        %v1651 = vunpack.c.l.b16 %v517
        %v1652 = vunpack.c.h.b16 %v517
        %v1653 = vunpack.c.l.b16 %v518
        %v1654 = vunpack.c.h.b16 %v518
        %v1655 = vunpack.c.l.b16 %v519
        %v1656 = vunpack.c.h.b16 %v519
        %v1657 = vunpack.c.l.b16 %v520
        %v1658 = vunpack.c.h.b16 %v520
        %v1659 = vunpack.c.l.b16 %v521
        %v1660 = vunpack.c.h.b16 %v521
        %v1661 = vunpack.c.l.b16 %v522
        %v1662 = vunpack.c.h.b16 %v522
        %v1663 = vunpack.c.l.b16 %v523
        %v1664 = vunpack.c.h.b16 %v523
        %v1665 = vunpack.c.l.b16 %v524
        %v1666 = vunpack.c.h.b16 %v524
        %v1667 = vunpack.c.l.b16 %v525
        %v1668 = vunpack.c.h.b16 %v525
        %v1669 = vunpack.c.l.b16 %v526
        %v1670 = vunpack.c.h.b16 %v526
        %v1671 = vunpack.c.l.b16 %v527
        %v1672 = vunpack.c.h.b16 %v527
        %v1673 = vunpack.c.l.b16 %v528
        %v1674 = vunpack.c.h.b16 %v528
        %v1675 = vunpack.c.l.b16 %v529
        %v1676 = vunpack.c.h.b16 %v529
        %v1677 = vunpack.c.l.b16 %v530
        %v1678 = vunpack.c.h.b16 %v530
        %v1679 = vunpack.c.l.b16 %v531
        %v1680 = vunpack.c.h.b16 %v531
        %v1681 = vunpack.c.l.b16 %v532
        %v1682 = vunpack.c.h.b16 %v532
        %v1683 = vunpack.c.l.b16 %v533
        %v1684 = vunpack.c.h.b16 %v533
        %v1685 = vunpack.c.l.b16 %v534
        %v1686 = vunpack.c.h.b16 %v534
        %v1687 = vunpack.c.l.b16 %v535
        %v1688 = vunpack.c.h.b16 %v535
        %v1689 = vunpack.c.l.b16 %v536
        %v1690 = vunpack.c.h.b16 %v536
        %v1691 = vunpack.c.l.b16 %v537
        %v1692 = vunpack.c.h.b16 %v537
        %v1693 = vunpack.c.l.b16 %v538
        %v1694 = vunpack.c.h.b16 %v538
        %v1695 = vunpack.c.l.b16 %v539
        %v1696 = vunpack.c.h.b16 %v539
        %v1697 = vunpack.c.l.b16 %v540
        %v1698 = vunpack.c.h.b16 %v540
        %v1699 = vunpack.c.l.b16 %v541
        %v1700 = vunpack.c.h.b16 %v541
        %v1701 = vunpack.c.l.b16 %v542
        %v1702 = vunpack.c.h.b16 %v542
        %v1703 = vunpack.c.l.b16 %v543
        %v1704 = vunpack.c.h.b16 %v543
        %v1705 = vunpack.c.l.b16 %v544
        %v1706 = vunpack.c.h.b16 %v544
        %v1707 = vunpack.c.l.b16 %v545
        %v1708 = vunpack.c.h.b16 %v545
        %v1709 = vunpack.c.l.b16 %v546
        %v1710 = vunpack.c.h.b16 %v546
        %v1711 = vunpack.c.l.b16 %v547
        %v1712 = vunpack.c.h.b16 %v547
        %v1713 = vunpack.c.l.b16 %v548
        %v1714 = vunpack.c.h.b16 %v548
        %v1715 = vunpack.c.l.b16 %v549
        %v1716 = vunpack.c.h.b16 %v549
        %v1717 = vunpack.c.l.b16 %v550
        %v1718 = vunpack.c.h.b16 %v550
        %v1719 = vunpack.c.l.b16 %v551
        %v1720 = vunpack.c.h.b16 %v551
        %v1721 = vunpack.c.l.b16 %v552
        %v1722 = vunpack.c.h.b16 %v552
        %v1723 = vunpack.c.l.b16 %v553
        %v1724 = vunpack.c.h.b16 %v553
        %v1725 = vunpack.c.l.b16 %v554
        %v1726 = vunpack.c.h.b16 %v554
        %v1727 = vunpack.c.l.b16 %v555
        %v1728 = vunpack.c.h.b16 %v555
        %v1729 = vunpack.c.l.b16 %v556
        %v1730 = vunpack.c.h.b16 %v556
        %v1731 = vunpack.c.l.b16 %v557
        %v1732 = vunpack.c.h.b16 %v557
        %v1733 = vunpack.c.l.b16 %v558
        %v1734 = vunpack.c.h.b16 %v558
        %v1735 = vunpack.c.l.b16 %v559
        %v1736 = vunpack.c.h.b16 %v559
        %v1737 = vunpack.c.l.b16 %v560
        %v1738 = vunpack.c.h.b16 %v560
        %v1739 = vunpack.c.l.b16 %v561
        %v1740 = vunpack.c.h.b16 %v561
        %v1741 = vunpack.c.l.b16 %v562
        %v1742 = vunpack.c.h.b16 %v562
        %v1743 = vunpack.c.l.b16 %v563
        %v1744 = vunpack.c.h.b16 %v563
        %v1745 = vunpack.c.l.b16 %v564
        %v1746 = vunpack.c.h.b16 %v564
        %v1747 = vunpack.c.l.b16 %v565
        %v1748 = vunpack.c.h.b16 %v565
        %v1749 = vunpack.c.l.b16 %v566
        %v1750 = vunpack.c.h.b16 %v566
        %v1751 = vpack.c.b16 %v1121, %v1111
        %v1752 = vpack.c.b16 %v1122, %v1112
        %v1753 = vpack.c.b16 %v1123, %v1113
        %v1754 = vpack.c.b16 %v1124, %v1114
        %v1755 = vpack.c.b16 %v1125, %v1115
        %v1756 = vpack.c.b16 %v1126, %v1116
        %v1757 = vpack.c.b16 %v1127, %v1117
        %v1758 = vpack.c.b16 %v1128, %v1118
        %v1759 = vpack.c.b16 %v1129, %v1119
        %v1760 = vpack.c.b16 %v1130, %v1120
        %v1761 = vpack.c.b16 %v1141, %v1131
        %v1762 = vpack.c.b16 %v1142, %v1132
        %v1763 = vpack.c.b16 %v1143, %v1133
        %v1764 = vpack.c.b16 %v1144, %v1134
        %v1765 = vpack.c.b16 %v1145, %v1135
        %v1766 = vpack.c.b16 %v1146, %v1136
        %v1767 = vpack.c.b16 %v1147, %v1137
        %v1768 = vpack.c.b16 %v1148, %v1138
        %v1769 = vpack.c.b16 %v1149, %v1139
        %v1770 = vpack.c.b16 %v1150, %v1140
        %v1771 = vpack.c.b16 %v1161, %v1151
        %v1772 = vpack.c.b16 %v1162, %v1152
        %v1773 = vpack.c.b16 %v1163, %v1153
        %v1774 = vpack.c.b16 %v1164, %v1154
        %v1775 = vpack.c.b16 %v1165, %v1155
        %v1776 = vpack.c.b16 %v1166, %v1156
        %v1777 = vpack.c.b16 %v1167, %v1157
        %v1778 = vpack.c.b16 %v1168, %v1158
        %v1779 = vpack.c.b16 %v1169, %v1159
        %v1780 = vpack.c.b16 %v1170, %v1160
        %v1781 = vpack.c.b16 %v1181, %v1171
        %v1782 = vpack.c.b16 %v1182, %v1172
        %v1783 = vpack.c.b16 %v1183, %v1173
        %v1784 = vpack.c.b16 %v1184, %v1174
        %v1785 = vpack.c.b16 %v1185, %v1175
        %v1786 = vpack.c.b16 %v1186, %v1176
        %v1787 = vpack.c.b16 %v1187, %v1177
        %v1788 = vpack.c.b16 %v1188, %v1178
        %v1789 = vpack.c.b16 %v1189, %v1179
        %v1790 = vpack.c.b16 %v1190, %v1180
        %v1791 = vpack.c.b16 %v1201, %v1191
        %v1792 = vpack.c.b16 %v1202, %v1192
        %v1793 = vpack.c.b16 %v1203, %v1193
        %v1794 = vpack.c.b16 %v1204, %v1194
        %v1795 = vpack.c.b16 %v1205, %v1195
        %v1796 = vpack.c.b16 %v1206, %v1196
        %v1797 = vpack.c.b16 %v1207, %v1197
        %v1798 = vpack.c.b16 %v1208, %v1198
        %v1799 = vpack.c.b16 %v1209, %v1199
        %v1800 = vpack.c.b16 %v1210, %v1200
        %v1801 = vpack.c.b16 %v1221, %v1211
        %v1802 = vpack.c.b16 %v1222, %v1212
        %v1803 = vpack.c.b16 %v1223, %v1213
        %v1804 = vpack.c.b16 %v1224, %v1214
        %v1805 = vpack.c.b16 %v1225, %v1215
        %v1806 = vpack.c.b16 %v1226, %v1216
        %v1807 = vpack.c.b16 %v1227, %v1217
        %v1808 = vpack.c.b16 %v1228, %v1218
        %v1809 = vpack.c.b16 %v1229, %v1219
        %v1810 = vpack.c.b16 %v1230, %v1220
        %v1811 = vpack.c.b16 %v1241, %v1231
        %v1812 = vpack.c.b16 %v1242, %v1232
        %v1813 = vpack.c.b16 %v1243, %v1233
        %v1814 = vpack.c.b16 %v1244, %v1234
        %v1815 = vpack.c.b16 %v1245, %v1235
        %v1816 = vpack.c.b16 %v1246, %v1236
        %v1817 = vpack.c.b16 %v1247, %v1237
        %v1818 = vpack.c.b16 %v1248, %v1238
        %v1819 = vpack.c.b16 %v1249, %v1239
        %v1820 = vpack.c.b16 %v1250, %v1240
        %v1821 = vpack.c.b16 %v1261, %v1251
        %v1822 = vpack.c.b16 %v1262, %v1252
        %v1823 = vpack.c.b16 %v1263, %v1253
        %v1824 = vpack.c.b16 %v1264, %v1254
        %v1825 = vpack.c.b16 %v1265, %v1255
        %v1826 = vpack.c.b16 %v1266, %v1256
        %v1827 = vpack.c.b16 %v1267, %v1257
        %v1828 = vpack.c.b16 %v1268, %v1258
        %v1829 = vpack.c.b16 %v1269, %v1259
        %v1830 = vpack.c.b16 %v1270, %v1260
        %v1831 = vpack.c.b16 %v1281, %v1271
        %v1832 = vpack.c.b16 %v1282, %v1272
        %v1833 = vpack.c.b16 %v1283, %v1273
        %v1834 = vpack.c.b16 %v1284, %v1274
        %v1835 = vpack.c.b16 %v1285, %v1275
        %v1836 = vpack.c.b16 %v1286, %v1276
        %v1837 = vpack.c.b16 %v1287, %v1277
        %v1838 = vpack.c.b16 %v1288, %v1278
        %v1839 = vpack.c.b16 %v1289, %v1279
        %v1840 = vpack.c.b16 %v1290, %v1280
        %v1841 = vpack.c.b16 %v1301, %v1291
        %v1842 = vpack.c.b16 %v1302, %v1292
        %v1843 = vpack.c.b16 %v1303, %v1293
        %v1844 = vpack.c.b16 %v1304, %v1294
        %v1845 = vpack.c.b16 %v1305, %v1295
        %v1846 = vpack.c.b16 %v1306, %v1296
        %v1847 = vpack.c.b16 %v1307, %v1297
        %v1848 = vpack.c.b16 %v1308, %v1298
        %v1849 = vpack.c.b16 %v1309, %v1299
        %v1850 = vpack.c.b16 %v1310, %v1300
        %v1851 = vpack.c.b16 %v1321, %v1311
        %v1852 = vpack.c.b16 %v1322, %v1312
        %v1853 = vpack.c.b16 %v1323, %v1313
        %v1854 = vpack.c.b16 %v1324, %v1314
        %v1855 = vpack.c.b16 %v1325, %v1315
        %v1856 = vpack.c.b16 %v1326, %v1316
        %v1857 = vpack.c.b16 %v1327, %v1317
        %v1858 = vpack.c.b16 %v1328, %v1318
        %v1859 = vpack.c.b16 %v1329, %v1319
        %v1860 = vpack.c.b16 %v1330, %v1320
        %v1861 = vpack.c.b16 %v1341, %v1331
        %v1862 = vpack.c.b16 %v1342, %v1332
        %v1863 = vpack.c.b16 %v1343, %v1333
        %v1864 = vpack.c.b16 %v1344, %v1334
        %v1865 = vpack.c.b16 %v1345, %v1335
        %v1866 = vpack.c.b16 %v1346, %v1336
        %v1867 = vpack.c.b16 %v1347, %v1337
        %v1868 = vpack.c.b16 %v1348, %v1338
        %v1869 = vpack.c.b16 %v1349, %v1339
        %v1870 = vpack.c.b16 %v1350, %v1340
        %v1871 = vpack.c.b16 %v1361, %v1351
        %v1872 = vpack.c.b16 %v1362, %v1352
        %v1873 = vpack.c.b16 %v1363, %v1353
        %v1874 = vpack.c.b16 %v1364, %v1354
        %v1875 = vpack.c.b16 %v1365, %v1355
        %v1876 = vpack.c.b16 %v1366, %v1356
        %v1877 = vpack.c.b16 %v1367, %v1357
        %v1878 = vpack.c.b16 %v1368, %v1358
        %v1879 = vpack.c.b16 %v1369, %v1359
        %v1880 = vpack.c.b16 %v1370, %v1360
        %v1881 = vpack.c.b16 %v1381, %v1371
        %v1882 = vpack.c.b16 %v1382, %v1372
        %v1883 = vpack.c.b16 %v1383, %v1373
        %v1884 = vpack.c.b16 %v1384, %v1374
        %v1885 = vpack.c.b16 %v1385, %v1375
        %v1886 = vpack.c.b16 %v1386, %v1376
        %v1887 = vpack.c.b16 %v1387, %v1377
        %v1888 = vpack.c.b16 %v1388, %v1378
        %v1889 = vpack.c.b16 %v1389, %v1379
        %v1890 = vpack.c.b16 %v1390, %v1380
        %v1891 = vpack.c.b16 %v1401, %v1391
        %v1892 = vpack.c.b16 %v1402, %v1392
        %v1893 = vpack.c.b16 %v1403, %v1393
        %v1894 = vpack.c.b16 %v1404, %v1394
        %v1895 = vpack.c.b16 %v1405, %v1395
        %v1896 = vpack.c.b16 %v1406, %v1396
        %v1897 = vpack.c.b16 %v1407, %v1397
        %v1898 = vpack.c.b16 %v1408, %v1398
        %v1899 = vpack.c.b16 %v1409, %v1399
        %v1900 = vpack.c.b16 %v1410, %v1400
        %v1901 = vpack.c.b16 %v1421, %v1411
        %v1902 = vpack.c.b16 %v1422, %v1412
        %v1903 = vpack.c.b16 %v1423, %v1413
        %v1904 = vpack.c.b16 %v1424, %v1414
        %v1905 = vpack.c.b16 %v1425, %v1415
        %v1906 = vpack.c.b16 %v1426, %v1416
        %v1907 = vpack.c.b16 %v1427, %v1417
        %v1908 = vpack.c.b16 %v1428, %v1418
        %v1909 = vpack.c.b16 %v1429, %v1419
        %v1910 = vpack.c.b16 %v1430, %v1420
        %v1911 = vpack.c.b16 %v1441, %v1431
        %v1912 = vpack.c.b16 %v1442, %v1432
        %v1913 = vpack.c.b16 %v1443, %v1433
        %v1914 = vpack.c.b16 %v1444, %v1434
        %v1915 = vpack.c.b16 %v1445, %v1435
        %v1916 = vpack.c.b16 %v1446, %v1436
        %v1917 = vpack.c.b16 %v1447, %v1437
        %v1918 = vpack.c.b16 %v1448, %v1438
        %v1919 = vpack.c.b16 %v1449, %v1439
        %v1920 = vpack.c.b16 %v1450, %v1440
        %v1921 = vpack.c.b16 %v1461, %v1451
        %v1922 = vpack.c.b16 %v1462, %v1452
        %v1923 = vpack.c.b16 %v1463, %v1453
        %v1924 = vpack.c.b16 %v1464, %v1454
        %v1925 = vpack.c.b16 %v1465, %v1455
        %v1926 = vpack.c.b16 %v1466, %v1456
        %v1927 = vpack.c.b16 %v1467, %v1457
        %v1928 = vpack.c.b16 %v1468, %v1458
        %v1929 = vpack.c.b16 %v1469, %v1459
        %v1930 = vpack.c.b16 %v1470, %v1460
        %v1931 = vpack.c.b16 %v1481, %v1471
        %v1932 = vpack.c.b16 %v1482, %v1472
        %v1933 = vpack.c.b16 %v1483, %v1473
        %v1934 = vpack.c.b16 %v1484, %v1474
        %v1935 = vpack.c.b16 %v1485, %v1475
        %v1936 = vpack.c.b16 %v1486, %v1476
        %v1937 = vpack.c.b16 %v1487, %v1477
        %v1938 = vpack.c.b16 %v1488, %v1478
        %v1939 = vpack.c.b16 %v1489, %v1479
        %v1940 = vpack.c.b16 %v1490, %v1480
        %v1941 = vpack.c.b16 %v1501, %v1491
        %v1942 = vpack.c.b16 %v1502, %v1492
        %v1943 = vpack.c.b16 %v1503, %v1493
        %v1944 = vpack.c.b16 %v1504, %v1494
        %v1945 = vpack.c.b16 %v1505, %v1495
        %v1946 = vpack.c.b16 %v1506, %v1496
        %v1947 = vpack.c.b16 %v1507, %v1497
        %v1948 = vpack.c.b16 %v1508, %v1498
        %v1949 = vpack.c.b16 %v1509, %v1499
        %v1950 = vpack.c.b16 %v1510, %v1500
        %v1951 = vpack.c.b16 %v1521, %v1511
        %v1952 = vpack.c.b16 %v1522, %v1512
        %v1953 = vpack.c.b16 %v1523, %v1513
        %v1954 = vpack.c.b16 %v1524, %v1514
        %v1955 = vpack.c.b16 %v1525, %v1515
        %v1956 = vpack.c.b16 %v1526, %v1516
        %v1957 = vpack.c.b16 %v1527, %v1517
        %v1958 = vpack.c.b16 %v1528, %v1518
        %v1959 = vpack.c.b16 %v1529, %v1519
        %v1960 = vpack.c.b16 %v1530, %v1520
        %v1961 = vpack.c.b16 %v1541, %v1531
        %v1962 = vpack.c.b16 %v1542, %v1532
        %v1963 = vpack.c.b16 %v1543, %v1533
        %v1964 = vpack.c.b16 %v1544, %v1534
        %v1965 = vpack.c.b16 %v1545, %v1535
        %v1966 = vpack.c.b16 %v1546, %v1536
        %v1967 = vpack.c.b16 %v1547, %v1537
        %v1968 = vpack.c.b16 %v1548, %v1538
        %v1969 = vpack.c.b16 %v1549, %v1539
        %v1970 = vpack.c.b16 %v1550, %v1540
        %v1971 = vpack.c.b16 %v1561, %v1551
        %v1972 = vpack.c.b16 %v1562, %v1552
        %v1973 = vpack.c.b16 %v1563, %v1553
        %v1974 = vpack.c.b16 %v1564, %v1554
        %v1975 = vpack.c.b16 %v1565, %v1555
        %v1976 = vpack.c.b16 %v1566, %v1556
        %v1977 = vpack.c.b16 %v1567, %v1557
        %v1978 = vpack.c.b16 %v1568, %v1558
        %v1979 = vpack.c.b16 %v1569, %v1559
        %v1980 = vpack.c.b16 %v1570, %v1560
        %v1981 = vpack.c.b16 %v1581, %v1571
        %v1982 = vpack.c.b16 %v1582, %v1572
        %v1983 = vpack.c.b16 %v1583, %v1573
        %v1984 = vpack.c.b16 %v1584, %v1574
        %v1985 = vpack.c.b16 %v1585, %v1575
        %v1986 = vpack.c.b16 %v1586, %v1576
        %v1987 = vpack.c.b16 %v1587, %v1577
        %v1988 = vpack.c.b16 %v1588, %v1578
        %v1989 = vpack.c.b16 %v1589, %v1579
        %v1990 = vpack.c.b16 %v1590, %v1580
        %v1991 = vpack.c.b16 %v1601, %v1591
        %v1992 = vpack.c.b16 %v1602, %v1592
        %v1993 = vpack.c.b16 %v1603, %v1593
        %v1994 = vpack.c.b16 %v1604, %v1594
        %v1995 = vpack.c.b16 %v1605, %v1595
        %v1996 = vpack.c.b16 %v1606, %v1596
        %v1997 = vpack.c.b16 %v1607, %v1597
        %v1998 = vpack.c.b16 %v1608, %v1598
        %v1999 = vpack.c.b16 %v1609, %v1599
        %v2000 = vpack.c.b16 %v1610, %v1600
        %v2001 = vpack.c.b16 %v1621, %v1611
        %v2002 = vpack.c.b16 %v1622, %v1612
        %v2003 = vpack.c.b16 %v1623, %v1613
        %v2004 = vpack.c.b16 %v1624, %v1614
        %v2005 = vpack.c.b16 %v1625, %v1615
        %v2006 = vpack.c.b16 %v1626, %v1616
        %v2007 = vpack.c.b16 %v1627, %v1617
        %v2008 = vpack.c.b16 %v1628, %v1618
        %v2009 = vpack.c.b16 %v1629, %v1619
        %v2010 = vpack.c.b16 %v1630, %v1620
        %v2011 = vpack.c.b16 %v1641, %v1631
        %v2012 = vpack.c.b16 %v1642, %v1632
        %v2013 = vpack.c.b16 %v1643, %v1633
        %v2014 = vpack.c.b16 %v1644, %v1634
        %v2015 = vpack.c.b16 %v1645, %v1635
        %v2016 = vpack.c.b16 %v1646, %v1636
        %v2017 = vpack.c.b16 %v1647, %v1637
        %v2018 = vpack.c.b16 %v1648, %v1638
        %v2019 = vpack.c.b16 %v1649, %v1639
        %v2020 = vpack.c.b16 %v1650, %v1640
        %v2021 = vpack.c.b16 %v1661, %v1651
        %v2022 = vpack.c.b16 %v1662, %v1652
        %v2023 = vpack.c.b16 %v1663, %v1653
        %v2024 = vpack.c.b16 %v1664, %v1654
        %v2025 = vpack.c.b16 %v1665, %v1655
        %v2026 = vpack.c.b16 %v1666, %v1656
        %v2027 = vpack.c.b16 %v1667, %v1657
        %v2028 = vpack.c.b16 %v1668, %v1658
        %v2029 = vpack.c.b16 %v1669, %v1659
        %v2030 = vpack.c.b16 %v1670, %v1660
        %v2031 = vpack.c.b16 %v1681, %v1671
        %v2032 = vpack.c.b16 %v1682, %v1672
        %v2033 = vpack.c.b16 %v1683, %v1673
        %v2034 = vpack.c.b16 %v1684, %v1674
        %v2035 = vpack.c.b16 %v1685, %v1675
        %v2036 = vpack.c.b16 %v1686, %v1676
        %v2037 = vpack.c.b16 %v1687, %v1677
        %v2038 = vpack.c.b16 %v1688, %v1678
        %v2039 = vpack.c.b16 %v1689, %v1679
        %v2040 = vpack.c.b16 %v1690, %v1680
        %v2041 = vpack.c.b16 %v1701, %v1691
        %v2042 = vpack.c.b16 %v1702, %v1692
        %v2043 = vpack.c.b16 %v1703, %v1693
        %v2044 = vpack.c.b16 %v1704, %v1694
        %v2045 = vpack.c.b16 %v1705, %v1695
        %v2046 = vpack.c.b16 %v1706, %v1696
        %v2047 = vpack.c.b16 %v1707, %v1697
        %v2048 = vpack.c.b16 %v1708, %v1698
        %v2049 = vpack.c.b16 %v1709, %v1699
        %v2050 = vpack.c.b16 %v1710, %v1700
        %v2051 = vpack.c.b16 %v1721, %v1711
        %v2052 = vpack.c.b16 %v1722, %v1712
        %v2053 = vpack.c.b16 %v1723, %v1713
        %v2054 = vpack.c.b16 %v1724, %v1714
        %v2055 = vpack.c.b16 %v1725, %v1715
        %v2056 = vpack.c.b16 %v1726, %v1716
        %v2057 = vpack.c.b16 %v1727, %v1717
        %v2058 = vpack.c.b16 %v1728, %v1718
        %v2059 = vpack.c.b16 %v1729, %v1719
        %v2060 = vpack.c.b16 %v1730, %v1720
        %v2061 = vpack.c.b16 %v1741, %v1731
        %v2062 = vpack.c.b16 %v1742, %v1732
        %v2063 = vpack.c.b16 %v1743, %v1733
        %v2064 = vpack.c.b16 %v1744, %v1734
        %v2065 = vpack.c.b16 %v1745, %v1735
        %v2066 = vpack.c.b16 %v1746, %v1736
        %v2067 = vpack.c.b16 %v1747, %v1737
        %v2068 = vpack.c.b16 %v1748, %v1738
        %v2069 = vpack.c.b16 %v1749, %v1739
        %v2070 = vpack.c.b16 %v1750, %v1740
        %v2551 = vunpack.c.l.b16 %v567
        %v2552 = vunpack.c.l.b16 %v568
        %v2553 = vunpack.c.l.b16 %v569
        %v2554 = vunpack.c.l.b16 %v570
        %v2555 = vunpack.c.l.b16 %v571
        %v2556 = vunpack.c.l.b16 %v572
        %v2557 = vunpack.c.l.b16 %v573
        %v2558 = vunpack.c.l.b16 %v574
        %v2559 = vunpack.c.l.b16 %v575
        %v2560 = vunpack.c.l.b16 %v576
        %v2561 = vunpack.c.l.b16 %v577
        %v2562 = vunpack.c.l.b16 %v578
        %v2563 = vunpack.c.l.b16 %v579
        %v2564 = vunpack.c.l.b16 %v580
        %v2565 = vunpack.c.l.b16 %v581
        %v2566 = vunpack.c.l.b16 %v582
        %v2567 = vunpack.c.l.b16 %v583
        %v2568 = vunpack.c.l.b16 %v584
        %v2569 = vunpack.c.l.b16 %v585
        %v2570 = vunpack.c.l.b16 %v586
        %v2571 = vunpack.c.l.b16 %v587
        %v2572 = vunpack.c.l.b16 %v588
        %v2573 = vunpack.c.l.b16 %v589
        %v2574 = vunpack.c.l.b16 %v590
        %v2575 = vunpack.c.l.b16 %v591
        %v2576 = vunpack.c.l.b16 %v592
        %v2577 = vunpack.c.l.b16 %v593
        %v2578 = vunpack.c.l.b16 %v594
        %v2579 = vunpack.c.l.b16 %v595
        %v2580 = vunpack.c.l.b16 %v596
        %v2581 = vunpack.c.l.b16 %v597
        %v2582 = vunpack.c.l.b16 %v598
        %v2583 = vunpack.c.l.b16 %v599
        %v2584 = vunpack.c.l.b16 %v600
        %v2585 = vunpack.c.l.b16 %v601
        %v2586 = vunpack.c.l.b16 %v602
        %v2587 = vunpack.c.l.b16 %v603
        %v2588 = vunpack.c.l.b16 %v604
        %v2589 = vunpack.c.l.b16 %v605
        %v2590 = vunpack.c.l.b16 %v606
        %v2591 = vunpack.c.l.b16 %v607
        %v2592 = vunpack.c.l.b16 %v608
        %v2593 = vunpack.c.l.b16 %v609
        %v2594 = vunpack.c.l.b16 %v610
        %v2595 = vunpack.c.l.b16 %v611
        %v2596 = vunpack.c.l.b16 %v612
        %v2597 = vunpack.c.l.b16 %v613
        %v2598 = vunpack.c.l.b16 %v614
        %v2599 = vunpack.c.l.b16 %v615
        %v2600 = vunpack.c.l.b16 %v616
        %v2601 = vunpack.c.l.b16 %v617
        %v2602 = vunpack.c.l.b16 %v618
        %v2603 = vunpack.c.l.b16 %v619
        %v2604 = vunpack.c.l.b16 %v620
        %v2605 = vunpack.c.l.b16 %v621
        %v2606 = vunpack.c.l.b16 %v622
        %v2607 = vunpack.c.l.b16 %v623
        %v2608 = vunpack.c.l.b16 %v624
        %v2609 = vunpack.c.l.b16 %v625
        %v2610 = vunpack.c.l.b16 %v626
        %v2611 = vunpack.c.l.b16 %v627
        %v2612 = vunpack.c.l.b16 %v628
        %v2613 = vunpack.c.l.b16 %v629
        %v2614 = vunpack.c.l.b16 %v630
        %v2615 = vunpack.c.l.b16 %v631
        %v2616 = vunpack.c.l.b16 %v632
        %v2617 = vunpack.c.l.b16 %v633
        %v2618 = vunpack.c.l.b16 %v634
        %v2619 = vunpack.c.l.b16 %v635
        %v2620 = vunpack.c.l.b16 %v636
        %v2621 = vunpack.c.l.b16 %v637
        %v2622 = vunpack.c.l.b16 %v638
        %v2623 = vunpack.c.l.b16 %v639
        %v2624 = vunpack.c.l.b16 %v640
        %v2625 = vunpack.c.l.b16 %v641
        %v2626 = vunpack.c.l.b16 %v642
        %v2627 = vunpack.c.l.b16 %v643
        %v2628 = vunpack.c.l.b16 %v644
        %v2629 = vunpack.c.l.b16 %v645
        %v2630 = vunpack.c.l.b16 %v646
        %v2631 = vunpack.c.l.b16 %v647
        %v2632 = vunpack.c.l.b16 %v648
        %v2633 = vunpack.c.l.b16 %v649
        %v2634 = vunpack.c.l.b16 %v650
        %v2635 = vunpack.c.l.b16 %v651
        %v2636 = vunpack.c.l.b16 %v652
        %v2637 = vunpack.c.l.b16 %v653
        %v2638 = vunpack.c.l.b16 %v654
        %v2639 = vunpack.c.l.b16 %v655
        %v2640 = vunpack.c.l.b16 %v656
        %v2641 = vunpack.c.l.b16 %v657
        %v2642 = vunpack.c.l.b16 %v658
        %v2643 = vunpack.c.l.b16 %v659
        %v2644 = vunpack.c.l.b16 %v660
        %v2645 = vunpack.c.l.b16 %v661
        %v2646 = vunpack.c.l.b16 %v662
        %v2647 = vunpack.c.l.b16 %v663
        %v2648 = vunpack.c.l.b16 %v664
        %v2649 = vunpack.c.l.b16 %v665
        %v2650 = vunpack.c.l.b16 %v666
        %v2651 = vunpack.c.l.b16 %v667
        %v2652 = vunpack.c.l.b16 %v668
        %v2653 = vunpack.c.l.b16 %v669
        %v2654 = vunpack.c.l.b16 %v670
        %v2655 = vunpack.c.l.b16 %v671
        %v2656 = vunpack.c.l.b16 %v672
        %v2657 = vunpack.c.l.b16 %v673
        %v2658 = vunpack.c.l.b16 %v674
        %v2659 = vunpack.c.l.b16 %v675
        %v2660 = vunpack.c.l.b16 %v676
        %v2661 = vunpack.c.l.b16 %v677
        %v2662 = vunpack.c.l.b16 %v678
        %v2663 = vunpack.c.l.b16 %v679
        %v2664 = vunpack.c.l.b16 %v680
        %v2665 = vunpack.c.l.b16 %v681
        %v2666 = vunpack.c.l.b16 %v682
        %v2667 = vunpack.c.l.b16 %v683
        %v2668 = vunpack.c.l.b16 %v684
        %v2669 = vunpack.c.l.b16 %v685
        %v2670 = vunpack.c.l.b16 %v686
        %v2671 = vunpack.c.l.b16 %v687
        %v2672 = vunpack.c.l.b16 %v688
        %v2673 = vunpack.c.l.b16 %v689
        %v2674 = vunpack.c.l.b16 %v690
        %v2675 = vunpack.c.l.b16 %v691
        %v2676 = vunpack.c.l.b16 %v692
        %v2677 = vunpack.c.l.b16 %v693
        %v2678 = vunpack.c.l.b16 %v694
        %v2679 = vunpack.c.l.b16 %v695
        %v2680 = vunpack.c.l.b16 %v696
        %v2681 = vunpack.c.l.b16 %v697
        %v2682 = vunpack.c.l.b16 %v698
        %v2683 = vunpack.c.l.b16 %v699
        %v2684 = vunpack.c.l.b16 %v700
        %v2685 = vunpack.c.l.b16 %v701
        %v2686 = vunpack.c.l.b16 %v702
        %v2687 = vunpack.c.l.b16 %v703
        %v2688 = vunpack.c.l.b16 %v704
        %v2689 = vunpack.c.l.b16 %v705
        %v2690 = vunpack.c.l.b16 %v706
        %v2691 = vunpack.c.l.b16 %v707
        %v2692 = vunpack.c.l.b16 %v708
        %v2693 = vunpack.c.l.b16 %v709
        %v2694 = vunpack.c.l.b16 %v710
        %v2695 = vunpack.c.l.b16 %v711
        %v2696 = vunpack.c.l.b16 %v712
        %v2697 = vunpack.c.l.b16 %v713
        %v2698 = vunpack.c.l.b16 %v714
        %v2699 = vunpack.c.l.b16 %v715
        %v2700 = vunpack.c.l.b16 %v716
        %v2701 = vunpack.c.l.b16 %v717
        %v2702 = vunpack.c.l.b16 %v718
        %v2703 = vunpack.c.l.b16 %v719
        %v2704 = vunpack.c.l.b16 %v720
        %v2705 = vunpack.c.l.b16 %v721
        %v2706 = vunpack.c.l.b16 %v722
        %v2707 = vunpack.c.l.b16 %v723
        %v2708 = vunpack.c.l.b16 %v724
        %v2709 = vunpack.c.l.b16 %v725
        %v2710 = vunpack.c.l.b16 %v726
        %v2711 = vpack.c.b16 %v2552, %v2551
        %v2712 = vpack.c.b16 %v2554, %v2553
        %v2713 = vpack.c.b16 %v2556, %v2555
        %v2714 = vpack.c.b16 %v2558, %v2557
        %v2715 = vpack.c.b16 %v2560, %v2559
        %v2716 = vpack.c.b16 %v2562, %v2561
        %v2717 = vpack.c.b16 %v2564, %v2563
        %v2718 = vpack.c.b16 %v2566, %v2565
        %v2719 = vpack.c.b16 %v2568, %v2567
        %v2720 = vpack.c.b16 %v2570, %v2569
        %v2721 = vpack.c.b16 %v2572, %v2571
        %v2722 = vpack.c.b16 %v2574, %v2573
        %v2723 = vpack.c.b16 %v2576, %v2575
        %v2724 = vpack.c.b16 %v2578, %v2577
        %v2725 = vpack.c.b16 %v2580, %v2579
        %v2726 = vpack.c.b16 %v2582, %v2581
        %v2727 = vpack.c.b16 %v2584, %v2583
        %v2728 = vpack.c.b16 %v2586, %v2585
        %v2729 = vpack.c.b16 %v2588, %v2587
        %v2730 = vpack.c.b16 %v2590, %v2589
        %v2731 = vpack.c.b16 %v2592, %v2591
        %v2732 = vpack.c.b16 %v2594, %v2593
        %v2733 = vpack.c.b16 %v2596, %v2595
        %v2734 = vpack.c.b16 %v2598, %v2597
        %v2735 = vpack.c.b16 %v2600, %v2599
        %v2736 = vpack.c.b16 %v2602, %v2601
        %v2737 = vpack.c.b16 %v2604, %v2603
        %v2738 = vpack.c.b16 %v2606, %v2605
        %v2739 = vpack.c.b16 %v2608, %v2607
        %v2740 = vpack.c.b16 %v2610, %v2609
        %v2741 = vpack.c.b16 %v2612, %v2611
        %v2742 = vpack.c.b16 %v2614, %v2613
        %v2743 = vpack.c.b16 %v2616, %v2615
        %v2744 = vpack.c.b16 %v2618, %v2617
        %v2745 = vpack.c.b16 %v2620, %v2619
        %v2746 = vpack.c.b16 %v2622, %v2621
        %v2747 = vpack.c.b16 %v2624, %v2623
        %v2748 = vpack.c.b16 %v2626, %v2625
        %v2749 = vpack.c.b16 %v2628, %v2627
        %v2750 = vpack.c.b16 %v2630, %v2629
        %v2751 = vpack.c.b16 %v2632, %v2631
        %v2752 = vpack.c.b16 %v2634, %v2633
        %v2753 = vpack.c.b16 %v2636, %v2635
        %v2754 = vpack.c.b16 %v2638, %v2637
        %v2755 = vpack.c.b16 %v2640, %v2639
        %v2756 = vpack.c.b16 %v2642, %v2641
        %v2757 = vpack.c.b16 %v2644, %v2643
        %v2758 = vpack.c.b16 %v2646, %v2645
        %v2759 = vpack.c.b16 %v2648, %v2647
        %v2760 = vpack.c.b16 %v2650, %v2649
        %v2761 = vpack.c.b16 %v2652, %v2651
        %v2762 = vpack.c.b16 %v2654, %v2653
        %v2763 = vpack.c.b16 %v2656, %v2655
        %v2764 = vpack.c.b16 %v2658, %v2657
        %v2765 = vpack.c.b16 %v2660, %v2659
        %v2766 = vpack.c.b16 %v2662, %v2661
        %v2767 = vpack.c.b16 %v2664, %v2663
        %v2768 = vpack.c.b16 %v2666, %v2665
        %v2769 = vpack.c.b16 %v2668, %v2667
        %v2770 = vpack.c.b16 %v2670, %v2669
        %v2771 = vpack.c.b16 %v2672, %v2671
        %v2772 = vpack.c.b16 %v2674, %v2673
        %v2773 = vpack.c.b16 %v2676, %v2675
        %v2774 = vpack.c.b16 %v2678, %v2677
        %v2775 = vpack.c.b16 %v2680, %v2679
        %v2776 = vpack.c.b16 %v2682, %v2681
        %v2777 = vpack.c.b16 %v2684, %v2683
        %v2778 = vpack.c.b16 %v2686, %v2685
        %v2779 = vpack.c.b16 %v2688, %v2687
        %v2780 = vpack.c.b16 %v2690, %v2689
        %v2781 = vpack.c.b16 %v2692, %v2691
        %v2782 = vpack.c.b16 %v2694, %v2693
        %v2783 = vpack.c.b16 %v2696, %v2695
        %v2784 = vpack.c.b16 %v2698, %v2697
        %v2785 = vpack.c.b16 %v2700, %v2699
        %v2786 = vpack.c.b16 %v2702, %v2701
        %v2787 = vpack.c.b16 %v2704, %v2703
        %v2788 = vpack.c.b16 %v2706, %v2705
        %v2789 = vpack.c.b16 %v2708, %v2707
        %v2790 = vpack.c.b16 %v2710, %v2709
        %2871 = vmatprep.subr.bf16.mxu0 0
        %2872 = vmatpush1.bf16.msra.mxu0 %v2711
        %2873 = vmatprep.subr.bf16.mxu0 0
        %2874 = vmatpush1.bf16.msra.mxu0 %v2712
        %2875 = vmatprep.subr.bf16.mxu0 0
        %2876 = vmatpush1.bf16.msra.mxu0 %v2713
        %2877 = vmatprep.subr.bf16.mxu0 0
        %2878 = vmatpush1.bf16.msra.mxu0 %v2714
        %2879 = vmatprep.subr.bf16.mxu0 0
        %2880 = vmatpush1.bf16.msra.mxu0 %v2715
        %2881 = vmatprep.subr.bf16.mxu0 0
        %2882 = vmatpush1.bf16.msra.mxu0 %v2716
        %2883 = vmatprep.subr.bf16.mxu0 0
        %2884 = vmatpush1.bf16.msra.mxu0 %v2717
        %2885 = vmatprep.subr.bf16.mxu0 0
        %2886 = vmatpush1.bf16.msra.mxu0 %v2718
        %2887 = vmatprep.subr.bf16.mxu0 0
        %2888 = vmatpush1.bf16.msra.mxu0 %v2719
        %2889 = vmatprep.subr.bf16.mxu0 0
        %2890 = vmatpush1.bf16.msra.mxu0 %v2720
        %2891 = vmatprep.subr.bf16.mxu0 0
        %2892 = vmatpush1.bf16.msra.mxu0 %v2721
        %2893 = vmatprep.subr.bf16.mxu0 0
        %2894 = vmatpush1.bf16.msra.mxu0 %v2722
        %2895 = vmatprep.subr.bf16.mxu0 0
        %2896 = vmatpush1.bf16.msra.mxu0 %v2723
        %2897 = vmatprep.subr.bf16.mxu0 0
        %2898 = vmatpush1.bf16.msra.mxu0 %v2724
        %2899 = vmatprep.subr.bf16.mxu0 0
        %2900 = vmatpush1.bf16.msra.mxu0 %v2725
        %2901 = vmatprep.subr.bf16.mxu0 0
        %2902 = vmatpush1.bf16.msra.mxu0 %v2726
        %2903 = vmatprep.mubr.bf16.mxu0 %v1752
        %2904 = vmatmul.mubr.bf16.gmra.mrb[0].mxu0 %v1751
        %v2905 = vpop.f32.mrb[0].mxu0
        %v2906 = vadd.f32 %v727, %v2905
        %v2907 = vpop.f32.mrb[0].mxu0
        %v2908 = vpop.f32.mrb[0].mxu0
        %v2909 = vadd.f32 %v728, %v2908
        %v2910 = vpop.f32.mrb[0].mxu0
        %2911 = vmatprep.mubr.bf16.mxu0 %v1762
        %2912 = vmatmul.mubr.bf16.gmra.mrb[0].mxu0 %v1761
        %v2913 = vpop.f32.mrb[0].mxu0
        %v2914 = vadd.f32 %v729, %v2913
        %v2915 = vpop.f32.mrb[0].mxu0
        %v2916 = vpop.f32.mrb[0].mxu0
        %v2917 = vadd.f32 %v730, %v2916
        %v2918 = vpop.f32.mrb[0].mxu0
        %2919 = vmatprep.mubr.bf16.mxu0 %v1772
        %2920 = vmatmul.mubr.bf16.gmra.mrb[0].mxu0 %v1771
        %v2921 = vpop.f32.mrb[0].mxu0
        %v2922 = vadd.f32 %v731, %v2921
        %v2923 = vpop.f32.mrb[0].mxu0
        %v2924 = vpop.f32.mrb[0].mxu0
        %v2925 = vadd.f32 %v732, %v2924
        %v2926 = vpop.f32.mrb[0].mxu0
        %2927 = vmatprep.mubr.bf16.mxu0 %v1782
        %2928 = vmatmul.mubr.bf16.gmra.mrb[0].mxu0 %v1781
        %v2929 = vpop.f32.mrb[0].mxu0
        %v2930 = vadd.f32 %v733, %v2929
        %v2931 = vpop.f32.mrb[0].mxu0
        %v2932 = vpop.f32.mrb[0].mxu0
        %v2933 = vadd.f32 %v734, %v2932
        %v2934 = vpop.f32.mrb[0].mxu0
        %2935 = vmatprep.mubr.bf16.mxu0 %v1792
        %2936 = vmatmul.mubr.bf16.gmra.mrb[0].mxu0 %v1791
        %v2937 = vpop.f32.mrb[0].mxu0
        %v2938 = vadd.f32 %v735, %v2937
        %v2939 = vpop.f32.mrb[0].mxu0
        %v2940 = vpop.f32.mrb[0].mxu0
        %v2941 = vadd.f32 %v736, %v2940
        %v2942 = vpop.f32.mrb[0].mxu0
        %2943 = vmatprep.mubr.bf16.mxu0 %v1802
        %2944 = vmatmul.mubr.bf16.gmra.mrb[0].mxu0 %v1801
        %v2945 = vpop.f32.mrb[0].mxu0
        %v2946 = vadd.f32 %v737, %v2945
        %v2947 = vpop.f32.mrb[0].mxu0
        %v2948 = vpop.f32.mrb[0].mxu0
        %v2949 = vadd.f32 %v738, %v2948
        %v2950 = vpop.f32.mrb[0].mxu0
        %2951 = vmatprep.mubr.bf16.mxu0 %v1812
        %2952 = vmatmul.mubr.bf16.gmra.mrb[0].mxu0 %v1811
        %v2953 = vpop.f32.mrb[0].mxu0
        %v2954 = vadd.f32 %v739, %v2953
        %v2955 = vpop.f32.mrb[0].mxu0
        %v2956 = vpop.f32.mrb[0].mxu0
        %v2957 = vadd.f32 %v740, %v2956
        %v2958 = vpop.f32.mrb[0].mxu0
        %2959 = vmatprep.mubr.bf16.mxu0 %v1822
        %2960 = vmatmul.mubr.bf16.gmra.mrb[0].mxu0 %v1821
        %v2961 = vpop.f32.mrb[0].mxu0
        %v2962 = vadd.f32 %v741, %v2961
        %v2963 = vpop.f32.mrb[0].mxu0
        %v2964 = vpop.f32.mrb[0].mxu0
        %v2965 = vadd.f32 %v742, %v2964
        %v2966 = vpop.f32.mrb[0].mxu0
        %2967 = vmatprep.mubr.bf16.mxu0 %v1832
        %2968 = vmatmul.mubr.bf16.gmra.mrb[0].mxu0 %v1831
        %v2969 = vpop.f32.mrb[0].mxu0
        %v2970 = vadd.f32 %v743, %v2969
        %v2971 = vpop.f32.mrb[0].mxu0
        %v2972 = vpop.f32.mrb[0].mxu0
        %v2973 = vadd.f32 %v744, %v2972
        %v2974 = vpop.f32.mrb[0].mxu0
        %2975 = vmatprep.mubr.bf16.mxu0 %v1842
        %2976 = vmatmul.mubr.bf16.gmra.mrb[0].mxu0 %v1841
        %v2977 = vpop.f32.mrb[0].mxu0
        %v2978 = vadd.f32 %v745, %v2977
        %v2979 = vpop.f32.mrb[0].mxu0
        %v2980 = vpop.f32.mrb[0].mxu0
        %v2981 = vadd.f32 %v746, %v2980
        %v2982 = vpop.f32.mrb[0].mxu0
        %2983 = vmatprep.mubr.bf16.mxu0 %v1852
        %2984 = vmatmul.mubr.bf16.gmra.mrb[0].mxu0 %v1851
        %v2985 = vpop.f32.mrb[0].mxu0
        %v2986 = vadd.f32 %v747, %v2985
        %v2987 = vpop.f32.mrb[0].mxu0
        %v2988 = vpop.f32.mrb[0].mxu0
        %v2989 = vadd.f32 %v748, %v2988
        %v2990 = vpop.f32.mrb[0].mxu0
        %2991 = vmatprep.mubr.bf16.mxu0 %v1862
        %2992 = vmatmul.mubr.bf16.gmra.mrb[0].mxu0 %v1861
        %v2993 = vpop.f32.mrb[0].mxu0
        %v2994 = vadd.f32 %v749, %v2993
        %v2995 = vpop.f32.mrb[0].mxu0
        %v2996 = vpop.f32.mrb[0].mxu0
        %v2997 = vadd.f32 %v750, %v2996
        %v2998 = vpop.f32.mrb[0].mxu0
        %2999 = vmatprep.mubr.bf16.mxu0 %v1872
        %3000 = vmatmul.mubr.bf16.gmra.mrb[0].mxu0 %v1871
        %v3001 = vpop.f32.mrb[0].mxu0
        %v3002 = vadd.f32 %v751, %v3001
        %v3003 = vpop.f32.mrb[0].mxu0
        %v3004 = vpop.f32.mrb[0].mxu0
        %v3005 = vadd.f32 %v752, %v3004
        %v3006 = vpop.f32.mrb[0].mxu0
        %3007 = vmatprep.mubr.bf16.mxu0 %v1882
        %3008 = vmatmul.mubr.bf16.gmra.mrb[0].mxu0 %v1881
        %v3009 = vpop.f32.mrb[0].mxu0
        %v3010 = vadd.f32 %v753, %v3009
        %v3011 = vpop.f32.mrb[0].mxu0
        %v3012 = vpop.f32.mrb[0].mxu0
        %v3013 = vadd.f32 %v754, %v3012
        %v3014 = vpop.f32.mrb[0].mxu0
        %3015 = vmatprep.mubr.bf16.mxu0 %v1892
        %3016 = vmatmul.mubr.bf16.gmra.mrb[0].mxu0 %v1891
        %v3017 = vpop.f32.mrb[0].mxu0
        %v3018 = vadd.f32 %v755, %v3017
        %v3019 = vpop.f32.mrb[0].mxu0
        %v3020 = vpop.f32.mrb[0].mxu0
        %v3021 = vadd.f32 %v756, %v3020
        %v3022 = vpop.f32.mrb[0].mxu0
        %3023 = vmatprep.mubr.bf16.mxu0 %v1902
        %3024 = vmatmul.mubr.bf16.gmra.mrb[0].mxu0 %v1901
        %v3025 = vpop.f32.mrb[0].mxu0
        %v3026 = vadd.f32 %v757, %v3025
        %v3027 = vpop.f32.mrb[0].mxu0
        %v3028 = vpop.f32.mrb[0].mxu0
        %v3029 = vadd.f32 %v758, %v3028
        %v3030 = vpop.f32.mrb[0].mxu0
        %3031 = vmatprep.mubr.bf16.mxu0 %v1912
        %3032 = vmatmul.mubr.bf16.gmra.mrb[0].mxu0 %v1911
        %v3033 = vpop.f32.mrb[0].mxu0
        %v3034 = vadd.f32 %v759, %v3033
        %v3035 = vpop.f32.mrb[0].mxu0
        %v3036 = vpop.f32.mrb[0].mxu0
        %v3037 = vadd.f32 %v760, %v3036
        %v3038 = vpop.f32.mrb[0].mxu0
        %3039 = vmatprep.mubr.bf16.mxu0 %v1922
        %3040 = vmatmul.mubr.bf16.gmra.mrb[0].mxu0 %v1921
        %v3041 = vpop.f32.mrb[0].mxu0
        %v3042 = vadd.f32 %v761, %v3041
        %v3043 = vpop.f32.mrb[0].mxu0
        %v3044 = vpop.f32.mrb[0].mxu0
        %v3045 = vadd.f32 %v762, %v3044
        %v3046 = vpop.f32.mrb[0].mxu0
        %3047 = vmatprep.mubr.bf16.mxu0 %v1932
        %3048 = vmatmul.mubr.bf16.gmra.mrb[0].mxu0 %v1931
        %v3049 = vpop.f32.mrb[0].mxu0
        %v3050 = vadd.f32 %v763, %v3049
        %v3051 = vpop.f32.mrb[0].mxu0
        %v3052 = vpop.f32.mrb[0].mxu0
        %v3053 = vadd.f32 %v764, %v3052
        %v3054 = vpop.f32.mrb[0].mxu0
        %3055 = vmatprep.mubr.bf16.mxu0 %v1942
        %3056 = vmatmul.mubr.bf16.gmra.mrb[0].mxu0 %v1941
        %v3057 = vpop.f32.mrb[0].mxu0
        %v3058 = vadd.f32 %v765, %v3057
        %v3059 = vpop.f32.mrb[0].mxu0
        %v3060 = vpop.f32.mrb[0].mxu0
        %v3061 = vadd.f32 %v766, %v3060
        %v3062 = vpop.f32.mrb[0].mxu0
        %3063 = vmatprep.mubr.bf16.mxu0 %v1952
        %3064 = vmatmul.mubr.bf16.gmra.mrb[0].mxu0 %v1951
        %v3065 = vpop.f32.mrb[0].mxu0
        %v3066 = vadd.f32 %v767, %v3065
        %v3067 = vpop.f32.mrb[0].mxu0
        %v3068 = vpop.f32.mrb[0].mxu0
        %v3069 = vadd.f32 %v768, %v3068
        %v3070 = vpop.f32.mrb[0].mxu0
        %3071 = vmatprep.mubr.bf16.mxu0 %v1962
        %3072 = vmatmul.mubr.bf16.gmra.mrb[0].mxu0 %v1961
        %v3073 = vpop.f32.mrb[0].mxu0
        %v3074 = vadd.f32 %v769, %v3073
        %v3075 = vpop.f32.mrb[0].mxu0
        %v3076 = vpop.f32.mrb[0].mxu0
        %v3077 = vadd.f32 %v770, %v3076
        %v3078 = vpop.f32.mrb[0].mxu0
        %3079 = vmatprep.mubr.bf16.mxu0 %v1972
        %3080 = vmatmul.mubr.bf16.gmra.mrb[0].mxu0 %v1971
        %v3081 = vpop.f32.mrb[0].mxu0
        %v3082 = vadd.f32 %v771, %v3081
        %v3083 = vpop.f32.mrb[0].mxu0
        %v3084 = vpop.f32.mrb[0].mxu0
        %v3085 = vadd.f32 %v772, %v3084
        %v3086 = vpop.f32.mrb[0].mxu0
        %3087 = vmatprep.mubr.bf16.mxu0 %v1982
        %3088 = vmatmul.mubr.bf16.gmra.mrb[0].mxu0 %v1981
        %v3089 = vpop.f32.mrb[0].mxu0
        %v3090 = vadd.f32 %v773, %v3089
        %v3091 = vpop.f32.mrb[0].mxu0
        %v3092 = vpop.f32.mrb[0].mxu0
        %v3093 = vadd.f32 %v774, %v3092
        %v3094 = vpop.f32.mrb[0].mxu0
        %3095 = vmatprep.mubr.bf16.mxu0 %v1992
        %3096 = vmatmul.mubr.bf16.gmra.mrb[0].mxu0 %v1991
        %v3097 = vpop.f32.mrb[0].mxu0
        %v3098 = vadd.f32 %v775, %v3097
        %v3099 = vpop.f32.mrb[0].mxu0
        %v3100 = vpop.f32.mrb[0].mxu0
        %v3101 = vadd.f32 %v776, %v3100
        %v3102 = vpop.f32.mrb[0].mxu0
        %3103 = vmatprep.mubr.bf16.mxu0 %v2002
        %3104 = vmatmul.mubr.bf16.gmra.mrb[0].mxu0 %v2001
        %v3105 = vpop.f32.mrb[0].mxu0
        %v3106 = vadd.f32 %v777, %v3105
        %v3107 = vpop.f32.mrb[0].mxu0
        %v3108 = vpop.f32.mrb[0].mxu0
        %v3109 = vadd.f32 %v778, %v3108
        %v3110 = vpop.f32.mrb[0].mxu0
        %3111 = vmatprep.mubr.bf16.mxu0 %v2012
        %3112 = vmatmul.mubr.bf16.gmra.mrb[0].mxu0 %v2011
        %v3113 = vpop.f32.mrb[0].mxu0
        %v3114 = vadd.f32 %v779, %v3113
        %v3115 = vpop.f32.mrb[0].mxu0
        %v3116 = vpop.f32.mrb[0].mxu0
        %v3117 = vadd.f32 %v780, %v3116
        %v3118 = vpop.f32.mrb[0].mxu0
        %3119 = vmatprep.mubr.bf16.mxu0 %v2022
        %3120 = vmatmul.mubr.bf16.gmra.mrb[0].mxu0 %v2021
        %v3121 = vpop.f32.mrb[0].mxu0
        %v3122 = vadd.f32 %v781, %v3121
        %v3123 = vpop.f32.mrb[0].mxu0
        %v3124 = vpop.f32.mrb[0].mxu0
        %v3125 = vadd.f32 %v782, %v3124
        %v3126 = vpop.f32.mrb[0].mxu0
        %3127 = vmatprep.mubr.bf16.mxu0 %v2032
        %3128 = vmatmul.mubr.bf16.gmra.mrb[0].mxu0 %v2031
        %v3129 = vpop.f32.mrb[0].mxu0
        %v3130 = vadd.f32 %v783, %v3129
        %v3131 = vpop.f32.mrb[0].mxu0
        %v3132 = vpop.f32.mrb[0].mxu0
        %v3133 = vadd.f32 %v784, %v3132
        %v3134 = vpop.f32.mrb[0].mxu0
        %3135 = vmatprep.mubr.bf16.mxu0 %v2042
        %3136 = vmatmul.mubr.bf16.gmra.mrb[0].mxu0 %v2041
        %v3137 = vpop.f32.mrb[0].mxu0
        %v3138 = vadd.f32 %v785, %v3137
        %v3139 = vpop.f32.mrb[0].mxu0
        %v3140 = vpop.f32.mrb[0].mxu0
        %v3141 = vadd.f32 %v786, %v3140
        %v3142 = vpop.f32.mrb[0].mxu0
        %3143 = vmatprep.mubr.bf16.mxu0 %v2052
        %3144 = vmatmul.mubr.bf16.gmra.mrb[0].mxu0 %v2051
        %v3145 = vpop.f32.mrb[0].mxu0
        %v3146 = vadd.f32 %v787, %v3145
        %v3147 = vpop.f32.mrb[0].mxu0
        %v3148 = vpop.f32.mrb[0].mxu0
        %v3149 = vadd.f32 %v788, %v3148
        %v3150 = vpop.f32.mrb[0].mxu0
        %3151 = vmatprep.mubr.bf16.mxu0 %v2062
        %3152 = vmatmul.mubr.bf16.gmra.mrb[0].mxu0 %v2061
        %v3153 = vpop.f32.mrb[0].mxu0
        %v3154 = vadd.f32 %v789, %v3153
        %v3155 = vpop.f32.mrb[0].mxu0
        %v3156 = vpop.f32.mrb[0].mxu0
        %v3157 = vadd.f32 %v790, %v3156
        %v3158 = vpop.f32.mrb[0].mxu0
        %3159 = vdwg.mxu0
        %3160 = vmatprep.subr.bf16.mxu0 0
        %3161 = vmatpush1.bf16.msra.mxu0 %v2727
        %3162 = vmatprep.subr.bf16.mxu0 0
        %3163 = vmatpush1.bf16.msra.mxu0 %v2728
        %3164 = vmatprep.subr.bf16.mxu0 0
        %3165 = vmatpush1.bf16.msra.mxu0 %v2729
        %3166 = vmatprep.subr.bf16.mxu0 0
        %3167 = vmatpush1.bf16.msra.mxu0 %v2730
        %3168 = vmatprep.subr.bf16.mxu0 0
        %3169 = vmatpush1.bf16.msra.mxu0 %v2731
        %3170 = vmatprep.subr.bf16.mxu0 0
        %3171 = vmatpush1.bf16.msra.mxu0 %v2732
        %3172 = vmatprep.subr.bf16.mxu0 0
        %3173 = vmatpush1.bf16.msra.mxu0 %v2733
        %3174 = vmatprep.subr.bf16.mxu0 0
        %3175 = vmatpush1.bf16.msra.mxu0 %v2734
        %3176 = vmatprep.subr.bf16.mxu0 0
        %3177 = vmatpush1.bf16.msra.mxu0 %v2735
        %3178 = vmatprep.subr.bf16.mxu0 0
        %3179 = vmatpush1.bf16.msra.mxu0 %v2736
        %3180 = vmatprep.subr.bf16.mxu0 0
        %3181 = vmatpush1.bf16.msra.mxu0 %v2737
        %3182 = vmatprep.subr.bf16.mxu0 0
        %3183 = vmatpush1.bf16.msra.mxu0 %v2738
        %3184 = vmatprep.subr.bf16.mxu0 0
        %3185 = vmatpush1.bf16.msra.mxu0 %v2739
        %3186 = vmatprep.subr.bf16.mxu0 0
        %3187 = vmatpush1.bf16.msra.mxu0 %v2740
        %3188 = vmatprep.subr.bf16.mxu0 0
        %3189 = vmatpush1.bf16.msra.mxu0 %v2741
        %3190 = vmatprep.subr.bf16.mxu0 0
        %3191 = vmatpush1.bf16.msra.mxu0 %v2742
        %3192 = vmatprep.mubr.bf16.mxu0 %v1754
        %3193 = vmatmul.mubr.bf16.gmra.mrb[0].mxu0 %v1753
        %v3194 = vpop.f32.mrb[0].mxu0
        %v3195 = vadd.f32 %v2906, %v3194
        %v3196 = vpop.f32.mrb[0].mxu0
        %v3197 = vpop.f32.mrb[0].mxu0
        %v3198 = vadd.f32 %v2909, %v3197
        %v3199 = vpop.f32.mrb[0].mxu0
        %3200 = vmatprep.mubr.bf16.mxu0 %v1764
        %3201 = vmatmul.mubr.bf16.gmra.mrb[0].mxu0 %v1763
        %v3202 = vpop.f32.mrb[0].mxu0
        %v3203 = vadd.f32 %v2914, %v3202
        %v3204 = vpop.f32.mrb[0].mxu0
        %v3205 = vpop.f32.mrb[0].mxu0
        %v3206 = vadd.f32 %v2917, %v3205
        %v3207 = vpop.f32.mrb[0].mxu0
        %3208 = vmatprep.mubr.bf16.mxu0 %v1774
        %3209 = vmatmul.mubr.bf16.gmra.mrb[0].mxu0 %v1773
        %v3210 = vpop.f32.mrb[0].mxu0
        %v3211 = vadd.f32 %v2922, %v3210
        %v3212 = vpop.f32.mrb[0].mxu0
        %v3213 = vpop.f32.mrb[0].mxu0
        %v3214 = vadd.f32 %v2925, %v3213
        %v3215 = vpop.f32.mrb[0].mxu0
        %3216 = vmatprep.mubr.bf16.mxu0 %v1784
        %3217 = vmatmul.mubr.bf16.gmra.mrb[0].mxu0 %v1783
        %v3218 = vpop.f32.mrb[0].mxu0
        %v3219 = vadd.f32 %v2930, %v3218
        %v3220 = vpop.f32.mrb[0].mxu0
        %v3221 = vpop.f32.mrb[0].mxu0
        %v3222 = vadd.f32 %v2933, %v3221
        %v3223 = vpop.f32.mrb[0].mxu0
        %3224 = vmatprep.mubr.bf16.mxu0 %v1794
        %3225 = vmatmul.mubr.bf16.gmra.mrb[0].mxu0 %v1793
        %v3226 = vpop.f32.mrb[0].mxu0
        %v3227 = vadd.f32 %v2938, %v3226
        %v3228 = vpop.f32.mrb[0].mxu0
        %v3229 = vpop.f32.mrb[0].mxu0
        %v3230 = vadd.f32 %v2941, %v3229
        %v3231 = vpop.f32.mrb[0].mxu0
        %3232 = vmatprep.mubr.bf16.mxu0 %v1804
        %3233 = vmatmul.mubr.bf16.gmra.mrb[0].mxu0 %v1803
        %v3234 = vpop.f32.mrb[0].mxu0
        %v3235 = vadd.f32 %v2946, %v3234
        %v3236 = vpop.f32.mrb[0].mxu0
        %v3237 = vpop.f32.mrb[0].mxu0
        %v3238 = vadd.f32 %v2949, %v3237
        %v3239 = vpop.f32.mrb[0].mxu0
        %3240 = vmatprep.mubr.bf16.mxu0 %v1814
        %3241 = vmatmul.mubr.bf16.gmra.mrb[0].mxu0 %v1813
        %v3242 = vpop.f32.mrb[0].mxu0
        %v3243 = vadd.f32 %v2954, %v3242
        %v3244 = vpop.f32.mrb[0].mxu0
        %v3245 = vpop.f32.mrb[0].mxu0
        %v3246 = vadd.f32 %v2957, %v3245
        %v3247 = vpop.f32.mrb[0].mxu0
        %3248 = vmatprep.mubr.bf16.mxu0 %v1824
        %3249 = vmatmul.mubr.bf16.gmra.mrb[0].mxu0 %v1823
        %v3250 = vpop.f32.mrb[0].mxu0
        %v3251 = vadd.f32 %v2962, %v3250
        %v3252 = vpop.f32.mrb[0].mxu0
        %v3253 = vpop.f32.mrb[0].mxu0
        %v3254 = vadd.f32 %v2965, %v3253
        %v3255 = vpop.f32.mrb[0].mxu0
        %3256 = vmatprep.mubr.bf16.mxu0 %v1834
        %3257 = vmatmul.mubr.bf16.gmra.mrb[0].mxu0 %v1833
        %v3258 = vpop.f32.mrb[0].mxu0
        %v3259 = vadd.f32 %v2970, %v3258
        %v3260 = vpop.f32.mrb[0].mxu0
        %v3261 = vpop.f32.mrb[0].mxu0
        %v3262 = vadd.f32 %v2973, %v3261
        %v3263 = vpop.f32.mrb[0].mxu0
        %3264 = vmatprep.mubr.bf16.mxu0 %v1844
        %3265 = vmatmul.mubr.bf16.gmra.mrb[0].mxu0 %v1843
        %v3266 = vpop.f32.mrb[0].mxu0
        %v3267 = vadd.f32 %v2978, %v3266
        %v3268 = vpop.f32.mrb[0].mxu0
        %v3269 = vpop.f32.mrb[0].mxu0
        %v3270 = vadd.f32 %v2981, %v3269
        %v3271 = vpop.f32.mrb[0].mxu0
        %3272 = vmatprep.mubr.bf16.mxu0 %v1854
        %3273 = vmatmul.mubr.bf16.gmra.mrb[0].mxu0 %v1853
        %v3274 = vpop.f32.mrb[0].mxu0
        %v3275 = vadd.f32 %v2986, %v3274
        %v3276 = vpop.f32.mrb[0].mxu0
        %v3277 = vpop.f32.mrb[0].mxu0
        %v3278 = vadd.f32 %v2989, %v3277
        %v3279 = vpop.f32.mrb[0].mxu0
        %3280 = vmatprep.mubr.bf16.mxu0 %v1864
        %3281 = vmatmul.mubr.bf16.gmra.mrb[0].mxu0 %v1863
        %v3282 = vpop.f32.mrb[0].mxu0
        %v3283 = vadd.f32 %v2994, %v3282
        %v3284 = vpop.f32.mrb[0].mxu0
        %v3285 = vpop.f32.mrb[0].mxu0
        %v3286 = vadd.f32 %v2997, %v3285
        %v3287 = vpop.f32.mrb[0].mxu0
        %3288 = vmatprep.mubr.bf16.mxu0 %v1874
        %3289 = vmatmul.mubr.bf16.gmra.mrb[0].mxu0 %v1873
        %v3290 = vpop.f32.mrb[0].mxu0
        %v3291 = vadd.f32 %v3002, %v3290
        %v3292 = vpop.f32.mrb[0].mxu0
        %v3293 = vpop.f32.mrb[0].mxu0
        %v3294 = vadd.f32 %v3005, %v3293
        %v3295 = vpop.f32.mrb[0].mxu0
        %3296 = vmatprep.mubr.bf16.mxu0 %v1884
        %3297 = vmatmul.mubr.bf16.gmra.mrb[0].mxu0 %v1883
        %v3298 = vpop.f32.mrb[0].mxu0
        %v3299 = vadd.f32 %v3010, %v3298
        %v3300 = vpop.f32.mrb[0].mxu0
        %v3301 = vpop.f32.mrb[0].mxu0
        %v3302 = vadd.f32 %v3013, %v3301
        %v3303 = vpop.f32.mrb[0].mxu0
        %3304 = vmatprep.mubr.bf16.mxu0 %v1894
        %3305 = vmatmul.mubr.bf16.gmra.mrb[0].mxu0 %v1893
        %v3306 = vpop.f32.mrb[0].mxu0
        %v3307 = vadd.f32 %v3018, %v3306
        %v3308 = vpop.f32.mrb[0].mxu0
        %v3309 = vpop.f32.mrb[0].mxu0
        %v3310 = vadd.f32 %v3021, %v3309
        %v3311 = vpop.f32.mrb[0].mxu0
        %3312 = vmatprep.mubr.bf16.mxu0 %v1904
        %3313 = vmatmul.mubr.bf16.gmra.mrb[0].mxu0 %v1903
        %v3314 = vpop.f32.mrb[0].mxu0
        %v3315 = vadd.f32 %v3026, %v3314
        %v3316 = vpop.f32.mrb[0].mxu0
        %v3317 = vpop.f32.mrb[0].mxu0
        %v3318 = vadd.f32 %v3029, %v3317
        %v3319 = vpop.f32.mrb[0].mxu0
        %3320 = vmatprep.mubr.bf16.mxu0 %v1914
        %3321 = vmatmul.mubr.bf16.gmra.mrb[0].mxu0 %v1913
        %v3322 = vpop.f32.mrb[0].mxu0
        %v3323 = vadd.f32 %v3034, %v3322
        %v3324 = vpop.f32.mrb[0].mxu0
        %v3325 = vpop.f32.mrb[0].mxu0
        %v3326 = vadd.f32 %v3037, %v3325
        %v3327 = vpop.f32.mrb[0].mxu0
        %3328 = vmatprep.mubr.bf16.mxu0 %v1924
        %3329 = vmatmul.mubr.bf16.gmra.mrb[0].mxu0 %v1923
        %v3330 = vpop.f32.mrb[0].mxu0
        %v3331 = vadd.f32 %v3042, %v3330
        %v3332 = vpop.f32.mrb[0].mxu0
        %v3333 = vpop.f32.mrb[0].mxu0
        %v3334 = vadd.f32 %v3045, %v3333
        %v3335 = vpop.f32.mrb[0].mxu0
        %3336 = vmatprep.mubr.bf16.mxu0 %v1934
        %3337 = vmatmul.mubr.bf16.gmra.mrb[0].mxu0 %v1933
        %v3338 = vpop.f32.mrb[0].mxu0
        %v3339 = vadd.f32 %v3050, %v3338
        %v3340 = vpop.f32.mrb[0].mxu0
        %v3341 = vpop.f32.mrb[0].mxu0
        %v3342 = vadd.f32 %v3053, %v3341
        %v3343 = vpop.f32.mrb[0].mxu0
        %3344 = vmatprep.mubr.bf16.mxu0 %v1944
        %3345 = vmatmul.mubr.bf16.gmra.mrb[0].mxu0 %v1943
        %v3346 = vpop.f32.mrb[0].mxu0
        %v3347 = vadd.f32 %v3058, %v3346
        %v3348 = vpop.f32.mrb[0].mxu0
        %v3349 = vpop.f32.mrb[0].mxu0
        %v3350 = vadd.f32 %v3061, %v3349
        %v3351 = vpop.f32.mrb[0].mxu0
        %3352 = vmatprep.mubr.bf16.mxu0 %v1954
        %3353 = vmatmul.mubr.bf16.gmra.mrb[0].mxu0 %v1953
        %v3354 = vpop.f32.mrb[0].mxu0
        %v3355 = vadd.f32 %v3066, %v3354
        %v3356 = vpop.f32.mrb[0].mxu0
        %v3357 = vpop.f32.mrb[0].mxu0
        %v3358 = vadd.f32 %v3069, %v3357
        %v3359 = vpop.f32.mrb[0].mxu0
        %3360 = vmatprep.mubr.bf16.mxu0 %v1964
        %3361 = vmatmul.mubr.bf16.gmra.mrb[0].mxu0 %v1963
        %v3362 = vpop.f32.mrb[0].mxu0
        %v3363 = vadd.f32 %v3074, %v3362
        %v3364 = vpop.f32.mrb[0].mxu0
        %v3365 = vpop.f32.mrb[0].mxu0
        %v3366 = vadd.f32 %v3077, %v3365
        %v3367 = vpop.f32.mrb[0].mxu0
        %3368 = vmatprep.mubr.bf16.mxu0 %v1974
        %3369 = vmatmul.mubr.bf16.gmra.mrb[0].mxu0 %v1973
        %v3370 = vpop.f32.mrb[0].mxu0
        %v3371 = vadd.f32 %v3082, %v3370
        %v3372 = vpop.f32.mrb[0].mxu0
        %v3373 = vpop.f32.mrb[0].mxu0
        %v3374 = vadd.f32 %v3085, %v3373
        %v3375 = vpop.f32.mrb[0].mxu0
        %3376 = vmatprep.mubr.bf16.mxu0 %v1984
        %3377 = vmatmul.mubr.bf16.gmra.mrb[0].mxu0 %v1983
        %v3378 = vpop.f32.mrb[0].mxu0
        %v3379 = vadd.f32 %v3090, %v3378
        %v3380 = vpop.f32.mrb[0].mxu0
        %v3381 = vpop.f32.mrb[0].mxu0
        %v3382 = vadd.f32 %v3093, %v3381
        %v3383 = vpop.f32.mrb[0].mxu0
        %3384 = vmatprep.mubr.bf16.mxu0 %v1994
        %3385 = vmatmul.mubr.bf16.gmra.mrb[0].mxu0 %v1993
        %v3386 = vpop.f32.mrb[0].mxu0
        %v3387 = vadd.f32 %v3098, %v3386
        %v3388 = vpop.f32.mrb[0].mxu0
        %v3389 = vpop.f32.mrb[0].mxu0
        %v3390 = vadd.f32 %v3101, %v3389
        %v3391 = vpop.f32.mrb[0].mxu0
        %3392 = vmatprep.mubr.bf16.mxu0 %v2004
        %3393 = vmatmul.mubr.bf16.gmra.mrb[0].mxu0 %v2003
        %v3394 = vpop.f32.mrb[0].mxu0
        %v3395 = vadd.f32 %v3106, %v3394
        %v3396 = vpop.f32.mrb[0].mxu0
        %v3397 = vpop.f32.mrb[0].mxu0
        %v3398 = vadd.f32 %v3109, %v3397
        %v3399 = vpop.f32.mrb[0].mxu0
        %3400 = vmatprep.mubr.bf16.mxu0 %v2014
        %3401 = vmatmul.mubr.bf16.gmra.mrb[0].mxu0 %v2013
        %v3402 = vpop.f32.mrb[0].mxu0
        %v3403 = vadd.f32 %v3114, %v3402
        %v3404 = vpop.f32.mrb[0].mxu0
        %v3405 = vpop.f32.mrb[0].mxu0
        %v3406 = vadd.f32 %v3117, %v3405
        %v3407 = vpop.f32.mrb[0].mxu0
        %3408 = vmatprep.mubr.bf16.mxu0 %v2024
        %3409 = vmatmul.mubr.bf16.gmra.mrb[0].mxu0 %v2023
        %v3410 = vpop.f32.mrb[0].mxu0
        %v3411 = vadd.f32 %v3122, %v3410
        %v3412 = vpop.f32.mrb[0].mxu0
        %v3413 = vpop.f32.mrb[0].mxu0
        %v3414 = vadd.f32 %v3125, %v3413
        %v3415 = vpop.f32.mrb[0].mxu0
        %3416 = vmatprep.mubr.bf16.mxu0 %v2034
        %3417 = vmatmul.mubr.bf16.gmra.mrb[0].mxu0 %v2033
        %v3418 = vpop.f32.mrb[0].mxu0
        %v3419 = vadd.f32 %v3130, %v3418
        %v3420 = vpop.f32.mrb[0].mxu0
        %v3421 = vpop.f32.mrb[0].mxu0
        %v3422 = vadd.f32 %v3133, %v3421
        %v3423 = vpop.f32.mrb[0].mxu0
        %3424 = vmatprep.mubr.bf16.mxu0 %v2044
        %3425 = vmatmul.mubr.bf16.gmra.mrb[0].mxu0 %v2043
        %v3426 = vpop.f32.mrb[0].mxu0
        %v3427 = vadd.f32 %v3138, %v3426
        %v3428 = vpop.f32.mrb[0].mxu0
        %v3429 = vpop.f32.mrb[0].mxu0
        %v3430 = vadd.f32 %v3141, %v3429
        %v3431 = vpop.f32.mrb[0].mxu0
        %3432 = vmatprep.mubr.bf16.mxu0 %v2054
        %3433 = vmatmul.mubr.bf16.gmra.mrb[0].mxu0 %v2053
        %v3434 = vpop.f32.mrb[0].mxu0
        %v3435 = vadd.f32 %v3146, %v3434
        %v3436 = vpop.f32.mrb[0].mxu0
        %v3437 = vpop.f32.mrb[0].mxu0
        %v3438 = vadd.f32 %v3149, %v3437
        %v3439 = vpop.f32.mrb[0].mxu0
        %3440 = vmatprep.mubr.bf16.mxu0 %v2064
        %3441 = vmatmul.mubr.bf16.gmra.mrb[0].mxu0 %v2063
        %v3442 = vpop.f32.mrb[0].mxu0
        %v3443 = vadd.f32 %v3154, %v3442
        %v3444 = vpop.f32.mrb[0].mxu0
        %v3445 = vpop.f32.mrb[0].mxu0
        %v3446 = vadd.f32 %v3157, %v3445
        %v3447 = vpop.f32.mrb[0].mxu0
        %3448 = vdwg.mxu0
        %3449 = vmatprep.subr.bf16.mxu0 0
        %3450 = vmatpush1.bf16.msra.mxu0 %v2743
        %3451 = vmatprep.subr.bf16.mxu0 0
        %3452 = vmatpush1.bf16.msra.mxu0 %v2744
        %3453 = vmatprep.subr.bf16.mxu0 0
        %3454 = vmatpush1.bf16.msra.mxu0 %v2745
        %3455 = vmatprep.subr.bf16.mxu0 0
        %3456 = vmatpush1.bf16.msra.mxu0 %v2746
        %3457 = vmatprep.subr.bf16.mxu0 0
        %3458 = vmatpush1.bf16.msra.mxu0 %v2747
        %3459 = vmatprep.subr.bf16.mxu0 0
        %3460 = vmatpush1.bf16.msra.mxu0 %v2748
        %3461 = vmatprep.subr.bf16.mxu0 0
        %3462 = vmatpush1.bf16.msra.mxu0 %v2749
        %3463 = vmatprep.subr.bf16.mxu0 0
        %3464 = vmatpush1.bf16.msra.mxu0 %v2750
        %3465 = vmatprep.subr.bf16.mxu0 0
        %3466 = vmatpush1.bf16.msra.mxu0 %v2751
        %3467 = vmatprep.subr.bf16.mxu0 0
        %3468 = vmatpush1.bf16.msra.mxu0 %v2752
        %3469 = vmatprep.subr.bf16.mxu0 0
        %3470 = vmatpush1.bf16.msra.mxu0 %v2753
        %3471 = vmatprep.subr.bf16.mxu0 0
        %3472 = vmatpush1.bf16.msra.mxu0 %v2754
        %3473 = vmatprep.subr.bf16.mxu0 0
        %3474 = vmatpush1.bf16.msra.mxu0 %v2755
        %3475 = vmatprep.subr.bf16.mxu0 0
        %3476 = vmatpush1.bf16.msra.mxu0 %v2756
        %3477 = vmatprep.subr.bf16.mxu0 0
        %3478 = vmatpush1.bf16.msra.mxu0 %v2757
        %3479 = vmatprep.subr.bf16.mxu0 0
        %3480 = vmatpush1.bf16.msra.mxu0 %v2758
        %3481 = vmatprep.mubr.bf16.mxu0 %v1756
        %3482 = vmatmul.mubr.bf16.gmra.mrb[0].mxu0 %v1755
        %v3483 = vpop.f32.mrb[0].mxu0
        %v3484 = vadd.f32 %v3195, %v3483
        %v3485 = vpop.f32.mrb[0].mxu0
        %v3486 = vpop.f32.mrb[0].mxu0
        %v3487 = vadd.f32 %v3198, %v3486
        %v3488 = vpop.f32.mrb[0].mxu0
        %3489 = vmatprep.mubr.bf16.mxu0 %v1766
        %3490 = vmatmul.mubr.bf16.gmra.mrb[0].mxu0 %v1765
        %v3491 = vpop.f32.mrb[0].mxu0
        %v3492 = vadd.f32 %v3203, %v3491
        %v3493 = vpop.f32.mrb[0].mxu0
        %v3494 = vpop.f32.mrb[0].mxu0
        %v3495 = vadd.f32 %v3206, %v3494
        %v3496 = vpop.f32.mrb[0].mxu0
        %3497 = vmatprep.mubr.bf16.mxu0 %v1776
        %3498 = vmatmul.mubr.bf16.gmra.mrb[0].mxu0 %v1775
        %v3499 = vpop.f32.mrb[0].mxu0
        %v3500 = vadd.f32 %v3211, %v3499
        %v3501 = vpop.f32.mrb[0].mxu0
        %v3502 = vpop.f32.mrb[0].mxu0
        %v3503 = vadd.f32 %v3214, %v3502
        %v3504 = vpop.f32.mrb[0].mxu0
        %3505 = vmatprep.mubr.bf16.mxu0 %v1786
        %3506 = vmatmul.mubr.bf16.gmra.mrb[0].mxu0 %v1785
        %v3507 = vpop.f32.mrb[0].mxu0
        %v3508 = vadd.f32 %v3219, %v3507
        %v3509 = vpop.f32.mrb[0].mxu0
        %v3510 = vpop.f32.mrb[0].mxu0
        %v3511 = vadd.f32 %v3222, %v3510
        %v3512 = vpop.f32.mrb[0].mxu0
        %3513 = vmatprep.mubr.bf16.mxu0 %v1796
        %3514 = vmatmul.mubr.bf16.gmra.mrb[0].mxu0 %v1795
        %v3515 = vpop.f32.mrb[0].mxu0
        %v3516 = vadd.f32 %v3227, %v3515
        %v3517 = vpop.f32.mrb[0].mxu0
        %v3518 = vpop.f32.mrb[0].mxu0
        %v3519 = vadd.f32 %v3230, %v3518
        %v3520 = vpop.f32.mrb[0].mxu0
        %3521 = vmatprep.mubr.bf16.mxu0 %v1806
        %3522 = vmatmul.mubr.bf16.gmra.mrb[0].mxu0 %v1805
        %v3523 = vpop.f32.mrb[0].mxu0
        %v3524 = vadd.f32 %v3235, %v3523
        %v3525 = vpop.f32.mrb[0].mxu0
        %v3526 = vpop.f32.mrb[0].mxu0
        %v3527 = vadd.f32 %v3238, %v3526
        %v3528 = vpop.f32.mrb[0].mxu0
        %3529 = vmatprep.mubr.bf16.mxu0 %v1816
        %3530 = vmatmul.mubr.bf16.gmra.mrb[0].mxu0 %v1815
        %v3531 = vpop.f32.mrb[0].mxu0
        %v3532 = vadd.f32 %v3243, %v3531
        %v3533 = vpop.f32.mrb[0].mxu0
        %v3534 = vpop.f32.mrb[0].mxu0
        %v3535 = vadd.f32 %v3246, %v3534
        %v3536 = vpop.f32.mrb[0].mxu0
        %3537 = vmatprep.mubr.bf16.mxu0 %v1826
        %3538 = vmatmul.mubr.bf16.gmra.mrb[0].mxu0 %v1825
        %v3539 = vpop.f32.mrb[0].mxu0
        %v3540 = vadd.f32 %v3251, %v3539
        %v3541 = vpop.f32.mrb[0].mxu0
        %v3542 = vpop.f32.mrb[0].mxu0
        %v3543 = vadd.f32 %v3254, %v3542
        %v3544 = vpop.f32.mrb[0].mxu0
        %3545 = vmatprep.mubr.bf16.mxu0 %v1836
        %3546 = vmatmul.mubr.bf16.gmra.mrb[0].mxu0 %v1835
        %v3547 = vpop.f32.mrb[0].mxu0
        %v3548 = vadd.f32 %v3259, %v3547
        %v3549 = vpop.f32.mrb[0].mxu0
        %v3550 = vpop.f32.mrb[0].mxu0
        %v3551 = vadd.f32 %v3262, %v3550
        %v3552 = vpop.f32.mrb[0].mxu0
        %3553 = vmatprep.mubr.bf16.mxu0 %v1846
        %3554 = vmatmul.mubr.bf16.gmra.mrb[0].mxu0 %v1845
        %v3555 = vpop.f32.mrb[0].mxu0
        %v3556 = vadd.f32 %v3267, %v3555
        %v3557 = vpop.f32.mrb[0].mxu0
        %v3558 = vpop.f32.mrb[0].mxu0
        %v3559 = vadd.f32 %v3270, %v3558
        %v3560 = vpop.f32.mrb[0].mxu0
        %3561 = vmatprep.mubr.bf16.mxu0 %v1856
        %3562 = vmatmul.mubr.bf16.gmra.mrb[0].mxu0 %v1855
        %v3563 = vpop.f32.mrb[0].mxu0
        %v3564 = vadd.f32 %v3275, %v3563
        %v3565 = vpop.f32.mrb[0].mxu0
        %v3566 = vpop.f32.mrb[0].mxu0
        %v3567 = vadd.f32 %v3278, %v3566
        %v3568 = vpop.f32.mrb[0].mxu0
        %3569 = vmatprep.mubr.bf16.mxu0 %v1866
        %3570 = vmatmul.mubr.bf16.gmra.mrb[0].mxu0 %v1865
        %v3571 = vpop.f32.mrb[0].mxu0
        %v3572 = vadd.f32 %v3283, %v3571
        %v3573 = vpop.f32.mrb[0].mxu0
        %v3574 = vpop.f32.mrb[0].mxu0
        %v3575 = vadd.f32 %v3286, %v3574
        %v3576 = vpop.f32.mrb[0].mxu0
        %3577 = vmatprep.mubr.bf16.mxu0 %v1876
        %3578 = vmatmul.mubr.bf16.gmra.mrb[0].mxu0 %v1875
        %v3579 = vpop.f32.mrb[0].mxu0
        %v3580 = vadd.f32 %v3291, %v3579
        %v3581 = vpop.f32.mrb[0].mxu0
        %v3582 = vpop.f32.mrb[0].mxu0
        %v3583 = vadd.f32 %v3294, %v3582
        %v3584 = vpop.f32.mrb[0].mxu0
        %3585 = vmatprep.mubr.bf16.mxu0 %v1886
        %3586 = vmatmul.mubr.bf16.gmra.mrb[0].mxu0 %v1885
        %v3587 = vpop.f32.mrb[0].mxu0
        %v3588 = vadd.f32 %v3299, %v3587
        %v3589 = vpop.f32.mrb[0].mxu0
        %v3590 = vpop.f32.mrb[0].mxu0
        %v3591 = vadd.f32 %v3302, %v3590
        %v3592 = vpop.f32.mrb[0].mxu0
        %3593 = vmatprep.mubr.bf16.mxu0 %v1896
        %3594 = vmatmul.mubr.bf16.gmra.mrb[0].mxu0 %v1895
        %v3595 = vpop.f32.mrb[0].mxu0
        %v3596 = vadd.f32 %v3307, %v3595
        %v3597 = vpop.f32.mrb[0].mxu0
        %v3598 = vpop.f32.mrb[0].mxu0
        %v3599 = vadd.f32 %v3310, %v3598
        %v3600 = vpop.f32.mrb[0].mxu0
        %3601 = vmatprep.mubr.bf16.mxu0 %v1906
        %3602 = vmatmul.mubr.bf16.gmra.mrb[0].mxu0 %v1905
        %v3603 = vpop.f32.mrb[0].mxu0
        %v3604 = vadd.f32 %v3315, %v3603
        %v3605 = vpop.f32.mrb[0].mxu0
        %v3606 = vpop.f32.mrb[0].mxu0
        %v3607 = vadd.f32 %v3318, %v3606
        %v3608 = vpop.f32.mrb[0].mxu0
        %3609 = vmatprep.mubr.bf16.mxu0 %v1916
        %3610 = vmatmul.mubr.bf16.gmra.mrb[0].mxu0 %v1915
        %v3611 = vpop.f32.mrb[0].mxu0
        %v3612 = vadd.f32 %v3323, %v3611
        %v3613 = vpop.f32.mrb[0].mxu0
        %v3614 = vpop.f32.mrb[0].mxu0
        %v3615 = vadd.f32 %v3326, %v3614
        %v3616 = vpop.f32.mrb[0].mxu0
        %3617 = vmatprep.mubr.bf16.mxu0 %v1926
        %3618 = vmatmul.mubr.bf16.gmra.mrb[0].mxu0 %v1925
        %v3619 = vpop.f32.mrb[0].mxu0
        %v3620 = vadd.f32 %v3331, %v3619
        %v3621 = vpop.f32.mrb[0].mxu0
        %v3622 = vpop.f32.mrb[0].mxu0
        %v3623 = vadd.f32 %v3334, %v3622
        %v3624 = vpop.f32.mrb[0].mxu0
        %3625 = vmatprep.mubr.bf16.mxu0 %v1936
        %3626 = vmatmul.mubr.bf16.gmra.mrb[0].mxu0 %v1935
        %v3627 = vpop.f32.mrb[0].mxu0
        %v3628 = vadd.f32 %v3339, %v3627
        %v3629 = vpop.f32.mrb[0].mxu0
        %v3630 = vpop.f32.mrb[0].mxu0
        %v3631 = vadd.f32 %v3342, %v3630
        %v3632 = vpop.f32.mrb[0].mxu0
        %3633 = vmatprep.mubr.bf16.mxu0 %v1946
        %3634 = vmatmul.mubr.bf16.gmra.mrb[0].mxu0 %v1945
        %v3635 = vpop.f32.mrb[0].mxu0
        %v3636 = vadd.f32 %v3347, %v3635
        %v3637 = vpop.f32.mrb[0].mxu0
        %v3638 = vpop.f32.mrb[0].mxu0
        %v3639 = vadd.f32 %v3350, %v3638
        %v3640 = vpop.f32.mrb[0].mxu0
        %3641 = vmatprep.mubr.bf16.mxu0 %v1956
        %3642 = vmatmul.mubr.bf16.gmra.mrb[0].mxu0 %v1955
        %v3643 = vpop.f32.mrb[0].mxu0
        %v3644 = vadd.f32 %v3355, %v3643
        %v3645 = vpop.f32.mrb[0].mxu0
        %v3646 = vpop.f32.mrb[0].mxu0
        %v3647 = vadd.f32 %v3358, %v3646
        %v3648 = vpop.f32.mrb[0].mxu0
        %3649 = vmatprep.mubr.bf16.mxu0 %v1966
        %3650 = vmatmul.mubr.bf16.gmra.mrb[0].mxu0 %v1965
        %v3651 = vpop.f32.mrb[0].mxu0
        %v3652 = vadd.f32 %v3363, %v3651
        %v3653 = vpop.f32.mrb[0].mxu0
        %v3654 = vpop.f32.mrb[0].mxu0
        %v3655 = vadd.f32 %v3366, %v3654
        %v3656 = vpop.f32.mrb[0].mxu0
        %3657 = vmatprep.mubr.bf16.mxu0 %v1976
        %3658 = vmatmul.mubr.bf16.gmra.mrb[0].mxu0 %v1975
        %v3659 = vpop.f32.mrb[0].mxu0
        %v3660 = vadd.f32 %v3371, %v3659
        %v3661 = vpop.f32.mrb[0].mxu0
        %v3662 = vpop.f32.mrb[0].mxu0
        %v3663 = vadd.f32 %v3374, %v3662
        %v3664 = vpop.f32.mrb[0].mxu0
        %3665 = vmatprep.mubr.bf16.mxu0 %v1986
        %3666 = vmatmul.mubr.bf16.gmra.mrb[0].mxu0 %v1985
        %v3667 = vpop.f32.mrb[0].mxu0
        %v3668 = vadd.f32 %v3379, %v3667
        %v3669 = vpop.f32.mrb[0].mxu0
        %v3670 = vpop.f32.mrb[0].mxu0
        %v3671 = vadd.f32 %v3382, %v3670
        %v3672 = vpop.f32.mrb[0].mxu0
        %3673 = vmatprep.mubr.bf16.mxu0 %v1996
        %3674 = vmatmul.mubr.bf16.gmra.mrb[0].mxu0 %v1995
        %v3675 = vpop.f32.mrb[0].mxu0
        %v3676 = vadd.f32 %v3387, %v3675
        %v3677 = vpop.f32.mrb[0].mxu0
        %v3678 = vpop.f32.mrb[0].mxu0
        %v3679 = vadd.f32 %v3390, %v3678
        %v3680 = vpop.f32.mrb[0].mxu0
        %3681 = vmatprep.mubr.bf16.mxu0 %v2006
        %3682 = vmatmul.mubr.bf16.gmra.mrb[0].mxu0 %v2005
        %v3683 = vpop.f32.mrb[0].mxu0
        %v3684 = vadd.f32 %v3395, %v3683
        %v3685 = vpop.f32.mrb[0].mxu0
        %v3686 = vpop.f32.mrb[0].mxu0
        %v3687 = vadd.f32 %v3398, %v3686
        %v3688 = vpop.f32.mrb[0].mxu0
        %3689 = vmatprep.mubr.bf16.mxu0 %v2016
        %3690 = vmatmul.mubr.bf16.gmra.mrb[0].mxu0 %v2015
        %v3691 = vpop.f32.mrb[0].mxu0
        %v3692 = vadd.f32 %v3403, %v3691
        %v3693 = vpop.f32.mrb[0].mxu0
        %v3694 = vpop.f32.mrb[0].mxu0
        %v3695 = vadd.f32 %v3406, %v3694
        %v3696 = vpop.f32.mrb[0].mxu0
        %3697 = vmatprep.mubr.bf16.mxu0 %v2026
        %3698 = vmatmul.mubr.bf16.gmra.mrb[0].mxu0 %v2025
        %v3699 = vpop.f32.mrb[0].mxu0
        %v3700 = vadd.f32 %v3411, %v3699
        %v3701 = vpop.f32.mrb[0].mxu0
        %v3702 = vpop.f32.mrb[0].mxu0
        %v3703 = vadd.f32 %v3414, %v3702
        %v3704 = vpop.f32.mrb[0].mxu0
        %3705 = vmatprep.mubr.bf16.mxu0 %v2036
        %3706 = vmatmul.mubr.bf16.gmra.mrb[0].mxu0 %v2035
        %v3707 = vpop.f32.mrb[0].mxu0
        %v3708 = vadd.f32 %v3419, %v3707
        %v3709 = vpop.f32.mrb[0].mxu0
        %v3710 = vpop.f32.mrb[0].mxu0
        %v3711 = vadd.f32 %v3422, %v3710
        %v3712 = vpop.f32.mrb[0].mxu0
        %3713 = vmatprep.mubr.bf16.mxu0 %v2046
        %3714 = vmatmul.mubr.bf16.gmra.mrb[0].mxu0 %v2045
        %v3715 = vpop.f32.mrb[0].mxu0
        %v3716 = vadd.f32 %v3427, %v3715
        %v3717 = vpop.f32.mrb[0].mxu0
        %v3718 = vpop.f32.mrb[0].mxu0
        %v3719 = vadd.f32 %v3430, %v3718
        %v3720 = vpop.f32.mrb[0].mxu0
        %3721 = vmatprep.mubr.bf16.mxu0 %v2056
        %3722 = vmatmul.mubr.bf16.gmra.mrb[0].mxu0 %v2055
        %v3723 = vpop.f32.mrb[0].mxu0
        %v3724 = vadd.f32 %v3435, %v3723
        %v3725 = vpop.f32.mrb[0].mxu0
        %v3726 = vpop.f32.mrb[0].mxu0
        %v3727 = vadd.f32 %v3438, %v3726
        %v3728 = vpop.f32.mrb[0].mxu0
        %3729 = vmatprep.mubr.bf16.mxu0 %v2066
        %3730 = vmatmul.mubr.bf16.gmra.mrb[0].mxu0 %v2065
        %v3731 = vpop.f32.mrb[0].mxu0
        %v3732 = vadd.f32 %v3443, %v3731
        %v3733 = vpop.f32.mrb[0].mxu0
        %v3734 = vpop.f32.mrb[0].mxu0
        %v3735 = vadd.f32 %v3446, %v3734
        %v3736 = vpop.f32.mrb[0].mxu0
        %3737 = vdwg.mxu0
        %3738 = vmatprep.subr.bf16.mxu0 0
        %3739 = vmatpush1.bf16.msra.mxu0 %v2759
        %3740 = vmatprep.subr.bf16.mxu0 0
        %3741 = vmatpush1.bf16.msra.mxu0 %v2760
        %3742 = vmatprep.subr.bf16.mxu0 0
        %3743 = vmatpush1.bf16.msra.mxu0 %v2761
        %3744 = vmatprep.subr.bf16.mxu0 0
        %3745 = vmatpush1.bf16.msra.mxu0 %v2762
        %3746 = vmatprep.subr.bf16.mxu0 0
        %3747 = vmatpush1.bf16.msra.mxu0 %v2763
        %3748 = vmatprep.subr.bf16.mxu0 0
        %3749 = vmatpush1.bf16.msra.mxu0 %v2764
        %3750 = vmatprep.subr.bf16.mxu0 0
        %3751 = vmatpush1.bf16.msra.mxu0 %v2765
        %3752 = vmatprep.subr.bf16.mxu0 0
        %3753 = vmatpush1.bf16.msra.mxu0 %v2766
        %3754 = vmatprep.subr.bf16.mxu0 0
        %3755 = vmatpush1.bf16.msra.mxu0 %v2767
        %3756 = vmatprep.subr.bf16.mxu0 0
        %3757 = vmatpush1.bf16.msra.mxu0 %v2768
        %3758 = vmatprep.subr.bf16.mxu0 0
        %3759 = vmatpush1.bf16.msra.mxu0 %v2769
        %3760 = vmatprep.subr.bf16.mxu0 0
        %3761 = vmatpush1.bf16.msra.mxu0 %v2770
        %3762 = vmatprep.subr.bf16.mxu0 0
        %3763 = vmatpush1.bf16.msra.mxu0 %v2771
        %3764 = vmatprep.subr.bf16.mxu0 0
        %3765 = vmatpush1.bf16.msra.mxu0 %v2772
        %3766 = vmatprep.subr.bf16.mxu0 0
        %3767 = vmatpush1.bf16.msra.mxu0 %v2773
        %3768 = vmatprep.subr.bf16.mxu0 0
        %3769 = vmatpush1.bf16.msra.mxu0 %v2774
        %3770 = vmatprep.mubr.bf16.mxu0 %v1758
        %3771 = vmatmul.mubr.bf16.gmra.mrb[0].mxu0 %v1757
        %v3772 = vpop.f32.mrb[0].mxu0
        %v3773 = vadd.f32 %v3484, %v3772
        %v3774 = vpop.f32.mrb[0].mxu0
        %v3775 = vpop.f32.mrb[0].mxu0
        %v3776 = vadd.f32 %v3487, %v3775
        %v3777 = vpop.f32.mrb[0].mxu0
        %3778 = vmatprep.mubr.bf16.mxu0 %v1768
        %3779 = vmatmul.mubr.bf16.gmra.mrb[0].mxu0 %v1767
        %v3780 = vpop.f32.mrb[0].mxu0
        %v3781 = vadd.f32 %v3492, %v3780
        %v3782 = vpop.f32.mrb[0].mxu0
        %v3783 = vpop.f32.mrb[0].mxu0
        %v3784 = vadd.f32 %v3495, %v3783
        %v3785 = vpop.f32.mrb[0].mxu0
        %3786 = vmatprep.mubr.bf16.mxu0 %v1778
        %3787 = vmatmul.mubr.bf16.gmra.mrb[0].mxu0 %v1777
        %v3788 = vpop.f32.mrb[0].mxu0
        %v3789 = vadd.f32 %v3500, %v3788
        %v3790 = vpop.f32.mrb[0].mxu0
        %v3791 = vpop.f32.mrb[0].mxu0
        %v3792 = vadd.f32 %v3503, %v3791
        %v3793 = vpop.f32.mrb[0].mxu0
        %3794 = vmatprep.mubr.bf16.mxu0 %v1788
        %3795 = vmatmul.mubr.bf16.gmra.mrb[0].mxu0 %v1787
        %v3796 = vpop.f32.mrb[0].mxu0
        %v3797 = vadd.f32 %v3508, %v3796
        %v3798 = vpop.f32.mrb[0].mxu0
        %v3799 = vpop.f32.mrb[0].mxu0
        %v3800 = vadd.f32 %v3511, %v3799
        %v3801 = vpop.f32.mrb[0].mxu0
        %3802 = vmatprep.mubr.bf16.mxu0 %v1798
        %3803 = vmatmul.mubr.bf16.gmra.mrb[0].mxu0 %v1797
        %v3804 = vpop.f32.mrb[0].mxu0
        %v3805 = vadd.f32 %v3516, %v3804
        %v3806 = vpop.f32.mrb[0].mxu0
        %v3807 = vpop.f32.mrb[0].mxu0
        %v3808 = vadd.f32 %v3519, %v3807
        %v3809 = vpop.f32.mrb[0].mxu0
        %3810 = vmatprep.mubr.bf16.mxu0 %v1808
        %3811 = vmatmul.mubr.bf16.gmra.mrb[0].mxu0 %v1807
        %v3812 = vpop.f32.mrb[0].mxu0
        %v3813 = vadd.f32 %v3524, %v3812
        %v3814 = vpop.f32.mrb[0].mxu0
        %v3815 = vpop.f32.mrb[0].mxu0
        %v3816 = vadd.f32 %v3527, %v3815
        %v3817 = vpop.f32.mrb[0].mxu0
        %3818 = vmatprep.mubr.bf16.mxu0 %v1818
        %3819 = vmatmul.mubr.bf16.gmra.mrb[0].mxu0 %v1817
        %v3820 = vpop.f32.mrb[0].mxu0
        %v3821 = vadd.f32 %v3532, %v3820
        %v3822 = vpop.f32.mrb[0].mxu0
        %v3823 = vpop.f32.mrb[0].mxu0
        %v3824 = vadd.f32 %v3535, %v3823
        %v3825 = vpop.f32.mrb[0].mxu0
        %3826 = vmatprep.mubr.bf16.mxu0 %v1828
        %3827 = vmatmul.mubr.bf16.gmra.mrb[0].mxu0 %v1827
        %v3828 = vpop.f32.mrb[0].mxu0
        %v3829 = vadd.f32 %v3540, %v3828
        %v3830 = vpop.f32.mrb[0].mxu0
        %v3831 = vpop.f32.mrb[0].mxu0
        %v3832 = vadd.f32 %v3543, %v3831
        %v3833 = vpop.f32.mrb[0].mxu0
        %3834 = vmatprep.mubr.bf16.mxu0 %v1838
        %3835 = vmatmul.mubr.bf16.gmra.mrb[0].mxu0 %v1837
        %v3836 = vpop.f32.mrb[0].mxu0
        %v3837 = vadd.f32 %v3548, %v3836
        %v3838 = vpop.f32.mrb[0].mxu0
        %v3839 = vpop.f32.mrb[0].mxu0
        %v3840 = vadd.f32 %v3551, %v3839
        %v3841 = vpop.f32.mrb[0].mxu0
        %3842 = vmatprep.mubr.bf16.mxu0 %v1848
        %3843 = vmatmul.mubr.bf16.gmra.mrb[0].mxu0 %v1847
        %v3844 = vpop.f32.mrb[0].mxu0
        %v3845 = vadd.f32 %v3556, %v3844
        %v3846 = vpop.f32.mrb[0].mxu0
        %v3847 = vpop.f32.mrb[0].mxu0
        %v3848 = vadd.f32 %v3559, %v3847
        %v3849 = vpop.f32.mrb[0].mxu0
        %3850 = vmatprep.mubr.bf16.mxu0 %v1858
        %3851 = vmatmul.mubr.bf16.gmra.mrb[0].mxu0 %v1857
        %v3852 = vpop.f32.mrb[0].mxu0
        %v3853 = vadd.f32 %v3564, %v3852
        %v3854 = vpop.f32.mrb[0].mxu0
        %v3855 = vpop.f32.mrb[0].mxu0
        %v3856 = vadd.f32 %v3567, %v3855
        %v3857 = vpop.f32.mrb[0].mxu0
        %3858 = vmatprep.mubr.bf16.mxu0 %v1868
        %3859 = vmatmul.mubr.bf16.gmra.mrb[0].mxu0 %v1867
        %v3860 = vpop.f32.mrb[0].mxu0
        %v3861 = vadd.f32 %v3572, %v3860
        %v3862 = vpop.f32.mrb[0].mxu0
        %v3863 = vpop.f32.mrb[0].mxu0
        %v3864 = vadd.f32 %v3575, %v3863
        %v3865 = vpop.f32.mrb[0].mxu0
        %3866 = vmatprep.mubr.bf16.mxu0 %v1878
        %3867 = vmatmul.mubr.bf16.gmra.mrb[0].mxu0 %v1877
        %v3868 = vpop.f32.mrb[0].mxu0
        %v3869 = vadd.f32 %v3580, %v3868
        %v3870 = vpop.f32.mrb[0].mxu0
        %v3871 = vpop.f32.mrb[0].mxu0
        %v3872 = vadd.f32 %v3583, %v3871
        %v3873 = vpop.f32.mrb[0].mxu0
        %3874 = vmatprep.mubr.bf16.mxu0 %v1888
        %3875 = vmatmul.mubr.bf16.gmra.mrb[0].mxu0 %v1887
        %v3876 = vpop.f32.mrb[0].mxu0
        %v3877 = vadd.f32 %v3588, %v3876
        %v3878 = vpop.f32.mrb[0].mxu0
        %v3879 = vpop.f32.mrb[0].mxu0
        %v3880 = vadd.f32 %v3591, %v3879
        %v3881 = vpop.f32.mrb[0].mxu0
        %3882 = vmatprep.mubr.bf16.mxu0 %v1898
        %3883 = vmatmul.mubr.bf16.gmra.mrb[0].mxu0 %v1897
        %v3884 = vpop.f32.mrb[0].mxu0
        %v3885 = vadd.f32 %v3596, %v3884
        %v3886 = vpop.f32.mrb[0].mxu0
        %v3887 = vpop.f32.mrb[0].mxu0
        %v3888 = vadd.f32 %v3599, %v3887
        %v3889 = vpop.f32.mrb[0].mxu0
        %3890 = vmatprep.mubr.bf16.mxu0 %v1908
        %3891 = vmatmul.mubr.bf16.gmra.mrb[0].mxu0 %v1907
        %v3892 = vpop.f32.mrb[0].mxu0
        %v3893 = vadd.f32 %v3604, %v3892
        %v3894 = vpop.f32.mrb[0].mxu0
        %v3895 = vpop.f32.mrb[0].mxu0
        %v3896 = vadd.f32 %v3607, %v3895
        %v3897 = vpop.f32.mrb[0].mxu0
        %3898 = vmatprep.mubr.bf16.mxu0 %v1918
        %3899 = vmatmul.mubr.bf16.gmra.mrb[0].mxu0 %v1917
        %v3900 = vpop.f32.mrb[0].mxu0
        %v3901 = vadd.f32 %v3612, %v3900
        %v3902 = vpop.f32.mrb[0].mxu0
        %v3903 = vpop.f32.mrb[0].mxu0
        %v3904 = vadd.f32 %v3615, %v3903
        %v3905 = vpop.f32.mrb[0].mxu0
        %3906 = vmatprep.mubr.bf16.mxu0 %v1928
        %3907 = vmatmul.mubr.bf16.gmra.mrb[0].mxu0 %v1927
        %v3908 = vpop.f32.mrb[0].mxu0
        %v3909 = vadd.f32 %v3620, %v3908
        %v3910 = vpop.f32.mrb[0].mxu0
        %v3911 = vpop.f32.mrb[0].mxu0
        %v3912 = vadd.f32 %v3623, %v3911
        %v3913 = vpop.f32.mrb[0].mxu0
        %3914 = vmatprep.mubr.bf16.mxu0 %v1938
        %3915 = vmatmul.mubr.bf16.gmra.mrb[0].mxu0 %v1937
        %v3916 = vpop.f32.mrb[0].mxu0
        %v3917 = vadd.f32 %v3628, %v3916
        %v3918 = vpop.f32.mrb[0].mxu0
        %v3919 = vpop.f32.mrb[0].mxu0
        %v3920 = vadd.f32 %v3631, %v3919
        %v3921 = vpop.f32.mrb[0].mxu0
        %3922 = vmatprep.mubr.bf16.mxu0 %v1948
        %3923 = vmatmul.mubr.bf16.gmra.mrb[0].mxu0 %v1947
        %v3924 = vpop.f32.mrb[0].mxu0
        %v3925 = vadd.f32 %v3636, %v3924
        %v3926 = vpop.f32.mrb[0].mxu0
        %v3927 = vpop.f32.mrb[0].mxu0
        %v3928 = vadd.f32 %v3639, %v3927
        %v3929 = vpop.f32.mrb[0].mxu0
        %3930 = vmatprep.mubr.bf16.mxu0 %v1958
        %3931 = vmatmul.mubr.bf16.gmra.mrb[0].mxu0 %v1957
        %v3932 = vpop.f32.mrb[0].mxu0
        %v3933 = vadd.f32 %v3644, %v3932
        %v3934 = vpop.f32.mrb[0].mxu0
        %v3935 = vpop.f32.mrb[0].mxu0
        %v3936 = vadd.f32 %v3647, %v3935
        %v3937 = vpop.f32.mrb[0].mxu0
        %3938 = vmatprep.mubr.bf16.mxu0 %v1968
        %3939 = vmatmul.mubr.bf16.gmra.mrb[0].mxu0 %v1967
        %v3940 = vpop.f32.mrb[0].mxu0
        %v3941 = vadd.f32 %v3652, %v3940
        %v3942 = vpop.f32.mrb[0].mxu0
        %v3943 = vpop.f32.mrb[0].mxu0
        %v3944 = vadd.f32 %v3655, %v3943
        %v3945 = vpop.f32.mrb[0].mxu0
        %3946 = vmatprep.mubr.bf16.mxu0 %v1978
        %3947 = vmatmul.mubr.bf16.gmra.mrb[0].mxu0 %v1977
        %v3948 = vpop.f32.mrb[0].mxu0
        %v3949 = vadd.f32 %v3660, %v3948
        %v3950 = vpop.f32.mrb[0].mxu0
        %v3951 = vpop.f32.mrb[0].mxu0
        %v3952 = vadd.f32 %v3663, %v3951
        %v3953 = vpop.f32.mrb[0].mxu0
        %3954 = vmatprep.mubr.bf16.mxu0 %v1988
        %3955 = vmatmul.mubr.bf16.gmra.mrb[0].mxu0 %v1987
        %v3956 = vpop.f32.mrb[0].mxu0
        %v3957 = vadd.f32 %v3668, %v3956
        %v3958 = vpop.f32.mrb[0].mxu0
        %v3959 = vpop.f32.mrb[0].mxu0
        %v3960 = vadd.f32 %v3671, %v3959
        %v3961 = vpop.f32.mrb[0].mxu0
        %3962 = vmatprep.mubr.bf16.mxu0 %v1998
        %3963 = vmatmul.mubr.bf16.gmra.mrb[0].mxu0 %v1997
        %v3964 = vpop.f32.mrb[0].mxu0
        %v3965 = vadd.f32 %v3676, %v3964
        %v3966 = vpop.f32.mrb[0].mxu0
        %v3967 = vpop.f32.mrb[0].mxu0
        %v3968 = vadd.f32 %v3679, %v3967
        %v3969 = vpop.f32.mrb[0].mxu0
        %3970 = vmatprep.mubr.bf16.mxu0 %v2008
        %3971 = vmatmul.mubr.bf16.gmra.mrb[0].mxu0 %v2007
        %v3972 = vpop.f32.mrb[0].mxu0
        %v3973 = vadd.f32 %v3684, %v3972
        %v3974 = vpop.f32.mrb[0].mxu0
        %v3975 = vpop.f32.mrb[0].mxu0
        %v3976 = vadd.f32 %v3687, %v3975
        %v3977 = vpop.f32.mrb[0].mxu0
        %3978 = vmatprep.mubr.bf16.mxu0 %v2018
        %3979 = vmatmul.mubr.bf16.gmra.mrb[0].mxu0 %v2017
        %v3980 = vpop.f32.mrb[0].mxu0
        %v3981 = vadd.f32 %v3692, %v3980
        %v3982 = vpop.f32.mrb[0].mxu0
        %v3983 = vpop.f32.mrb[0].mxu0
        %v3984 = vadd.f32 %v3695, %v3983
        %v3985 = vpop.f32.mrb[0].mxu0
        %3986 = vmatprep.mubr.bf16.mxu0 %v2028
        %3987 = vmatmul.mubr.bf16.gmra.mrb[0].mxu0 %v2027
        %v3988 = vpop.f32.mrb[0].mxu0
        %v3989 = vadd.f32 %v3700, %v3988
        %v3990 = vpop.f32.mrb[0].mxu0
        %v3991 = vpop.f32.mrb[0].mxu0
        %v3992 = vadd.f32 %v3703, %v3991
        %v3993 = vpop.f32.mrb[0].mxu0
        %3994 = vmatprep.mubr.bf16.mxu0 %v2038
        %3995 = vmatmul.mubr.bf16.gmra.mrb[0].mxu0 %v2037
        %v3996 = vpop.f32.mrb[0].mxu0
        %v3997 = vadd.f32 %v3708, %v3996
        %v3998 = vpop.f32.mrb[0].mxu0
        %v3999 = vpop.f32.mrb[0].mxu0
        %v4000 = vadd.f32 %v3711, %v3999
        %v4001 = vpop.f32.mrb[0].mxu0
        %4002 = vmatprep.mubr.bf16.mxu0 %v2048
        %4003 = vmatmul.mubr.bf16.gmra.mrb[0].mxu0 %v2047
        %v4004 = vpop.f32.mrb[0].mxu0
        %v4005 = vadd.f32 %v3716, %v4004
        %v4006 = vpop.f32.mrb[0].mxu0
        %v4007 = vpop.f32.mrb[0].mxu0
        %v4008 = vadd.f32 %v3719, %v4007
        %v4009 = vpop.f32.mrb[0].mxu0
        %4010 = vmatprep.mubr.bf16.mxu0 %v2058
        %4011 = vmatmul.mubr.bf16.gmra.mrb[0].mxu0 %v2057
        %v4012 = vpop.f32.mrb[0].mxu0
        %v4013 = vadd.f32 %v3724, %v4012
        %v4014 = vpop.f32.mrb[0].mxu0
        %v4015 = vpop.f32.mrb[0].mxu0
        %v4016 = vadd.f32 %v3727, %v4015
        %v4017 = vpop.f32.mrb[0].mxu0
        %4018 = vmatprep.mubr.bf16.mxu0 %v2068
        %4019 = vmatmul.mubr.bf16.gmra.mrb[0].mxu0 %v2067
        %v4020 = vpop.f32.mrb[0].mxu0
        %v4021 = vadd.f32 %v3732, %v4020
        %v4022 = vpop.f32.mrb[0].mxu0
        %v4023 = vpop.f32.mrb[0].mxu0
        %v4024 = vadd.f32 %v3735, %v4023
        %v4025 = vpop.f32.mrb[0].mxu0
        %4026 = vdwg.mxu0
        %4027 = vmatprep.subr.bf16.mxu0 0
        %4028 = vmatpush1.bf16.msra.mxu0 %v2775
        %4029 = vmatprep.subr.bf16.mxu0 0
        %4030 = vmatpush1.bf16.msra.mxu0 %v2776
        %4031 = vmatprep.subr.bf16.mxu0 0
        %4032 = vmatpush1.bf16.msra.mxu0 %v2777
        %4033 = vmatprep.subr.bf16.mxu0 0
        %4034 = vmatpush1.bf16.msra.mxu0 %v2778
        %4035 = vmatprep.subr.bf16.mxu0 0
        %4036 = vmatpush1.bf16.msra.mxu0 %v2779
        %4037 = vmatprep.subr.bf16.mxu0 0
        %4038 = vmatpush1.bf16.msra.mxu0 %v2780
        %4039 = vmatprep.subr.bf16.mxu0 0
        %4040 = vmatpush1.bf16.msra.mxu0 %v2781
        %4041 = vmatprep.subr.bf16.mxu0 0
        %4042 = vmatpush1.bf16.msra.mxu0 %v2782
        %4043 = vmatprep.subr.bf16.mxu0 0
        %4044 = vmatpush1.bf16.msra.mxu0 %v2783
        %4045 = vmatprep.subr.bf16.mxu0 0
        %4046 = vmatpush1.bf16.msra.mxu0 %v2784
        %4047 = vmatprep.subr.bf16.mxu0 0
        %4048 = vmatpush1.bf16.msra.mxu0 %v2785
        %4049 = vmatprep.subr.bf16.mxu0 0
        %4050 = vmatpush1.bf16.msra.mxu0 %v2786
        %4051 = vmatprep.subr.bf16.mxu0 0
        %4052 = vmatpush1.bf16.msra.mxu0 %v2787
        %4053 = vmatprep.subr.bf16.mxu0 0
        %4054 = vmatpush1.bf16.msra.mxu0 %v2788
        %4055 = vmatprep.subr.bf16.mxu0 0
        %4056 = vmatpush1.bf16.msra.mxu0 %v2789
        %4057 = vmatprep.subr.bf16.mxu0 0
        %4058 = vmatpush1.bf16.msra.mxu0 %v2790
        %4059 = vmatprep.mubr.bf16.mxu0 %v1760
        %4060 = vmatmul.mubr.bf16.gmra.mrb[0].mxu0 %v1759
        %v4061 = vpop.f32.mrb[0].mxu0
        %v4062 = vadd.f32 %v3773, %v4061
        %v4063 = vpop.f32.mrb[0].mxu0
        %v4064 = vpop.f32.mrb[0].mxu0
        %v4065 = vadd.f32 %v3776, %v4064
        %v4066 = vpop.f32.mrb[0].mxu0
        %4067 = vmatprep.mubr.bf16.mxu0 %v1770
        %4068 = vmatmul.mubr.bf16.gmra.mrb[0].mxu0 %v1769
        %v4069 = vpop.f32.mrb[0].mxu0
        %v4070 = vadd.f32 %v3781, %v4069
        %v4071 = vpop.f32.mrb[0].mxu0
        %v4072 = vpop.f32.mrb[0].mxu0
        %v4073 = vadd.f32 %v3784, %v4072
        %v4074 = vpop.f32.mrb[0].mxu0
        %4075 = vmatprep.mubr.bf16.mxu0 %v1780
        %4076 = vmatmul.mubr.bf16.gmra.mrb[0].mxu0 %v1779
        %v4077 = vpop.f32.mrb[0].mxu0
        %v4078 = vadd.f32 %v3789, %v4077
        %v4079 = vpop.f32.mrb[0].mxu0
        %v4080 = vpop.f32.mrb[0].mxu0
        %v4081 = vadd.f32 %v3792, %v4080
        %v4082 = vpop.f32.mrb[0].mxu0
        %4083 = vmatprep.mubr.bf16.mxu0 %v1790
        %4084 = vmatmul.mubr.bf16.gmra.mrb[0].mxu0 %v1789
        %v4085 = vpop.f32.mrb[0].mxu0
        %v4086 = vadd.f32 %v3797, %v4085
        %v4087 = vpop.f32.mrb[0].mxu0
        %v4088 = vpop.f32.mrb[0].mxu0
        %v4089 = vadd.f32 %v3800, %v4088
        %v4090 = vpop.f32.mrb[0].mxu0
        %4091 = vmatprep.mubr.bf16.mxu0 %v1800
        %4092 = vmatmul.mubr.bf16.gmra.mrb[0].mxu0 %v1799
        %v4093 = vpop.f32.mrb[0].mxu0
        %v4094 = vadd.f32 %v3805, %v4093
        %v4095 = vpop.f32.mrb[0].mxu0
        %v4096 = vpop.f32.mrb[0].mxu0
        %v4097 = vadd.f32 %v3808, %v4096
        %v4098 = vpop.f32.mrb[0].mxu0
        %4099 = vmatprep.mubr.bf16.mxu0 %v1810
        %4100 = vmatmul.mubr.bf16.gmra.mrb[0].mxu0 %v1809
        %v4101 = vpop.f32.mrb[0].mxu0
        %v4102 = vadd.f32 %v3813, %v4101
        %v4103 = vpop.f32.mrb[0].mxu0
        %v4104 = vpop.f32.mrb[0].mxu0
        %v4105 = vadd.f32 %v3816, %v4104
        %v4106 = vpop.f32.mrb[0].mxu0
        %4107 = vmatprep.mubr.bf16.mxu0 %v1820
        %4108 = vmatmul.mubr.bf16.gmra.mrb[0].mxu0 %v1819
        %v4109 = vpop.f32.mrb[0].mxu0
        %v4110 = vadd.f32 %v3821, %v4109
        %v4111 = vpop.f32.mrb[0].mxu0
        %v4112 = vpop.f32.mrb[0].mxu0
        %v4113 = vadd.f32 %v3824, %v4112
        %v4114 = vpop.f32.mrb[0].mxu0
        %4115 = vmatprep.mubr.bf16.mxu0 %v1830
        %4116 = vmatmul.mubr.bf16.gmra.mrb[0].mxu0 %v1829
        %v4117 = vpop.f32.mrb[0].mxu0
        %v4118 = vadd.f32 %v3829, %v4117
        %v4119 = vpop.f32.mrb[0].mxu0
        %v4120 = vpop.f32.mrb[0].mxu0
        %v4121 = vadd.f32 %v3832, %v4120
        %v4122 = vpop.f32.mrb[0].mxu0
        %4123 = vmatprep.mubr.bf16.mxu0 %v1840
        %4124 = vmatmul.mubr.bf16.gmra.mrb[0].mxu0 %v1839
        %v4125 = vpop.f32.mrb[0].mxu0
        %v4126 = vadd.f32 %v3837, %v4125
        %v4127 = vpop.f32.mrb[0].mxu0
        %v4128 = vpop.f32.mrb[0].mxu0
        %v4129 = vadd.f32 %v3840, %v4128
        %v4130 = vpop.f32.mrb[0].mxu0
        %4131 = vmatprep.mubr.bf16.mxu0 %v1850
        %4132 = vmatmul.mubr.bf16.gmra.mrb[0].mxu0 %v1849
        %v4133 = vpop.f32.mrb[0].mxu0
        %v4134 = vadd.f32 %v3845, %v4133
        %v4135 = vpop.f32.mrb[0].mxu0
        %v4136 = vpop.f32.mrb[0].mxu0
        %v4137 = vadd.f32 %v3848, %v4136
        %v4138 = vpop.f32.mrb[0].mxu0
        %4139 = vmatprep.mubr.bf16.mxu0 %v1860
        %4140 = vmatmul.mubr.bf16.gmra.mrb[0].mxu0 %v1859
        %v4141 = vpop.f32.mrb[0].mxu0
        %v4142 = vadd.f32 %v3853, %v4141
        %v4143 = vpop.f32.mrb[0].mxu0
        %v4144 = vpop.f32.mrb[0].mxu0
        %v4145 = vadd.f32 %v3856, %v4144
        %v4146 = vpop.f32.mrb[0].mxu0
        %4147 = vmatprep.mubr.bf16.mxu0 %v1870
        %4148 = vmatmul.mubr.bf16.gmra.mrb[0].mxu0 %v1869
        %v4149 = vpop.f32.mrb[0].mxu0
        %v4150 = vadd.f32 %v3861, %v4149
        %v4151 = vpop.f32.mrb[0].mxu0
        %v4152 = vpop.f32.mrb[0].mxu0
        %v4153 = vadd.f32 %v3864, %v4152
        %v4154 = vpop.f32.mrb[0].mxu0
        %4155 = vmatprep.mubr.bf16.mxu0 %v1880
        %4156 = vmatmul.mubr.bf16.gmra.mrb[0].mxu0 %v1879
        %v4157 = vpop.f32.mrb[0].mxu0
        %v4158 = vadd.f32 %v3869, %v4157
        %v4159 = vpop.f32.mrb[0].mxu0
        %v4160 = vpop.f32.mrb[0].mxu0
        %v4161 = vadd.f32 %v3872, %v4160
        %v4162 = vpop.f32.mrb[0].mxu0
        %4163 = vmatprep.mubr.bf16.mxu0 %v1890
        %4164 = vmatmul.mubr.bf16.gmra.mrb[0].mxu0 %v1889
        %v4165 = vpop.f32.mrb[0].mxu0
        %v4166 = vadd.f32 %v3877, %v4165
        %v4167 = vpop.f32.mrb[0].mxu0
        %v4168 = vpop.f32.mrb[0].mxu0
        %v4169 = vadd.f32 %v3880, %v4168
        %v4170 = vpop.f32.mrb[0].mxu0
        %4171 = vmatprep.mubr.bf16.mxu0 %v1900
        %4172 = vmatmul.mubr.bf16.gmra.mrb[0].mxu0 %v1899
        %v4173 = vpop.f32.mrb[0].mxu0
        %v4174 = vadd.f32 %v3885, %v4173
        %v4175 = vpop.f32.mrb[0].mxu0
        %v4176 = vpop.f32.mrb[0].mxu0
        %v4177 = vadd.f32 %v3888, %v4176
        %v4178 = vpop.f32.mrb[0].mxu0
        %4179 = vmatprep.mubr.bf16.mxu0 %v1910
        %4180 = vmatmul.mubr.bf16.gmra.mrb[0].mxu0 %v1909
        %v4181 = vpop.f32.mrb[0].mxu0
        %v4182 = vadd.f32 %v3893, %v4181
        %v4183 = vpop.f32.mrb[0].mxu0
        %v4184 = vpop.f32.mrb[0].mxu0
        %v4185 = vadd.f32 %v3896, %v4184
        %v4186 = vpop.f32.mrb[0].mxu0
        %4187 = vmatprep.mubr.bf16.mxu0 %v1920
        %4188 = vmatmul.mubr.bf16.gmra.mrb[0].mxu0 %v1919
        %v4189 = vpop.f32.mrb[0].mxu0
        %v4190 = vadd.f32 %v3901, %v4189
        %v4191 = vpop.f32.mrb[0].mxu0
        %v4192 = vpop.f32.mrb[0].mxu0
        %v4193 = vadd.f32 %v3904, %v4192
        %v4194 = vpop.f32.mrb[0].mxu0
        %4195 = vmatprep.mubr.bf16.mxu0 %v1930
        %4196 = vmatmul.mubr.bf16.gmra.mrb[0].mxu0 %v1929
        %v4197 = vpop.f32.mrb[0].mxu0
        %v4198 = vadd.f32 %v3909, %v4197
        %v4199 = vpop.f32.mrb[0].mxu0
        %v4200 = vpop.f32.mrb[0].mxu0
        %v4201 = vadd.f32 %v3912, %v4200
        %v4202 = vpop.f32.mrb[0].mxu0
        %4203 = vmatprep.mubr.bf16.mxu0 %v1940
        %4204 = vmatmul.mubr.bf16.gmra.mrb[0].mxu0 %v1939
        %v4205 = vpop.f32.mrb[0].mxu0
        %v4206 = vadd.f32 %v3917, %v4205
        %v4207 = vpop.f32.mrb[0].mxu0
        %v4208 = vpop.f32.mrb[0].mxu0
        %v4209 = vadd.f32 %v3920, %v4208
        %v4210 = vpop.f32.mrb[0].mxu0
        %4211 = vmatprep.mubr.bf16.mxu0 %v1950
        %4212 = vmatmul.mubr.bf16.gmra.mrb[0].mxu0 %v1949
        %v4213 = vpop.f32.mrb[0].mxu0
        %v4214 = vadd.f32 %v3925, %v4213
        %v4215 = vpop.f32.mrb[0].mxu0
        %v4216 = vpop.f32.mrb[0].mxu0
        %v4217 = vadd.f32 %v3928, %v4216
        %v4218 = vpop.f32.mrb[0].mxu0
        %4219 = vmatprep.mubr.bf16.mxu0 %v1960
        %4220 = vmatmul.mubr.bf16.gmra.mrb[0].mxu0 %v1959
        %v4221 = vpop.f32.mrb[0].mxu0
        %v4222 = vadd.f32 %v3933, %v4221
        %v4223 = vpop.f32.mrb[0].mxu0
        %v4224 = vpop.f32.mrb[0].mxu0
        %v4225 = vadd.f32 %v3936, %v4224
        %v4226 = vpop.f32.mrb[0].mxu0
        %4227 = vmatprep.mubr.bf16.mxu0 %v1970
        %4228 = vmatmul.mubr.bf16.gmra.mrb[0].mxu0 %v1969
        %v4229 = vpop.f32.mrb[0].mxu0
        %v4230 = vadd.f32 %v3941, %v4229
        %v4231 = vpop.f32.mrb[0].mxu0
        %v4232 = vpop.f32.mrb[0].mxu0
        %v4233 = vadd.f32 %v3944, %v4232
        %v4234 = vpop.f32.mrb[0].mxu0
        %4235 = vmatprep.mubr.bf16.mxu0 %v1980
        %4236 = vmatmul.mubr.bf16.gmra.mrb[0].mxu0 %v1979
        %v4237 = vpop.f32.mrb[0].mxu0
        %v4238 = vadd.f32 %v3949, %v4237
        %v4239 = vpop.f32.mrb[0].mxu0
        %v4240 = vpop.f32.mrb[0].mxu0
        %v4241 = vadd.f32 %v3952, %v4240
        %v4242 = vpop.f32.mrb[0].mxu0
        %4243 = vmatprep.mubr.bf16.mxu0 %v1990
        %4244 = vmatmul.mubr.bf16.gmra.mrb[0].mxu0 %v1989
        %v4245 = vpop.f32.mrb[0].mxu0
        %v4246 = vadd.f32 %v3957, %v4245
        %v4247 = vpop.f32.mrb[0].mxu0
        %v4248 = vpop.f32.mrb[0].mxu0
        %v4249 = vadd.f32 %v3960, %v4248
        %v4250 = vpop.f32.mrb[0].mxu0
        %4251 = vmatprep.mubr.bf16.mxu0 %v2000
        %4252 = vmatmul.mubr.bf16.gmra.mrb[0].mxu0 %v1999
        %v4253 = vpop.f32.mrb[0].mxu0
        %v4254 = vadd.f32 %v3965, %v4253
        %v4255 = vpop.f32.mrb[0].mxu0
        %v4256 = vpop.f32.mrb[0].mxu0
        %v4257 = vadd.f32 %v3968, %v4256
        %v4258 = vpop.f32.mrb[0].mxu0
        %4259 = vmatprep.mubr.bf16.mxu0 %v2010
        %4260 = vmatmul.mubr.bf16.gmra.mrb[0].mxu0 %v2009
        %v4261 = vpop.f32.mrb[0].mxu0
        %v4262 = vadd.f32 %v3973, %v4261
        %v4263 = vpop.f32.mrb[0].mxu0
        %v4264 = vpop.f32.mrb[0].mxu0
        %v4265 = vadd.f32 %v3976, %v4264
        %v4266 = vpop.f32.mrb[0].mxu0
        %4267 = vmatprep.mubr.bf16.mxu0 %v2020
        %4268 = vmatmul.mubr.bf16.gmra.mrb[0].mxu0 %v2019
        %v4269 = vpop.f32.mrb[0].mxu0
        %v4270 = vadd.f32 %v3981, %v4269
        %v4271 = vpop.f32.mrb[0].mxu0
        %v4272 = vpop.f32.mrb[0].mxu0
        %v4273 = vadd.f32 %v3984, %v4272
        %v4274 = vpop.f32.mrb[0].mxu0
        %4275 = vmatprep.mubr.bf16.mxu0 %v2030
        %4276 = vmatmul.mubr.bf16.gmra.mrb[0].mxu0 %v2029
        %v4277 = vpop.f32.mrb[0].mxu0
        %v4278 = vadd.f32 %v3989, %v4277
        %v4279 = vpop.f32.mrb[0].mxu0
        %v4280 = vpop.f32.mrb[0].mxu0
        %v4281 = vadd.f32 %v3992, %v4280
        %v4282 = vpop.f32.mrb[0].mxu0
        %4283 = vmatprep.mubr.bf16.mxu0 %v2040
        %4284 = vmatmul.mubr.bf16.gmra.mrb[0].mxu0 %v2039
        %v4285 = vpop.f32.mrb[0].mxu0
        %v4286 = vadd.f32 %v3997, %v4285
        %v4287 = vpop.f32.mrb[0].mxu0
        %v4288 = vpop.f32.mrb[0].mxu0
        %v4289 = vadd.f32 %v4000, %v4288
        %v4290 = vpop.f32.mrb[0].mxu0
        %4291 = vmatprep.mubr.bf16.mxu0 %v2050
        %4292 = vmatmul.mubr.bf16.gmra.mrb[0].mxu0 %v2049
        %v4293 = vpop.f32.mrb[0].mxu0
        %v4294 = vadd.f32 %v4005, %v4293
        %v4295 = vpop.f32.mrb[0].mxu0
        %v4296 = vpop.f32.mrb[0].mxu0
        %v4297 = vadd.f32 %v4008, %v4296
        %v4298 = vpop.f32.mrb[0].mxu0
        %4299 = vmatprep.mubr.bf16.mxu0 %v2060
        %4300 = vmatmul.mubr.bf16.gmra.mrb[0].mxu0 %v2059
        %v4301 = vpop.f32.mrb[0].mxu0
        %v4302 = vadd.f32 %v4013, %v4301
        %v4303 = vpop.f32.mrb[0].mxu0
        %v4304 = vpop.f32.mrb[0].mxu0
        %v4305 = vadd.f32 %v4016, %v4304
        %v4306 = vpop.f32.mrb[0].mxu0
        %4307 = vmatprep.mubr.bf16.mxu0 %v2070
        %4308 = vmatmul.mubr.bf16.gmra.mrb[0].mxu0 %v2069
        %v4309 = vpop.f32.mrb[0].mxu0
        %v4310 = vadd.f32 %v4021, %v4309
        %v4311 = vpop.f32.mrb[0].mxu0
        %v4312 = vpop.f32.mrb[0].mxu0
        %v4313 = vadd.f32 %v4024, %v4312
        %v4314 = vpop.f32.mrb[0].mxu0
        %4315 = vdwg.mxu0
        %vm4316 = vcmask 7168
        %4317 = vst.msk [vmem:[%s220] sm:$0xff] %vm4316, %v4062
        %4318 = vst.msk [vmem:[%s220 + $0x8] sm:$0xff] %vm4316, %v4065
        %4319 = vst.msk [vmem:[%s220 + $0x10] sm:$0xff] %vm4316, %v4070
        %4320 = vst.msk [vmem:[%s220 + $0x18] sm:$0xff] %vm4316, %v4073
        %4321 = vst.msk [vmem:[%s220 + $0x20] sm:$0xff] %vm4316, %v4078
        %4322 = vst.msk [vmem:[%s220 + $0x28] sm:$0xff] %vm4316, %v4081
        %4323 = vst.msk [vmem:[%s220 + $0x30] sm:$0xff] %vm4316, %v4086
        %4324 = vst.msk [vmem:[%s220 + $0x38] sm:$0xff] %vm4316, %v4089
        %4325 = vst.msk [vmem:[%s220 + $0x40] sm:$0xff] %vm4316, %v4094
        %4326 = vst.msk [vmem:[%s220 + $0x48] sm:$0xff] %vm4316, %v4097
        %4327 = vst.msk [vmem:[%s220 + $0x50] sm:$0xff] %vm4316, %v4102
        %4328 = vst.msk [vmem:[%s220 + $0x58] sm:$0xff] %vm4316, %v4105
        %4329 = vst.msk [vmem:[%s220 + $0x60] sm:$0xff] %vm4316, %v4110
        %4330 = vst.msk [vmem:[%s220 + $0x68] sm:$0xff] %vm4316, %v4113
        %4331 = vst.msk [vmem:[%s220 + $0x70] sm:$0xff] %vm4316, %v4118
        %4332 = vst.msk [vmem:[%s220 + $0x78] sm:$0xff] %vm4316, %v4121
        %4333 = vst.msk [vmem:[%s220 + $0x80] sm:$0xff] %vm4316, %v4126
        %4334 = vst.msk [vmem:[%s220 + $0x88] sm:$0xff] %vm4316, %v4129
        %4335 = vst.msk [vmem:[%s220 + $0x90] sm:$0xff] %vm4316, %v4134
        %4336 = vst.msk [vmem:[%s220 + $0x98] sm:$0xff] %vm4316, %v4137
        %4337 = vst.msk [vmem:[%s220 + $0xa0] sm:$0xff] %vm4316, %v4142
        %4338 = vst.msk [vmem:[%s220 + $0xa8] sm:$0xff] %vm4316, %v4145
        %4339 = vst.msk [vmem:[%s220 + $0xb0] sm:$0xff] %vm4316, %v4150
        %4340 = vst.msk [vmem:[%s220 + $0xb8] sm:$0xff] %vm4316, %v4153
        %4341 = vst.msk [vmem:[%s220 + $0xc0] sm:$0xff] %vm4316, %v4158
        %4342 = vst.msk [vmem:[%s220 + $0xc8] sm:$0xff] %vm4316, %v4161
        %4343 = vst.msk [vmem:[%s220 + $0xd0] sm:$0xff] %vm4316, %v4166
        %4344 = vst.msk [vmem:[%s220 + $0xd8] sm:$0xff] %vm4316, %v4169
        %4345 = vst.msk [vmem:[%s220 + $0xe0] sm:$0xff] %vm4316, %v4174
        %4346 = vst.msk [vmem:[%s220 + $0xe8] sm:$0xff] %vm4316, %v4177
        %4347 = vst.msk [vmem:[%s220 + $0xf0] sm:$0xff] %vm4316, %v4182
        %4348 = vst.msk [vmem:[%s220 + $0xf8] sm:$0xff] %vm4316, %v4185
        %4349 = vst.msk [vmem:[%s220 + $0x100] sm:$0xff] %vm4316, %v4190
        %4350 = vst.msk [vmem:[%s220 + $0x108] sm:$0xff] %vm4316, %v4193
        %4351 = vst.msk [vmem:[%s220 + $0x110] sm:$0xff] %vm4316, %v4198
        %4352 = vst.msk [vmem:[%s220 + $0x118] sm:$0xff] %vm4316, %v4201
        %4353 = vst.msk [vmem:[%s220 + $0x120] sm:$0xff] %vm4316, %v4206
        %4354 = vst.msk [vmem:[%s220 + $0x128] sm:$0xff] %vm4316, %v4209
        %4355 = vst.msk [vmem:[%s220 + $0x130] sm:$0xff] %vm4316, %v4214
        %4356 = vst.msk [vmem:[%s220 + $0x138] sm:$0xff] %vm4316, %v4217
        %4357 = vst.msk [vmem:[%s220 + $0x140] sm:$0xff] %vm4316, %v4222
        %4358 = vst.msk [vmem:[%s220 + $0x148] sm:$0xff] %vm4316, %v4225
        %4359 = vst.msk [vmem:[%s220 + $0x150] sm:$0xff] %vm4316, %v4230
        %4360 = vst.msk [vmem:[%s220 + $0x158] sm:$0xff] %vm4316, %v4233
        %4361 = vst.msk [vmem:[%s220 + $0x160] sm:$0xff] %vm4316, %v4238
        %4362 = vst.msk [vmem:[%s220 + $0x168] sm:$0xff] %vm4316, %v4241
        %4363 = vst.msk [vmem:[%s220 + $0x170] sm:$0xff] %vm4316, %v4246
        %4364 = vst.msk [vmem:[%s220 + $0x178] sm:$0xff] %vm4316, %v4249
        %4365 = vst.msk [vmem:[%s220 + $0x180] sm:$0xff] %vm4316, %v4254
        %4366 = vst.msk [vmem:[%s220 + $0x188] sm:$0xff] %vm4316, %v4257
        %4367 = vst.msk [vmem:[%s220 + $0x190] sm:$0xff] %vm4316, %v4262
        %4368 = vst.msk [vmem:[%s220 + $0x198] sm:$0xff] %vm4316, %v4265
        %4369 = vst.msk [vmem:[%s220 + $0x1a0] sm:$0xff] %vm4316, %v4270
        %4370 = vst.msk [vmem:[%s220 + $0x1a8] sm:$0xff] %vm4316, %v4273
        %4371 = vst.msk [vmem:[%s220 + $0x1b0] sm:$0xff] %vm4316, %v4278
        %4372 = vst.msk [vmem:[%s220 + $0x1b8] sm:$0xff] %vm4316, %v4281
        %4373 = vst.msk [vmem:[%s220 + $0x1c0] sm:$0xff] %vm4316, %v4286
        %4374 = vst.msk [vmem:[%s220 + $0x1c8] sm:$0xff] %vm4316, %v4289
        %4375 = vst.msk [vmem:[%s220 + $0x1d0] sm:$0xff] %vm4316, %v4294
        %4376 = vst.msk [vmem:[%s220 + $0x1d8] sm:$0xff] %vm4316, %v4297
        %4377 = vst.msk [vmem:[%s220 + $0x1e0] sm:$0xff] %vm4316, %v4302
        %4378 = vst.msk [vmem:[%s220 + $0x1e8] sm:$0xff] %vm4316, %v4305
        %4379 = vst.msk [vmem:[%s220 + $0x1f0] sm:$0xff] %vm4316, %v4310
        %4380 = vst.msk [vmem:[%s220 + $0x1f8] sm:$0xff] %vm4316, %v4313
        %s4381 = sand.u32 %s98, 1
        %s4382 = sand.u32 %s98, 1
        %s4383 = smul.addr %s4382, 512
        %s4384 = scalar_lea.vmem [#allocation4], %s4383
        // Predicated region
        $region37: #{tpu_custom_call.1} parent=31 // pred_check
          %p4385 = pneg %p108
        $region38: #{tpu_custom_call.1} parent=31 // pred_check_branch
          %4387 = sbr.rel (%p4385) target = $region40
        $region39: #{tpu_custom_call.1} parent=31 // pred_region
          %s4388 = smul.u32 64, %s17
          %s4389 = ssub.s32 125, %s4388
          %p4390 = scmp.lt.s32.totalorder %s4389, 64
          %s4391 = scalar_select %p4390, %s4389, 64
          %s4392 = smul.u32 128, %s4391
          %p4393 = scmp.ne.s32.totalorder 0, %s4392
          %s4394 = smul.addr %s4388, 8
          %s4395 = scalar_lea.vmem %s3, %s4394
          // Predicated region
          $region41: #{tpu_custom_call.1} parent=39 // pred_check
            %p4396 = pneg %p4393
          $region42: #{tpu_custom_call.1} parent=39 // pred_check_branch
            %4398 = sbr.rel (%p4396) target = $region44
          $region43: #{tpu_custom_call.1} parent=39 // pred_region
            // Predicated region
            $region45: #{tpu_custom_call.1} parent=43 // pred_check
              _
            $region46: #{tpu_custom_call.1} parent=43 // pred_check_branch
              %4400 = sbr.rel (0) target = $region48
            $region47: #{tpu_custom_call.1} parent=43 // pred_region
              // Predicated region
              $region67: #{tpu_custom_call.1} parent=47 // pred_check
                _
              $region68: #{tpu_custom_call.1} parent=47 // pred_check_branch
                %4575 = sbr.rel (0) target = $region70
              $region69: #{tpu_custom_call.1} parent=47 // pred_region
                %s4576 = sshrl.u32 %s4391, 6
                // While loop
                $region71: #{tpu_custom_call.1} parent=69 // loop_pre_header
                  _
                $region72: #{tpu_custom_call.1} parent=69 // loop_header
                  %s4578 = sphi 0, %s4580
                  %p4579 = scmp.ge.s32.totalorder %s4578, %s4576
                  %s4583 = sphi 0, %s4716
                  %s4584 = sphi %s4384, %s4719
                  %s4585 = sphi %s4395, %s4720
                $region73: #{tpu_custom_call.1} parent=69 // loop_header_branch
                  %4582 = sbr.rel (%p4579) target = $region77
                $region74: #{tpu_custom_call.1} parent=69 // loop_body
                  %v4586 = vld [vmem:[%s4584] sm:$0xff]
                  %4587 = vst [vmem:[%s4585] sm:$0xff] %v4586
                  %v4588 = vld [vmem:[%s4584 + $0x8] sm:$0xff]
                  %4589 = vst [vmem:[%s4585 + $0x8] sm:$0xff] %v4588
                  %v4590 = vld [vmem:[%s4584 + $0x10] sm:$0xff]
                  %4591 = vst [vmem:[%s4585 + $0x10] sm:$0xff] %v4590
                  %v4592 = vld [vmem:[%s4584 + $0x18] sm:$0xff]
                  %4593 = vst [vmem:[%s4585 + $0x18] sm:$0xff] %v4592
                  %v4594 = vld [vmem:[%s4584 + $0x20] sm:$0xff]
                  %4595 = vst [vmem:[%s4585 + $0x20] sm:$0xff] %v4594
                  %v4596 = vld [vmem:[%s4584 + $0x28] sm:$0xff]
                  %4597 = vst [vmem:[%s4585 + $0x28] sm:$0xff] %v4596
                  %v4598 = vld [vmem:[%s4584 + $0x30] sm:$0xff]
                  %4599 = vst [vmem:[%s4585 + $0x30] sm:$0xff] %v4598
                  %v4600 = vld [vmem:[%s4584 + $0x38] sm:$0xff]
                  %4601 = vst [vmem:[%s4585 + $0x38] sm:$0xff] %v4600
                  %v4602 = vld [vmem:[%s4584 + $0x40] sm:$0xff]
                  %4603 = vst [vmem:[%s4585 + $0x40] sm:$0xff] %v4602
                  %v4604 = vld [vmem:[%s4584 + $0x48] sm:$0xff]
                  %4605 = vst [vmem:[%s4585 + $0x48] sm:$0xff] %v4604
                  %v4606 = vld [vmem:[%s4584 + $0x50] sm:$0xff]
                  %4607 = vst [vmem:[%s4585 + $0x50] sm:$0xff] %v4606
                  %v4608 = vld [vmem:[%s4584 + $0x58] sm:$0xff]
                  %4609 = vst [vmem:[%s4585 + $0x58] sm:$0xff] %v4608
                  %v4610 = vld [vmem:[%s4584 + $0x60] sm:$0xff]
                  %4611 = vst [vmem:[%s4585 + $0x60] sm:$0xff] %v4610
                  %v4612 = vld [vmem:[%s4584 + $0x68] sm:$0xff]
                  %4613 = vst [vmem:[%s4585 + $0x68] sm:$0xff] %v4612
                  %v4614 = vld [vmem:[%s4584 + $0x70] sm:$0xff]
                  %4615 = vst [vmem:[%s4585 + $0x70] sm:$0xff] %v4614
                  %v4616 = vld [vmem:[%s4584 + $0x78] sm:$0xff]
                  %4617 = vst [vmem:[%s4585 + $0x78] sm:$0xff] %v4616
                  %v4618 = vld [vmem:[%s4584 + $0x80] sm:$0xff]
                  %4619 = vst [vmem:[%s4585 + $0x80] sm:$0xff] %v4618
                  %v4620 = vld [vmem:[%s4584 + $0x88] sm:$0xff]
                  %4621 = vst [vmem:[%s4585 + $0x88] sm:$0xff] %v4620
                  %v4622 = vld [vmem:[%s4584 + $0x90] sm:$0xff]
                  %4623 = vst [vmem:[%s4585 + $0x90] sm:$0xff] %v4622
                  %v4624 = vld [vmem:[%s4584 + $0x98] sm:$0xff]
                  %4625 = vst [vmem:[%s4585 + $0x98] sm:$0xff] %v4624
                  %v4626 = vld [vmem:[%s4584 + $0xa0] sm:$0xff]
                  %4627 = vst [vmem:[%s4585 + $0xa0] sm:$0xff] %v4626
                  %v4628 = vld [vmem:[%s4584 + $0xa8] sm:$0xff]
                  %4629 = vst [vmem:[%s4585 + $0xa8] sm:$0xff] %v4628
                  %v4630 = vld [vmem:[%s4584 + $0xb0] sm:$0xff]
                  %4631 = vst [vmem:[%s4585 + $0xb0] sm:$0xff] %v4630
                  %v4632 = vld [vmem:[%s4584 + $0xb8] sm:$0xff]
                  %4633 = vst [vmem:[%s4585 + $0xb8] sm:$0xff] %v4632
                  %v4634 = vld [vmem:[%s4584 + $0xc0] sm:$0xff]
                  %4635 = vst [vmem:[%s4585 + $0xc0] sm:$0xff] %v4634
                  %v4636 = vld [vmem:[%s4584 + $0xc8] sm:$0xff]
                  %4637 = vst [vmem:[%s4585 + $0xc8] sm:$0xff] %v4636
                  %v4638 = vld [vmem:[%s4584 + $0xd0] sm:$0xff]
                  %4639 = vst [vmem:[%s4585 + $0xd0] sm:$0xff] %v4638
                  %v4640 = vld [vmem:[%s4584 + $0xd8] sm:$0xff]
                  %4641 = vst [vmem:[%s4585 + $0xd8] sm:$0xff] %v4640
                  %v4642 = vld [vmem:[%s4584 + $0xe0] sm:$0xff]
                  %4643 = vst [vmem:[%s4585 + $0xe0] sm:$0xff] %v4642
                  %v4644 = vld [vmem:[%s4584 + $0xe8] sm:$0xff]
                  %4645 = vst [vmem:[%s4585 + $0xe8] sm:$0xff] %v4644
                  %v4646 = vld [vmem:[%s4584 + $0xf0] sm:$0xff]
                  %4647 = vst [vmem:[%s4585 + $0xf0] sm:$0xff] %v4646
                  %v4648 = vld [vmem:[%s4584 + $0xf8] sm:$0xff]
                  %4649 = vst [vmem:[%s4585 + $0xf8] sm:$0xff] %v4648
                  %v4650 = vld [vmem:[%s4584 + $0x100] sm:$0xff]
                  %4651 = vst [vmem:[%s4585 + $0x100] sm:$0xff] %v4650
                  %v4652 = vld [vmem:[%s4584 + $0x108] sm:$0xff]
                  %4653 = vst [vmem:[%s4585 + $0x108] sm:$0xff] %v4652
                  %v4654 = vld [vmem:[%s4584 + $0x110] sm:$0xff]
                  %4655 = vst [vmem:[%s4585 + $0x110] sm:$0xff] %v4654
                  %v4656 = vld [vmem:[%s4584 + $0x118] sm:$0xff]
                  %4657 = vst [vmem:[%s4585 + $0x118] sm:$0xff] %v4656
                  %v4658 = vld [vmem:[%s4584 + $0x120] sm:$0xff]
                  %4659 = vst [vmem:[%s4585 + $0x120] sm:$0xff] %v4658
                  %v4660 = vld [vmem:[%s4584 + $0x128] sm:$0xff]
                  %4661 = vst [vmem:[%s4585 + $0x128] sm:$0xff] %v4660
                  %v4662 = vld [vmem:[%s4584 + $0x130] sm:$0xff]
                  %4663 = vst [vmem:[%s4585 + $0x130] sm:$0xff] %v4662
                  %v4664 = vld [vmem:[%s4584 + $0x138] sm:$0xff]
                  %4665 = vst [vmem:[%s4585 + $0x138] sm:$0xff] %v4664
                  %v4666 = vld [vmem:[%s4584 + $0x140] sm:$0xff]
                  %4667 = vst [vmem:[%s4585 + $0x140] sm:$0xff] %v4666
                  %v4668 = vld [vmem:[%s4584 + $0x148] sm:$0xff]
                  %4669 = vst [vmem:[%s4585 + $0x148] sm:$0xff] %v4668
                  %v4670 = vld [vmem:[%s4584 + $0x150] sm:$0xff]
                  %4671 = vst [vmem:[%s4585 + $0x150] sm:$0xff] %v4670
                  %v4672 = vld [vmem:[%s4584 + $0x158] sm:$0xff]
                  %4673 = vst [vmem:[%s4585 + $0x158] sm:$0xff] %v4672
                  %v4674 = vld [vmem:[%s4584 + $0x160] sm:$0xff]
                  %4675 = vst [vmem:[%s4585 + $0x160] sm:$0xff] %v4674
                  %v4676 = vld [vmem:[%s4584 + $0x168] sm:$0xff]
                  %4677 = vst [vmem:[%s4585 + $0x168] sm:$0xff] %v4676
                  %v4678 = vld [vmem:[%s4584 + $0x170] sm:$0xff]
                  %4679 = vst [vmem:[%s4585 + $0x170] sm:$0xff] %v4678
                  %v4680 = vld [vmem:[%s4584 + $0x178] sm:$0xff]
                  %4681 = vst [vmem:[%s4585 + $0x178] sm:$0xff] %v4680
                  %v4682 = vld [vmem:[%s4584 + $0x180] sm:$0xff]
                  %4683 = vst [vmem:[%s4585 + $0x180] sm:$0xff] %v4682
                  %v4684 = vld [vmem:[%s4584 + $0x188] sm:$0xff]
                  %4685 = vst [vmem:[%s4585 + $0x188] sm:$0xff] %v4684
                  %v4686 = vld [vmem:[%s4584 + $0x190] sm:$0xff]
                  %4687 = vst [vmem:[%s4585 + $0x190] sm:$0xff] %v4686
                  %v4688 = vld [vmem:[%s4584 + $0x198] sm:$0xff]
                  %4689 = vst [vmem:[%s4585 + $0x198] sm:$0xff] %v4688
                  %v4690 = vld [vmem:[%s4584 + $0x1a0] sm:$0xff]
                  %4691 = vst [vmem:[%s4585 + $0x1a0] sm:$0xff] %v4690
                  %v4692 = vld [vmem:[%s4584 + $0x1a8] sm:$0xff]
                  %4693 = vst [vmem:[%s4585 + $0x1a8] sm:$0xff] %v4692
                  %v4694 = vld [vmem:[%s4584 + $0x1b0] sm:$0xff]
                  %4695 = vst [vmem:[%s4585 + $0x1b0] sm:$0xff] %v4694
                  %v4696 = vld [vmem:[%s4584 + $0x1b8] sm:$0xff]
                  %4697 = vst [vmem:[%s4585 + $0x1b8] sm:$0xff] %v4696
                  %v4698 = vld [vmem:[%s4584 + $0x1c0] sm:$0xff]
                  %4699 = vst [vmem:[%s4585 + $0x1c0] sm:$0xff] %v4698
                  %v4700 = vld [vmem:[%s4584 + $0x1c8] sm:$0xff]
                  %4701 = vst [vmem:[%s4585 + $0x1c8] sm:$0xff] %v4700
                  %v4702 = vld [vmem:[%s4584 + $0x1d0] sm:$0xff]
                  %4703 = vst [vmem:[%s4585 + $0x1d0] sm:$0xff] %v4702
                  %v4704 = vld [vmem:[%s4584 + $0x1d8] sm:$0xff]
                  %4705 = vst [vmem:[%s4585 + $0x1d8] sm:$0xff] %v4704
                  %v4706 = vld [vmem:[%s4584 + $0x1e0] sm:$0xff]
                  %4707 = vst [vmem:[%s4585 + $0x1e0] sm:$0xff] %v4706
                  %v4708 = vld [vmem:[%s4584 + $0x1e8] sm:$0xff]
                  %4709 = vst [vmem:[%s4585 + $0x1e8] sm:$0xff] %v4708
                  %v4710 = vld [vmem:[%s4584 + $0x1f0] sm:$0xff]
                  %4711 = vst [vmem:[%s4585 + $0x1f0] sm:$0xff] %v4710
                  %v4712 = vld [vmem:[%s4584 + $0x1f8] sm:$0xff]
                  %4713 = vst [vmem:[%s4585 + $0x1f8] sm:$0xff] %v4712
                  %s4714 = sadd.s32 1, %s4583
                  %p4715 = scmp.ge.s32.totalorder %s4714, %s4576
                  %s4716 = scalar_select %p4715, 0, %s4714
                  %s4717 = smul.u32 %s4716, 512
                  %s4718 = smul.u32 %s4716, 512
                  %s4719 = scalar_lea.vmem %s4384, %s4717 [#allocation4]
                  %s4720 = scalar_lea.vmem %s4395, %s4718
                $region75: #{tpu_custom_call.1} parent=69 // loop_footer
                  %s4580 = sadd.s32 %s4578, 1
                $region76: #{tpu_custom_call.1} parent=69 // loop_footer_branch
                  %4577 = sbr.rel target = $region72
                $region77: #{tpu_custom_call.1} parent=69 // loop_exit
                  _
                %s4721 = sshrl.u32 %s4391, 6
                %s4722 = sand.u32 %s4391, 63
                %s4723 = smul.u32 %s4721, 64
                %s4724 = smul.u32 8, %s4723
                %s4725 = scalar_lea.vmem %s4384, %s4724 [#allocation4]
                %s4726 = smul.u32 8, %s4723
                %s4727 = scalar_lea.vmem %s4395, %s4726
                // While loop
                $region78: #{tpu_custom_call.1} parent=69 // loop_pre_header
                  _
                $region79: #{tpu_custom_call.1} parent=69 // loop_header
                  %s4729 = sphi 0, %s4731
                  %p4730 = scmp.ge.s32.totalorder %s4729, %s4722
                  %s4734 = sphi 0, %s4741
                  %s4735 = sphi %s4725, %s4744
                  %s4736 = sphi %s4727, %s4745
                $region80: #{tpu_custom_call.1} parent=69 // loop_header_branch
                  %4733 = sbr.rel (%p4730) target = $region84
                $region81: #{tpu_custom_call.1} parent=69 // loop_body
                  %v4737 = vld [vmem:[%s4735] sm:$0xff]
                  %4738 = vst [vmem:[%s4736] sm:$0xff] %v4737
                  %s4739 = sadd.s32 1, %s4734
                  %p4740 = scmp.ge.s32.totalorder %s4739, %s4722
                  %s4741 = scalar_select %p4740, 0, %s4739
                  %s4742 = smul.u32 %s4741, 8
                  %s4743 = smul.u32 %s4741, 8
                  %s4744 = scalar_lea.vmem %s4725, %s4742 [#allocation4]
                  %s4745 = scalar_lea.vmem %s4727, %s4743
                $region82: #{tpu_custom_call.1} parent=69 // loop_footer
                  %s4731 = sadd.s32 %s4729, 1
                $region83: #{tpu_custom_call.1} parent=69 // loop_footer_branch
                  %4728 = sbr.rel target = $region79
                $region84: #{tpu_custom_call.1} parent=69 // loop_exit
                  _
              $region70: #{tpu_custom_call.1} parent=47 // pred_fallthru
                _
              // Predicated region
              $region85: #{tpu_custom_call.1} parent=47 // pred_check
                _
              $region86: #{tpu_custom_call.1} parent=47 // pred_check_branch
                %4747 = sbr.rel target = $region88
              $region87: #{tpu_custom_call.1} parent=47 // pred_region
                _
              $region88: #{tpu_custom_call.1} parent=47 // pred_fallthru
                _
            $region48: #{tpu_custom_call.1} parent=43 // pred_fallthru
              _
            // Predicated region
            $region49: #{tpu_custom_call.1} parent=43 // pred_check
              _
            $region50: #{tpu_custom_call.1} parent=43 // pred_check_branch
              %4402 = sbr.rel target = $region52
            $region51: #{tpu_custom_call.1} parent=43 // pred_region
              %s4404 = sshrl.u32 %s4391, 6
              // While loop
              $region53: #{tpu_custom_call.1} parent=51 // loop_pre_header
                _
              $region54: #{tpu_custom_call.1} parent=51 // loop_header
                %s4406 = sphi 0, %s4408
                %p4407 = scmp.ge.s32.totalorder %s4406, %s4404
                %s4411 = sphi 0, %s4544
                %s4412 = sphi %s4384, %s4547
                %s4413 = sphi %s4395, %s4548
              $region55: #{tpu_custom_call.1} parent=51 // loop_header_branch
                %4410 = sbr.rel (%p4407) target = $region59
              $region56: #{tpu_custom_call.1} parent=51 // loop_body
                %v4414 = vld [vmem:[%s4412] sm:$0xff]
                %4415 = vst [vmem:[%s4413] sm:$0xff] %v4414
                %v4416 = vld [vmem:[%s4412 + $0x8] sm:$0xff]
                %4417 = vst [vmem:[%s4413 + $0x8] sm:$0xff] %v4416
                %v4418 = vld [vmem:[%s4412 + $0x10] sm:$0xff]
                %4419 = vst [vmem:[%s4413 + $0x10] sm:$0xff] %v4418
                %v4420 = vld [vmem:[%s4412 + $0x18] sm:$0xff]
                %4421 = vst [vmem:[%s4413 + $0x18] sm:$0xff] %v4420
                %v4422 = vld [vmem:[%s4412 + $0x20] sm:$0xff]
                %4423 = vst [vmem:[%s4413 + $0x20] sm:$0xff] %v4422
                %v4424 = vld [vmem:[%s4412 + $0x28] sm:$0xff]
                %4425 = vst [vmem:[%s4413 + $0x28] sm:$0xff] %v4424
                %v4426 = vld [vmem:[%s4412 + $0x30] sm:$0xff]
                %4427 = vst [vmem:[%s4413 + $0x30] sm:$0xff] %v4426
                %v4428 = vld [vmem:[%s4412 + $0x38] sm:$0xff]
                %4429 = vst [vmem:[%s4413 + $0x38] sm:$0xff] %v4428
                %v4430 = vld [vmem:[%s4412 + $0x40] sm:$0xff]
                %4431 = vst [vmem:[%s4413 + $0x40] sm:$0xff] %v4430
                %v4432 = vld [vmem:[%s4412 + $0x48] sm:$0xff]
                %4433 = vst [vmem:[%s4413 + $0x48] sm:$0xff] %v4432
                %v4434 = vld [vmem:[%s4412 + $0x50] sm:$0xff]
                %4435 = vst [vmem:[%s4413 + $0x50] sm:$0xff] %v4434
                %v4436 = vld [vmem:[%s4412 + $0x58] sm:$0xff]
                %4437 = vst [vmem:[%s4413 + $0x58] sm:$0xff] %v4436
                %v4438 = vld [vmem:[%s4412 + $0x60] sm:$0xff]
                %4439 = vst [vmem:[%s4413 + $0x60] sm:$0xff] %v4438
                %v4440 = vld [vmem:[%s4412 + $0x68] sm:$0xff]
                %4441 = vst [vmem:[%s4413 + $0x68] sm:$0xff] %v4440
                %v4442 = vld [vmem:[%s4412 + $0x70] sm:$0xff]
                %4443 = vst [vmem:[%s4413 + $0x70] sm:$0xff] %v4442
                %v4444 = vld [vmem:[%s4412 + $0x78] sm:$0xff]
                %4445 = vst [vmem:[%s4413 + $0x78] sm:$0xff] %v4444
                %v4446 = vld [vmem:[%s4412 + $0x80] sm:$0xff]
                %4447 = vst [vmem:[%s4413 + $0x80] sm:$0xff] %v4446
                %v4448 = vld [vmem:[%s4412 + $0x88] sm:$0xff]
                %4449 = vst [vmem:[%s4413 + $0x88] sm:$0xff] %v4448
                %v4450 = vld [vmem:[%s4412 + $0x90] sm:$0xff]
                %4451 = vst [vmem:[%s4413 + $0x90] sm:$0xff] %v4450
                %v4452 = vld [vmem:[%s4412 + $0x98] sm:$0xff]
                %4453 = vst [vmem:[%s4413 + $0x98] sm:$0xff] %v4452
                %v4454 = vld [vmem:[%s4412 + $0xa0] sm:$0xff]
                %4455 = vst [vmem:[%s4413 + $0xa0] sm:$0xff] %v4454
                %v4456 = vld [vmem:[%s4412 + $0xa8] sm:$0xff]
                %4457 = vst [vmem:[%s4413 + $0xa8] sm:$0xff] %v4456
                %v4458 = vld [vmem:[%s4412 + $0xb0] sm:$0xff]
                %4459 = vst [vmem:[%s4413 + $0xb0] sm:$0xff] %v4458
                %v4460 = vld [vmem:[%s4412 + $0xb8] sm:$0xff]
                %4461 = vst [vmem:[%s4413 + $0xb8] sm:$0xff] %v4460
                %v4462 = vld [vmem:[%s4412 + $0xc0] sm:$0xff]
                %4463 = vst [vmem:[%s4413 + $0xc0] sm:$0xff] %v4462
                %v4464 = vld [vmem:[%s4412 + $0xc8] sm:$0xff]
                %4465 = vst [vmem:[%s4413 + $0xc8] sm:$0xff] %v4464
                %v4466 = vld [vmem:[%s4412 + $0xd0] sm:$0xff]
                %4467 = vst [vmem:[%s4413 + $0xd0] sm:$0xff] %v4466
                %v4468 = vld [vmem:[%s4412 + $0xd8] sm:$0xff]
                %4469 = vst [vmem:[%s4413 + $0xd8] sm:$0xff] %v4468
                %v4470 = vld [vmem:[%s4412 + $0xe0] sm:$0xff]
                %4471 = vst [vmem:[%s4413 + $0xe0] sm:$0xff] %v4470
                %v4472 = vld [vmem:[%s4412 + $0xe8] sm:$0xff]
                %4473 = vst [vmem:[%s4413 + $0xe8] sm:$0xff] %v4472
                %v4474 = vld [vmem:[%s4412 + $0xf0] sm:$0xff]
                %4475 = vst [vmem:[%s4413 + $0xf0] sm:$0xff] %v4474
                %v4476 = vld [vmem:[%s4412 + $0xf8] sm:$0xff]
                %4477 = vst [vmem:[%s4413 + $0xf8] sm:$0xff] %v4476
                %v4478 = vld [vmem:[%s4412 + $0x100] sm:$0xff]
                %4479 = vst [vmem:[%s4413 + $0x100] sm:$0xff] %v4478
                %v4480 = vld [vmem:[%s4412 + $0x108] sm:$0xff]
                %4481 = vst [vmem:[%s4413 + $0x108] sm:$0xff] %v4480
                %v4482 = vld [vmem:[%s4412 + $0x110] sm:$0xff]
                %4483 = vst [vmem:[%s4413 + $0x110] sm:$0xff] %v4482
                %v4484 = vld [vmem:[%s4412 + $0x118] sm:$0xff]
                %4485 = vst [vmem:[%s4413 + $0x118] sm:$0xff] %v4484
                %v4486 = vld [vmem:[%s4412 + $0x120] sm:$0xff]
                %4487 = vst [vmem:[%s4413 + $0x120] sm:$0xff] %v4486
                %v4488 = vld [vmem:[%s4412 + $0x128] sm:$0xff]
                %4489 = vst [vmem:[%s4413 + $0x128] sm:$0xff] %v4488
                %v4490 = vld [vmem:[%s4412 + $0x130] sm:$0xff]
                %4491 = vst [vmem:[%s4413 + $0x130] sm:$0xff] %v4490
                %v4492 = vld [vmem:[%s4412 + $0x138] sm:$0xff]
                %4493 = vst [vmem:[%s4413 + $0x138] sm:$0xff] %v4492
                %v4494 = vld [vmem:[%s4412 + $0x140] sm:$0xff]
                %4495 = vst [vmem:[%s4413 + $0x140] sm:$0xff] %v4494
                %v4496 = vld [vmem:[%s4412 + $0x148] sm:$0xff]
                %4497 = vst [vmem:[%s4413 + $0x148] sm:$0xff] %v4496
                %v4498 = vld [vmem:[%s4412 + $0x150] sm:$0xff]
                %4499 = vst [vmem:[%s4413 + $0x150] sm:$0xff] %v4498
                %v4500 = vld [vmem:[%s4412 + $0x158] sm:$0xff]
                %4501 = vst [vmem:[%s4413 + $0x158] sm:$0xff] %v4500
                %v4502 = vld [vmem:[%s4412 + $0x160] sm:$0xff]
                %4503 = vst [vmem:[%s4413 + $0x160] sm:$0xff] %v4502
                %v4504 = vld [vmem:[%s4412 + $0x168] sm:$0xff]
                %4505 = vst [vmem:[%s4413 + $0x168] sm:$0xff] %v4504
                %v4506 = vld [vmem:[%s4412 + $0x170] sm:$0xff]
                %4507 = vst [vmem:[%s4413 + $0x170] sm:$0xff] %v4506
                %v4508 = vld [vmem:[%s4412 + $0x178] sm:$0xff]
                %4509 = vst [vmem:[%s4413 + $0x178] sm:$0xff] %v4508
                %v4510 = vld [vmem:[%s4412 + $0x180] sm:$0xff]
                %4511 = vst [vmem:[%s4413 + $0x180] sm:$0xff] %v4510
                %v4512 = vld [vmem:[%s4412 + $0x188] sm:$0xff]
                %4513 = vst [vmem:[%s4413 + $0x188] sm:$0xff] %v4512
                %v4514 = vld [vmem:[%s4412 + $0x190] sm:$0xff]
                %4515 = vst [vmem:[%s4413 + $0x190] sm:$0xff] %v4514
                %v4516 = vld [vmem:[%s4412 + $0x198] sm:$0xff]
                %4517 = vst [vmem:[%s4413 + $0x198] sm:$0xff] %v4516
                %v4518 = vld [vmem:[%s4412 + $0x1a0] sm:$0xff]
                %4519 = vst [vmem:[%s4413 + $0x1a0] sm:$0xff] %v4518
                %v4520 = vld [vmem:[%s4412 + $0x1a8] sm:$0xff]
                %4521 = vst [vmem:[%s4413 + $0x1a8] sm:$0xff] %v4520
                %v4522 = vld [vmem:[%s4412 + $0x1b0] sm:$0xff]
                %4523 = vst [vmem:[%s4413 + $0x1b0] sm:$0xff] %v4522
                %v4524 = vld [vmem:[%s4412 + $0x1b8] sm:$0xff]
                %4525 = vst [vmem:[%s4413 + $0x1b8] sm:$0xff] %v4524
                %v4526 = vld [vmem:[%s4412 + $0x1c0] sm:$0xff]
                %4527 = vst [vmem:[%s4413 + $0x1c0] sm:$0xff] %v4526
                %v4528 = vld [vmem:[%s4412 + $0x1c8] sm:$0xff]
                %4529 = vst [vmem:[%s4413 + $0x1c8] sm:$0xff] %v4528
                %v4530 = vld [vmem:[%s4412 + $0x1d0] sm:$0xff]
                %4531 = vst [vmem:[%s4413 + $0x1d0] sm:$0xff] %v4530
                %v4532 = vld [vmem:[%s4412 + $0x1d8] sm:$0xff]
                %4533 = vst [vmem:[%s4413 + $0x1d8] sm:$0xff] %v4532
                %v4534 = vld [vmem:[%s4412 + $0x1e0] sm:$0xff]
                %4535 = vst [vmem:[%s4413 + $0x1e0] sm:$0xff] %v4534
                %v4536 = vld [vmem:[%s4412 + $0x1e8] sm:$0xff]
                %4537 = vst [vmem:[%s4413 + $0x1e8] sm:$0xff] %v4536
                %v4538 = vld [vmem:[%s4412 + $0x1f0] sm:$0xff]
                %4539 = vst [vmem:[%s4413 + $0x1f0] sm:$0xff] %v4538
                %v4540 = vld [vmem:[%s4412 + $0x1f8] sm:$0xff]
                %4541 = vst [vmem:[%s4413 + $0x1f8] sm:$0xff] %v4540
                %s4542 = sadd.s32 1, %s4411
                %p4543 = scmp.ge.s32.totalorder %s4542, %s4404
                %s4544 = scalar_select %p4543, 0, %s4542
                %s4545 = smul.u32 %s4544, 512
                %s4546 = smul.u32 %s4544, 512
                %s4547 = scalar_lea.vmem %s4384, %s4545 [#allocation4]
                %s4548 = scalar_lea.vmem %s4395, %s4546
              $region57: #{tpu_custom_call.1} parent=51 // loop_footer
                %s4408 = sadd.s32 %s4406, 1
              $region58: #{tpu_custom_call.1} parent=51 // loop_footer_branch
                %4405 = sbr.rel target = $region54
              $region59: #{tpu_custom_call.1} parent=51 // loop_exit
                _
              %s4549 = sshrl.u32 %s4391, 6
              %s4550 = sand.u32 %s4391, 63
              %s4551 = smul.u32 %s4549, 64
              %s4552 = smul.u32 8, %s4551
              %s4553 = scalar_lea.vmem %s4384, %s4552 [#allocation4]
              %s4554 = smul.u32 8, %s4551
              %s4555 = scalar_lea.vmem %s4395, %s4554
              // While loop
              $region60: #{tpu_custom_call.1} parent=51 // loop_pre_header
                _
              $region61: #{tpu_custom_call.1} parent=51 // loop_header
                %s4557 = sphi 0, %s4559
                %p4558 = scmp.ge.s32.totalorder %s4557, %s4550
                %s4562 = sphi 0, %s4569
                %s4563 = sphi %s4553, %s4572
                %s4564 = sphi %s4555, %s4573
              $region62: #{tpu_custom_call.1} parent=51 // loop_header_branch
                %4561 = sbr.rel (%p4558) target = $region66
              $region63: #{tpu_custom_call.1} parent=51 // loop_body
                %v4565 = vld [vmem:[%s4563] sm:$0xff]
                %4566 = vst [vmem:[%s4564] sm:$0xff] %v4565
                %s4567 = sadd.s32 1, %s4562
                %p4568 = scmp.ge.s32.totalorder %s4567, %s4550
                %s4569 = scalar_select %p4568, 0, %s4567
                %s4570 = smul.u32 %s4569, 8
                %s4571 = smul.u32 %s4569, 8
                %s4572 = scalar_lea.vmem %s4553, %s4570 [#allocation4]
                %s4573 = scalar_lea.vmem %s4555, %s4571
              $region64: #{tpu_custom_call.1} parent=51 // loop_footer
                %s4559 = sadd.s32 %s4557, 1
              $region65: #{tpu_custom_call.1} parent=51 // loop_footer_branch
                %4556 = sbr.rel target = $region61
              $region66: #{tpu_custom_call.1} parent=51 // loop_exit
                _
            $region52: #{tpu_custom_call.1} parent=43 // pred_fallthru
              _
          $region44: #{tpu_custom_call.1} parent=39 // pred_fallthru
            _
          %4748 = vnop
        $region40: #{tpu_custom_call.1} parent=31 // pred_fallthru
          _
      $region32: #{tpu_custom_call.1} parent=5 // pred_fallthru
        _
      %p4749 = scmp.le.s32.totalorder 2, %s12
      // Predicated region
      $region89: #{tpu_custom_call.1} parent=5 // pred_check
        %p4750 = pneg %p4749
      $region90: #{tpu_custom_call.1} parent=5 // pred_check_branch
        %4752 = sbr.rel (%p4750) target = $region92
      $region91: #{tpu_custom_call.1} parent=5 // pred_region
        %s4753 = ssub.s32 %s12, 2
        // Predicated region
        $region93: #{tpu_custom_call.1} parent=91 // pred_check
          %p4754 = pneg %p114
        $region94: #{tpu_custom_call.1} parent=91 // pred_check_branch
          %4756 = sbr.rel (%p4754) target = $region96
        $region95: #{tpu_custom_call.1} parent=91 // pred_region
          %s4757 = sand.u32 %s99, 1
          %s4758 = sand.u32 %s99, 1
          %s4759 = smul.addr %s4758, 512
          %s4760 = scalar_lea.vmem [#allocation4], %s4759
        $region96: #{tpu_custom_call.1} parent=91 // pred_fallthru
          _
      $region92: #{tpu_custom_call.1} parent=5 // pred_fallthru
        _
    $region6: #{tpu_custom_call.1} parent=1 // loop_footer
      %s16 = sadd.s32 1, %s12
    $region7: #{tpu_custom_call.1} parent=1 // loop_footer_branch
      %11 = sbr.rel target = $region3
    $region8: #{tpu_custom_call.1} parent=1 // loop_exit
      _
    %4761 = vsyncpa [#allocation3], 1
    %s4762 = scalar_lea.sflag [#allocation3], 1
    %4763 = vsyncpa %s4762, 1

</llo_original>
